<compile_context>
chip_gen: v5e
topology: v5e:2x2
jax: 0.10.0
libtpu: 0.0.40
codegen_flags: <defaults>
</compile_context>

<pallas_src>
import functools

import jax
import jax.numpy as jnp
from jax.experimental import pallas as pl
from jax.experimental.pallas import tpu as pltpu


def _cbam_kernel(x_ref, w1_ref, w2_ref, wsp_ref, o_ref,
                 pad_ref, flat_ref, pooled_ref, gate_ref,
                 *, ksize, height, width, chunk):
    NB, C, HW = x_ref.shape
    H, W = height, width
    k = ksize
    p = (k - 1) // 2
    CH = chunk
    f32 = jnp.float32
    out_dt = o_ref.dtype
    inv_hw = 1.0 / HW
    inv_c = 1.0 / C

    nfull = C // CH
    tail = C - nfull * CH

    def for_chunks(chunk_fn, carry_init):
        """Run chunk_fn(off, ch, carry) over channel chunks (fori + static tail)."""
        def body(j, carry):
            off = j * CH
            if CH % 8 == 0:
                off = pl.multiple_of(off, 8)
            return chunk_fn(off, CH, carry)
        carry = jax.lax.fori_loop(0, nfull, body, carry_init)
        if tail:
            carry = chunk_fn(nfull * CH, tail, carry)
        return carry

    # ---------------- Channel attention ----------------
    # Pass 1: streamed per-channel avg/max pooling (reduce over the lane axis).
    for nb in range(NB):
        def pool_chunk(off, ch, carry, nb=nb):
            xc = x_ref[nb, pl.ds(off, ch), :].astype(f32)           # (ch, HW)
            s = jnp.sum(xc, axis=-1, keepdims=True) * inv_hw        # avg pool
            m = jnp.max(xc, axis=-1, keepdims=True)                 # max pool
            col = jax.lax.broadcasted_iota(jnp.int32, (ch, 2), 1)
            pooled_ref[pl.ds(off, ch), 2 * nb:2 * nb + 2] = jnp.where(col == 0, s, m)
            return carry
        for_chunks(pool_chunk, 0)

    # Shared MLP fused over the [avg|max] x NB columns (one matmul chain).
    pooled = pooled_ref[...]                                          # (C, 2*NB)
    h = jnp.dot(w1_ref[...].astype(f32), pooled, preferred_element_type=f32)
    h = jnp.maximum(h, 0.0)                                           # ReLU
    g = jnp.dot(w2_ref[...].astype(f32), h, preferred_element_type=f32)  # (C, 2*NB)
    for nb in range(NB):
        gate_ref[:, nb:nb + 1] = jax.nn.sigmoid(
            g[:, 2 * nb:2 * nb + 1] + g[:, 2 * nb + 1:2 * nb + 2])

    # Zero the SAME-padding border once per grid step (interior is fully
    # overwritten for every batch element below).
    pad_ref[...] = jnp.zeros(pad_ref.shape, f32)

    for nb in range(NB):
        # ---------------- Spatial attention ----------------
        # Pass 2: channel-gated mean/max over channels, streamed so the (C,HW)
        # gated tensor is never kept live.
        def stat_chunk(off, ch, carry, nb=nb):
            ssum, smax = carry
            xc = x_ref[nb, pl.ds(off, ch), :].astype(f32)
            gc = gate_ref[pl.ds(off, ch), nb:nb + 1]                  # (ch, 1)
            x1 = xc * gc
            ssum = ssum + jnp.sum(x1, axis=0, keepdims=True)
            smax = jnp.maximum(smax, jnp.max(x1, axis=0, keepdims=True))
            return ssum, smax
        ssum, smax = for_chunks(
            stat_chunk,
            (jnp.zeros((1, HW), f32), jnp.full((1, HW), -jnp.inf, f32)))
        mean_s = ssum * inv_c

        # Stage the tiny 2-channel (mean, max) map into the padded scratch.
        # TODO(synk): replace this per-row (1,HW)<->(H,W) plumbing (and the gate
        # flatten below) with a single strided pltpu.roll de/interleave once the
        # stride semantics are validated on hardware.
        for i in range(H):
            pad_ref[0, p + i, p:p + W] = mean_s[0, i * W:(i + 1) * W]
            pad_ref[1, p + i, p:p + W] = smax[0, i * W:(i + 1) * W]

        # 2 x k x k SAME conv: lane (column) shifts hoisted to the kj loop
        # (7 per channel instead of 49); the 49 inner ops use cheap sublane
        # windows.  4 independent accumulators break the serial VALU chain.
        accs = [jnp.zeros((H, W), f32) for _ in range(4)]
        t = 0
        for c in range(2):
            mp = pad_ref[c, :, :]                                     # (H+2p, W+2p)
            for kj in range(k):
                colk = mp[:, kj:kj + W]                               # one lane shift
                for ki in range(k):
                    wgt = wsp_ref[c * k * k + ki * k + kj]            # SMEM scalar
                    accs[t % 4] = accs[t % 4] + wgt * colk[ki:ki + H, :]
                    t += 1
        gate_hw = jax.nn.sigmoid((accs[0] + accs[1]) + (accs[2] + accs[3]))

        # Flatten the gate back to (1, HW) through the tiny scratch.
        for i in range(H):
            flat_ref[0, i * W:(i + 1) * W] = gate_hw[i, :]
        gflat = flat_ref[...].astype(out_dt)                          # (1, HW)

        # Pass 3: out = x * channel_gate * spatial_gate, streamed, kept in the
        # input dtype (bf16 stays bf16 on v6e/v7x).
        def out_chunk(off, ch, carry, nb=nb, gflat=gflat):
            xc = x_ref[nb, pl.ds(off, ch), :]
            gc = gate_ref[pl.ds(off, ch), nb:nb + 1].astype(out_dt)
            o_ref[nb, pl.ds(off, ch), :] = (xc * gc) * gflat
            return carry
        for_chunks(out_chunk, 0)


def _vmem_capacity_bytes():
    try:
        info = pltpu.get_tpu_info()
        cap = getattr(info, "vmem_capacity_bytes", None)
        if cap:
            return int(cap)
    except Exception:
        pass
    return 64 * 1024 * 1024        # conservative: v7x per-TensorCore VMEM


def _round_up(v, m):
    return (v + m - 1) // m * m


def cbam_pallas(x, w_fc1, w_fc2, w_sp, *, kernel_size=7):
    """x: (N, C, H, W); w_fc1: (Cr, C); w_fc2: (C, Cr); w_sp: (2, k, k)."""
    N, C, H, W = x.shape
    Cr = w_fc1.shape[0]
    k = kernel_size
    assert w_sp.shape == (2, k, k)
    p = (k - 1) // 2
    HW = H * W

    x_flat = x.reshape(N, C, HW)                    # free metadata reshape
    w_sp_flat = w_sp.reshape(2 * k * k).astype(jnp.float32)

    # Batch elements per grid step: amortise per-step overhead and widen the MLP
    # matmul, while keeping 2x(in)+2x(out) double buffers within v7x's 64 MiB
    # VMEM and keeping enough grid steps for the DMA pipeline.
    blk1 = C * HW * x.dtype.itemsize
    NB = 1
    for cand in range(1, N + 1):
        if cand > 8 or cand * blk1 > 12 * 1024 * 1024 or N // cand < min(4, N):
            break
        if N % cand == 0:
            NB = cand
    # TODO(synk): for very large C*HW (single batch element > ~12 MiB) add a
    # channel-tile grid axis (two-pass) instead of one huge block.

    # Channel-chunk size for the in-kernel streaming passes: ~128 KiB f32 live.
    base = ((128 * 1024) // (HW * 4)) // 8 * 8
    CH = min(C, max(8, base))

    scratch_bytes = 4 * (
        2 * _round_up(H + 2 * p, 8) * _round_up(W + 2 * p, 128)
        + 8 * _round_up(HW, 128)
        + _round_up(C, 8) * _round_up(2 * NB, 128)
        + _round_up(C, 8) * _round_up(NB, 128))

    blk_bytes = NB * blk1
    want = 4 * blk_bytes + scratch_bytes + 4 * 1024 * 1024
    cap = _vmem_capacity_bytes()
    vmem_limit = int(max(16 * 1024 * 1024,
                         min(cap - 8 * 1024 * 1024,
                             max(32 * 1024 * 1024, want))))

    kernel = functools.partial(_cbam_kernel, ksize=k, height=H, width=W, chunk=CH)
    out_flat = pl.pallas_call(
        kernel,
        out_shape=jax.ShapeDtypeStruct((N, C, HW), x.dtype),
        grid=(N // NB,),
        in_specs=[
            pl.BlockSpec((NB, C, HW), lambda b: (b, 0, 0)),      # x (lane-dense)
            pl.BlockSpec((Cr, C), lambda b: (0, 0)),             # fc1 weight
            pl.BlockSpec((C, Cr), lambda b: (0, 0)),             # fc2 weight
            pl.BlockSpec(memory_space=pltpu.MemorySpace.SMEM),   # conv weights
        ],
        out_specs=pl.BlockSpec((NB, C, HW), lambda b: (b, 0, 0)),
        scratch_shapes=[
            pltpu.VMEM((2, H + 2 * p, W + 2 * p), jnp.float32),  # padded (mean,max)
            pltpu.VMEM((1, HW), jnp.float32),                    # flat spatial gate
            pltpu.VMEM((C, 2 * NB), jnp.float32),                # [avg|max] pools
            pltpu.VMEM((C, NB), jnp.float32),                    # channel gates
        ],
        compiler_params=pltpu.CompilerParams(
            dimension_semantics=("parallel",),
            vmem_limit_bytes=vmem_limit),
    )(x_flat, w_fc1, w_fc2, w_sp_flat)
    return out_flat.reshape(N, C, H, W)


def cbam_ref(x, w_fc1, w_fc2, w_sp):
    """Pure-JAX reference matching the PyTorch CBAM forward."""
    k = w_sp.shape[-1]
    pad = (k - 1) // 2
    avg = jnp.mean(x, axis=(2, 3), keepdims=True)
    mx = jnp.max(x, axis=(2, 3), keepdims=True)

    def mlp(v):  # v: (N, C, 1, 1)
        h = jnp.einsum('rc,nchw->nrhw', w_fc1, v)
        h = jax.nn.relu(h)
        return jnp.einsum('cr,nrhw->nchw', w_fc2, h)

    ca = jax.nn.sigmoid(mlp(avg) + mlp(mx))
    x1 = x * ca
    mean_s = jnp.mean(x1, axis=1, keepdims=True)
    max_s = jnp.max(x1, axis=1, keepdims=True)
    s = jnp.concatenate([mean_s, max_s], axis=1)       # (N, 2, H, W)
    conv = jax.lax.conv_general_dilated(
        s, w_sp[None], window_strides=(1, 1), padding=((pad, pad), (pad, pad)),
        dimension_numbers=('NCHW', 'OIHW', 'NCHW'))
    sa = jax.nn.sigmoid(conv)
    return x1 * sa


if __name__ == "__main__":
    # Small shapes consistent with the module: reduction_ratio=16 needs C >= 16.
    N, C, H, W = 2, 32, 16, 16
    reduction_ratio = 16
    kernel_size = 7
    Cr = C // reduction_ratio

    key = jax.random.PRNGKey(0)
    kx, k1, k2, k3 = jax.random.split(key, 4)
    x = jax.random.normal(kx, (N, C, H, W), dtype=jnp.float32)
    # 1x1 conv weights squeezed to 2-D, 7x7 spatial conv weight as (in=2, k, k).
    w_fc1 = 0.1 * jax.random.normal(k1, (Cr, C), dtype=jnp.float32)
    w_fc2 = 0.1 * jax.random.normal(k2, (C, Cr), dtype=jnp.float32)
    w_sp = 0.1 * jax.random.normal(k3, (2, kernel_size, kernel_size),
                                   dtype=jnp.float32)

    out = cbam_pallas(x, w_fc1, w_fc2, w_sp, kernel_size=kernel_size)
    out = jax.block_until_ready(out)

    ref = cbam_ref(x, w_fc1, w_fc2, w_sp)
    assert out.shape == (N, C, H, W)
    assert jnp.allclose(out, ref, atol=1e-4, rtol=1e-4), "mismatch vs reference"

    print("KERNEL_OK")
</pallas_src>

<mosaic_0001>
module attributes {stable_mosaic.version = 11 : i64} {
  func.func @_cbam_kernel(%arg0: i32, %arg1: memref<1x32x256xf32, #tpu.memory_space<vmem>>, %arg2: memref<2x32xf32, #tpu.memory_space<vmem>>, %arg3: memref<32x2xf32, #tpu.memory_space<vmem>>, %arg4: memref<98xf32, #tpu.memory_space<smem>>, %arg5: memref<1x32x256xf32, #tpu.memory_space<vmem>>, %arg6: memref<2x22x22xf32, #tpu.memory_space<vmem>>, %arg7: memref<1x256xf32, #tpu.memory_space<vmem>>, %arg8: memref<32x2xf32, #tpu.memory_space<vmem>>, %arg9: memref<32x1xf32, #tpu.memory_space<vmem>>) attributes {dimension_semantics = [#tpu.dimension_semantics<parallel>], iteration_bounds = array<i64: 2>, scalar_prefetch = 0 : i64, scratch_operands = 4 : i64, tpu.core_type = #tpu.core_type<tc>, window_params = [{transform_indices = @transform_0, window_bounds = array<i64: 1, 32, 256>}, {pipeline_mode = #tpu.pipeline_mode<synchronous>, transform_indices = @transform_1, window_bounds = array<i64: 2, 32>}, {pipeline_mode = #tpu.pipeline_mode<synchronous>, transform_indices = @transform_2, window_bounds = array<i64: 32, 2>}, {transform_indices = @transform_3, window_bounds = array<i64: 98>}, {transform_indices = @transform_4, window_bounds = array<i64: 1, 32, 256>}]} {
    %c0_i32 = arith.constant 0 : i32
    %c32_i32 = arith.constant 32 : i32
    %0 = arith.muli %c0_i32, %c32_i32 : i32
    %1 = tpu.assume_multiple %0, 8 : i32
    %c0 = arith.constant 0 : index
    %2 = arith.index_cast %1 : i32 to index
    %c0_0 = arith.constant 0 : index
    %3 = vector.load %arg1[%c0, %2, %c0_0] : memref<1x32x256xf32, #tpu.memory_space<vmem>>, vector<1x32x256xf32>
    %4 = vector.shape_cast %3 : vector<1x32x256xf32> to vector<32x256xf32>
    %cst = arith.constant dense<0.000000e+00> : vector<32xf32>
    %5 = vector.multi_reduction <add>, %4, %cst [1] : vector<32x256xf32> to vector<32xf32>
    %6 = vector.shape_cast %5 : vector<32xf32> to vector<32x1xf32>
    %cst_1 = arith.constant 3.906250e-03 : f32
    %7 = vector.broadcast %cst_1 : f32 to vector<32x1xf32>
    %8 = arith.mulf %6, %7 : vector<32x1xf32>
    %cst_2 = arith.constant dense<0xFF800000> : vector<32xf32>
    %9 = vector.multi_reduction <maximumf>, %4, %cst_2 [1] : vector<32x256xf32> to vector<32xf32>
    %10 = vector.shape_cast %9 : vector<32xf32> to vector<32x1xf32>
    %11 = tpu.iota {dimensions = array<i32: 1>} : vector<32x2xi32>
    %c0_i32_3 = arith.constant 0 : i32
    %12 = vector.broadcast %c0_i32_3 : i32 to vector<32x2xi32>
    %13 = arith.cmpi eq, %11, %12 : vector<32x2xi32>
    %14 = vector.shape_cast %8 : vector<32x1xf32> to vector<32x1xf32>
    %15 = vector.broadcast %14 : vector<32x1xf32> to vector<32x2xf32>
    %16 = vector.shape_cast %10 : vector<32x1xf32> to vector<32x1xf32>
    %17 = vector.broadcast %16 : vector<32x1xf32> to vector<32x2xf32>
    %18 = arith.select %13, %15, %17 : vector<32x2xi1>, vector<32x2xf32>
    %19 = arith.index_cast %1 : i32 to index
    %c0_4 = arith.constant 0 : index
    %20 = vector.load %arg8[%19, %c0_4] : memref<32x2xf32, #tpu.memory_space<vmem>>, vector<32x2xf32>
    tpu.vector_store %arg8[%19, %c0_4], %18 {strides = array<i32>} : memref<32x2xf32, #tpu.memory_space<vmem>>, vector<32x2xf32>,
    %c1_i32 = arith.constant 1 : i32
    %c0_5 = arith.constant 0 : index
    %c0_6 = arith.constant 0 : index
    %21 = vector.load %arg8[%c0_5, %c0_6] : memref<32x2xf32, #tpu.memory_space<vmem>>, vector<32x2xf32>
    %c0_7 = arith.constant 0 : index
    %c0_8 = arith.constant 0 : index
    %22 = vector.load %arg2[%c0_7, %c0_8] : memref<2x32xf32, #tpu.memory_space<vmem>>, vector<2x32xf32>
    %cst_9 = arith.constant dense<0.000000e+00> : vector<2x2xf32>
    %23 = tpu.matmul %22, %21, %cst_9 {dimension_numbers = #tpu.dot_dimension_numbers<[1], [0], [0], [1], [0, 0, 1, 1], [], []>} : vector<2x32xf32>, vector<32x2xf32>, vector<2x2xf32> -> vector<2x2xf32>
    %cst_10 = arith.constant 0.000000e+00 : f32
    %24 = vector.broadcast %cst_10 : f32 to vector<2x2xf32>
    %25 = arith.maximumf %23, %24 : vector<2x2xf32>
    %c0_11 = arith.constant 0 : index
    %c0_12 = arith.constant 0 : index
    %26 = vector.load %arg3[%c0_11, %c0_12] : memref<32x2xf32, #tpu.memory_space<vmem>>, vector<32x2xf32>
    %cst_13 = arith.constant dense<0.000000e+00> : vector<32x2xf32>
    %27 = tpu.matmul %26, %25, %cst_13 {dimension_numbers = #tpu.dot_dimension_numbers<[1], [0], [0], [1], [0, 0, 1, 1], [], []>} : vector<32x2xf32>, vector<2x2xf32>, vector<32x2xf32> -> vector<32x2xf32>
    %28 = vector.extract_strided_slice %27 {offsets = [0, 0], sizes = [32, 1], strides = [1, 1]} : vector<32x2xf32> to vector<32x1xf32>
    %29 = vector.extract_strided_slice %27 {offsets = [0, 1], sizes = [32, 1], strides = [1, 1]} : vector<32x2xf32> to vector<32x1xf32>
    %30 = arith.addf %28, %29 : vector<32x1xf32>
    %31 = arith.negf %30 : vector<32x1xf32>
    %32 = math.exp %31 : vector<32x1xf32>
    %cst_14 = arith.constant 1.000000e+00 : f32
    %33 = vector.broadcast %cst_14 : f32 to vector<32x1xf32>
    %34 = arith.addf %33, %32 : vector<32x1xf32>
    %35 = arith.divf %33, %34 : vector<32x1xf32>
    %c0_15 = arith.constant 0 : index
    %c0_16 = arith.constant 0 : index
    %36 = vector.load %arg9[%c0_15, %c0_16] : memref<32x1xf32, #tpu.memory_space<vmem>>, vector<32x1xf32>
    tpu.vector_store %arg9[%c0_15, %c0_16], %35 {strides = array<i32>} : memref<32x1xf32, #tpu.memory_space<vmem>>, vector<32x1xf32>,
    %cst_17 = arith.constant 0.000000e+00 : f32
    %37 = vector.broadcast %cst_17 : f32 to vector<2x22x22xf32>
    %c0_18 = arith.constant 0 : index
    %c0_19 = arith.constant 0 : index
    %c0_20 = arith.constant 0 : index
    %38 = vector.load %arg6[%c0_18, %c0_19, %c0_20] : memref<2x22x22xf32, #tpu.memory_space<vmem>>, vector<2x22x22xf32>
    tpu.vector_store %arg6[%c0_18, %c0_19, %c0_20], %37 {strides = array<i32>} : memref<2x22x22xf32, #tpu.memory_space<vmem>>, vector<2x22x22xf32>,
    %cst_21 = arith.constant 0.000000e+00 : f32
    %39 = vector.broadcast %cst_21 : f32 to vector<1x256xf32>
    %cst_22 = arith.constant 0xFF800000 : f32
    %40 = vector.broadcast %cst_22 : f32 to vector<1x256xf32>
    %c0_i32_23 = arith.constant 0 : i32
    %c32_i32_24 = arith.constant 32 : i32
    %41 = arith.muli %c0_i32_23, %c32_i32_24 : i32
    %42 = tpu.assume_multiple %41, 8 : i32
    %c0_25 = arith.constant 0 : index
    %43 = arith.index_cast %42 : i32 to index
    %c0_26 = arith.constant 0 : index
    %44 = vector.load %arg1[%c0_25, %43, %c0_26] : memref<1x32x256xf32, #tpu.memory_space<vmem>>, vector<1x32x256xf32>
    %45 = vector.shape_cast %44 : vector<1x32x256xf32> to vector<32x256xf32>
    %46 = arith.index_cast %42 : i32 to index
    %c0_27 = arith.constant 0 : index
    %47 = vector.load %arg9[%46, %c0_27] : memref<32x1xf32, #tpu.memory_space<vmem>>, vector<32x1xf32>
    %48 = vector.broadcast %47 : vector<32x1xf32> to vector<32x256xf32>
    %49 = arith.mulf %45, %48 : vector<32x256xf32>
    %cst_28 = arith.constant dense<0.000000e+00> : vector<256xf32>
    %50 = vector.multi_reduction <add>, %49, %cst_28 [0] : vector<32x256xf32> to vector<256xf32>
    %51 = vector.shape_cast %50 : vector<256xf32> to vector<1x256xf32>
    %52 = arith.addf %39, %51 : vector<1x256xf32>
    %cst_29 = arith.constant dense<0xFF800000> : vector<256xf32>
    %53 = vector.multi_reduction <maximumf>, %49, %cst_29 [0] : vector<32x256xf32> to vector<256xf32>
    %54 = vector.shape_cast %53 : vector<256xf32> to vector<1x256xf32>
    %55 = arith.maximumf %40, %54 : vector<1x256xf32>
    %c1_i32_30 = arith.constant 1 : i32
    %cst_31 = arith.constant 3.125000e-02 : f32
    %56 = vector.broadcast %cst_31 : f32 to vector<1x256xf32>
    %57 = arith.mulf %52, %56 : vector<1x256xf32>
    %58 = vector.extract_strided_slice %57 {offsets = [0, 0], sizes = [1, 16], strides = [1, 1]} : vector<1x256xf32> to vector<1x16xf32>
    %59 = vector.shape_cast %58 : vector<1x16xf32> to vector<16xf32>
    %c0_32 = arith.constant 0 : index
    %c3 = arith.constant 3 : index
    %c3_33 = arith.constant 3 : index
    %60 = vector.load %arg6[%c0_32, %c3, %c3_33] : memref<2x22x22xf32, #tpu.memory_space<vmem>>, vector<1x1x16xf32>
    %61 = vector.shape_cast %60 : vector<1x1x16xf32> to vector<16xf32>
    %62 = vector.shape_cast %59 : vector<16xf32> to vector<1x1x16xf32>
    tpu.vector_store %arg6[%c0_32, %c3, %c3_33], %62 {strides = array<i32>} : memref<2x22x22xf32, #tpu.memory_space<vmem>>, vector<1x1x16xf32>,
    %63 = vector.extract_strided_slice %55 {offsets = [0, 0], sizes = [1, 16], strides = [1, 1]} : vector<1x256xf32> to vector<1x16xf32>
    %64 = vector.shape_cast %63 : vector<1x16xf32> to vector<16xf32>
    %c1 = arith.constant 1 : index
    %c3_34 = arith.constant 3 : index
    %c3_35 = arith.constant 3 : index
    %65 = vector.load %arg6[%c1, %c3_34, %c3_35] : memref<2x22x22xf32, #tpu.memory_space<vmem>>, vector<1x1x16xf32>
    %66 = vector.shape_cast %65 : vector<1x1x16xf32> to vector<16xf32>
    %67 = vector.shape_cast %64 : vector<16xf32> to vector<1x1x16xf32>
    tpu.vector_store %arg6[%c1, %c3_34, %c3_35], %67 {strides = array<i32>} : memref<2x22x22xf32, #tpu.memory_space<vmem>>, vector<1x1x16xf32>,
    %68 = vector.extract_strided_slice %57 {offsets = [0, 16], sizes = [1, 16], strides = [1, 1]} : vector<1x256xf32> to vector<1x16xf32>
    %69 = vector.shape_cast %68 : vector<1x16xf32> to vector<16xf32>
    %c0_36 = arith.constant 0 : index
    %c4 = arith.constant 4 : index
    %c3_37 = arith.constant 3 : index
    %70 = vector.load %arg6[%c0_36, %c4, %c3_37] : memref<2x22x22xf32, #tpu.memory_space<vmem>>, vector<1x1x16xf32>
    %71 = vector.shape_cast %70 : vector<1x1x16xf32> to vector<16xf32>
    %72 = vector.shape_cast %69 : vector<16xf32> to vector<1x1x16xf32>
    tpu.vector_store %arg6[%c0_36, %c4, %c3_37], %72 {strides = array<i32>} : memref<2x22x22xf32, #tpu.memory_space<vmem>>, vector<1x1x16xf32>,
    %73 = vector.extract_strided_slice %55 {offsets = [0, 16], sizes = [1, 16], strides = [1, 1]} : vector<1x256xf32> to vector<1x16xf32>
    %74 = vector.shape_cast %73 : vector<1x16xf32> to vector<16xf32>
    %c1_38 = arith.constant 1 : index
    %c4_39 = arith.constant 4 : index
    %c3_40 = arith.constant 3 : index
    %75 = vector.load %arg6[%c1_38, %c4_39, %c3_40] : memref<2x22x22xf32, #tpu.memory_space<vmem>>, vector<1x1x16xf32>
    %76 = vector.shape_cast %75 : vector<1x1x16xf32> to vector<16xf32>
    %77 = vector.shape_cast %74 : vector<16xf32> to vector<1x1x16xf32>
    tpu.vector_store %arg6[%c1_38, %c4_39, %c3_40], %77 {strides = array<i32>} : memref<2x22x22xf32, #tpu.memory_space<vmem>>, vector<1x1x16xf32>,
    %78 = vector.extract_strided_slice %57 {offsets = [0, 32], sizes = [1, 16], strides = [1, 1]} : vector<1x256xf32> to vector<1x16xf32>
    %79 = vector.shape_cast %78 : vector<1x16xf32> to vector<16xf32>
    %c0_41 = arith.constant 0 : index
    %c5 = arith.constant 5 : index
    %c3_42 = arith.constant 3 : index
    %80 = vector.load %arg6[%c0_41, %c5, %c3_42] : memref<2x22x22xf32, #tpu.memory_space<vmem>>, vector<1x1x16xf32>
    %81 = vector.shape_cast %80 : vector<1x1x16xf32> to vector<16xf32>
    %82 = vector.shape_cast %79 : vector<16xf32> to vector<1x1x16xf32>
    tpu.vector_store %arg6[%c0_41, %c5, %c3_42], %82 {strides = array<i32>} : memref<2x22x22xf32, #tpu.memory_space<vmem>>, vector<1x1x16xf32>,
    %83 = vector.extract_strided_slice %55 {offsets = [0, 32], sizes = [1, 16], strides = [1, 1]} : vector<1x256xf32> to vector<1x16xf32>
    %84 = vector.shape_cast %83 : vector<1x16xf32> to vector<16xf32>
    %c1_43 = arith.constant 1 : index
    %c5_44 = arith.constant 5 : index
    %c3_45 = arith.constant 3 : index
    %85 = vector.load %arg6[%c1_43, %c5_44, %c3_45] : memref<2x22x22xf32, #tpu.memory_space<vmem>>, vector<1x1x16xf32>
    %86 = vector.shape_cast %85 : vector<1x1x16xf32> to vector<16xf32>
    %87 = vector.shape_cast %84 : vector<16xf32> to vector<1x1x16xf32>
    tpu.vector_store %arg6[%c1_43, %c5_44, %c3_45], %87 {strides = array<i32>} : memref<2x22x22xf32, #tpu.memory_space<vmem>>, vector<1x1x16xf32>,
    %88 = vector.extract_strided_slice %57 {offsets = [0, 48], sizes = [1, 16], strides = [1, 1]} : vector<1x256xf32> to vector<1x16xf32>
    %89 = vector.shape_cast %88 : vector<1x16xf32> to vector<16xf32>
    %c0_46 = arith.constant 0 : index
    %c6 = arith.constant 6 : index
    %c3_47 = arith.constant 3 : index
    %90 = vector.load %arg6[%c0_46, %c6, %c3_47] : memref<2x22x22xf32, #tpu.memory_space<vmem>>, vector<1x1x16xf32>
    %91 = vector.shape_cast %90 : vector<1x1x16xf32> to vector<16xf32>
    %92 = vector.shape_cast %89 : vector<16xf32> to vector<1x1x16xf32>
    tpu.vector_store %arg6[%c0_46, %c6, %c3_47], %92 {strides = array<i32>} : memref<2x22x22xf32, #tpu.memory_space<vmem>>, vector<1x1x16xf32>,
    %93 = vector.extract_strided_slice %55 {offsets = [0, 48], sizes = [1, 16], strides = [1, 1]} : vector<1x256xf32> to vector<1x16xf32>
    %94 = vector.shape_cast %93 : vector<1x16xf32> to vector<16xf32>
    %c1_48 = arith.constant 1 : index
    %c6_49 = arith.constant 6 : index
    %c3_50 = arith.constant 3 : index
    %95 = vector.load %arg6[%c1_48, %c6_49, %c3_50] : memref<2x22x22xf32, #tpu.memory_space<vmem>>, vector<1x1x16xf32>
    %96 = vector.shape_cast %95 : vector<1x1x16xf32> to vector<16xf32>
    %97 = vector.shape_cast %94 : vector<16xf32> to vector<1x1x16xf32>
    tpu.vector_store %arg6[%c1_48, %c6_49, %c3_50], %97 {strides = array<i32>} : memref<2x22x22xf32, #tpu.memory_space<vmem>>, vector<1x1x16xf32>,
    %98 = vector.extract_strided_slice %57 {offsets = [0, 64], sizes = [1, 16], strides = [1, 1]} : vector<1x256xf32> to vector<1x16xf32>
    %99 = vector.shape_cast %98 : vector<1x16xf32> to vector<16xf32>
    %c0_51 = arith.constant 0 : index
    %c7 = arith.constant 7 : index
    %c3_52 = arith.constant 3 : index
    %100 = vector.load %arg6[%c0_51, %c7, %c3_52] : memref<2x22x22xf32, #tpu.memory_space<vmem>>, vector<1x1x16xf32>
    %101 = vector.shape_cast %100 : vector<1x1x16xf32> to vector<16xf32>
    %102 = vector.shape_cast %99 : vector<16xf32> to vector<1x1x16xf32>
    tpu.vector_store %arg6[%c0_51, %c7, %c3_52], %102 {strides = array<i32>} : memref<2x22x22xf32, #tpu.memory_space<vmem>>, vector<1x1x16xf32>,
    %103 = vector.extract_strided_slice %55 {offsets = [0, 64], sizes = [1, 16], strides = [1, 1]} : vector<1x256xf32> to vector<1x16xf32>
    %104 = vector.shape_cast %103 : vector<1x16xf32> to vector<16xf32>
    %c1_53 = arith.constant 1 : index
    %c7_54 = arith.constant 7 : index
    %c3_55 = arith.constant 3 : index
    %105 = vector.load %arg6[%c1_53, %c7_54, %c3_55] : memref<2x22x22xf32, #tpu.memory_space<vmem>>, vector<1x1x16xf32>
    %106 = vector.shape_cast %105 : vector<1x1x16xf32> to vector<16xf32>
    %107 = vector.shape_cast %104 : vector<16xf32> to vector<1x1x16xf32>
    tpu.vector_store %arg6[%c1_53, %c7_54, %c3_55], %107 {strides = array<i32>} : memref<2x22x22xf32, #tpu.memory_space<vmem>>, vector<1x1x16xf32>,
    %108 = vector.extract_strided_slice %57 {offsets = [0, 80], sizes = [1, 16], strides = [1, 1]} : vector<1x256xf32> to vector<1x16xf32>
    %109 = vector.shape_cast %108 : vector<1x16xf32> to vector<16xf32>
    %c0_56 = arith.constant 0 : index
    %c8 = arith.constant 8 : index
    %c3_57 = arith.constant 3 : index
    %110 = vector.load %arg6[%c0_56, %c8, %c3_57] : memref<2x22x22xf32, #tpu.memory_space<vmem>>, vector<1x1x16xf32>
    %111 = vector.shape_cast %110 : vector<1x1x16xf32> to vector<16xf32>
    %112 = vector.shape_cast %109 : vector<16xf32> to vector<1x1x16xf32>
    tpu.vector_store %arg6[%c0_56, %c8, %c3_57], %112 {strides = array<i32>} : memref<2x22x22xf32, #tpu.memory_space<vmem>>, vector<1x1x16xf32>,
    %113 = vector.extract_strided_slice %55 {offsets = [0, 80], sizes = [1, 16], strides = [1, 1]} : vector<1x256xf32> to vector<1x16xf32>
    %114 = vector.shape_cast %113 : vector<1x16xf32> to vector<16xf32>
    %c1_58 = arith.constant 1 : index
    %c8_59 = arith.constant 8 : index
    %c3_60 = arith.constant 3 : index
    %115 = vector.load %arg6[%c1_58, %c8_59, %c3_60] : memref<2x22x22xf32, #tpu.memory_space<vmem>>, vector<1x1x16xf32>
    %116 = vector.shape_cast %115 : vector<1x1x16xf32> to vector<16xf32>
    %117 = vector.shape_cast %114 : vector<16xf32> to vector<1x1x16xf32>
    tpu.vector_store %arg6[%c1_58, %c8_59, %c3_60], %117 {strides = array<i32>} : memref<2x22x22xf32, #tpu.memory_space<vmem>>, vector<1x1x16xf32>,
    %118 = vector.extract_strided_slice %57 {offsets = [0, 96], sizes = [1, 16], strides = [1, 1]} : vector<1x256xf32> to vector<1x16xf32>
    %119 = vector.shape_cast %118 : vector<1x16xf32> to vector<16xf32>
    %c0_61 = arith.constant 0 : index
    %c9 = arith.constant 9 : index
    %c3_62 = arith.constant 3 : index
    %120 = vector.load %arg6[%c0_61, %c9, %c3_62] : memref<2x22x22xf32, #tpu.memory_space<vmem>>, vector<1x1x16xf32>
    %121 = vector.shape_cast %120 : vector<1x1x16xf32> to vector<16xf32>
    %122 = vector.shape_cast %119 : vector<16xf32> to vector<1x1x16xf32>
    tpu.vector_store %arg6[%c0_61, %c9, %c3_62], %122 {strides = array<i32>} : memref<2x22x22xf32, #tpu.memory_space<vmem>>, vector<1x1x16xf32>,
    %123 = vector.extract_strided_slice %55 {offsets = [0, 96], sizes = [1, 16], strides = [1, 1]} : vector<1x256xf32> to vector<1x16xf32>
    %124 = vector.shape_cast %123 : vector<1x16xf32> to vector<16xf32>
    %c1_63 = arith.constant 1 : index
    %c9_64 = arith.constant 9 : index
    %c3_65 = arith.constant 3 : index
    %125 = vector.load %arg6[%c1_63, %c9_64, %c3_65] : memref<2x22x22xf32, #tpu.memory_space<vmem>>, vector<1x1x16xf32>
    %126 = vector.shape_cast %125 : vector<1x1x16xf32> to vector<16xf32>
    %127 = vector.shape_cast %124 : vector<16xf32> to vector<1x1x16xf32>
    tpu.vector_store %arg6[%c1_63, %c9_64, %c3_65], %127 {strides = array<i32>} : memref<2x22x22xf32, #tpu.memory_space<vmem>>, vector<1x1x16xf32>,
    %128 = vector.extract_strided_slice %57 {offsets = [0, 112], sizes = [1, 16], strides = [1, 1]} : vector<1x256xf32> to vector<1x16xf32>
    %129 = vector.shape_cast %128 : vector<1x16xf32> to vector<16xf32>
    %c0_66 = arith.constant 0 : index
    %c10 = arith.constant 10 : index
    %c3_67 = arith.constant 3 : index
    %130 = vector.load %arg6[%c0_66, %c10, %c3_67] : memref<2x22x22xf32, #tpu.memory_space<vmem>>, vector<1x1x16xf32>
    %131 = vector.shape_cast %130 : vector<1x1x16xf32> to vector<16xf32>
    %132 = vector.shape_cast %129 : vector<16xf32> to vector<1x1x16xf32>
    tpu.vector_store %arg6[%c0_66, %c10, %c3_67], %132 {strides = array<i32>} : memref<2x22x22xf32, #tpu.memory_space<vmem>>, vector<1x1x16xf32>,
    %133 = vector.extract_strided_slice %55 {offsets = [0, 112], sizes = [1, 16], strides = [1, 1]} : vector<1x256xf32> to vector<1x16xf32>
    %134 = vector.shape_cast %133 : vector<1x16xf32> to vector<16xf32>
    %c1_68 = arith.constant 1 : index
    %c10_69 = arith.constant 10 : index
    %c3_70 = arith.constant 3 : index
    %135 = vector.load %arg6[%c1_68, %c10_69, %c3_70] : memref<2x22x22xf32, #tpu.memory_space<vmem>>, vector<1x1x16xf32>
    %136 = vector.shape_cast %135 : vector<1x1x16xf32> to vector<16xf32>
    %137 = vector.shape_cast %134 : vector<16xf32> to vector<1x1x16xf32>
    tpu.vector_store %arg6[%c1_68, %c10_69, %c3_70], %137 {strides = array<i32>} : memref<2x22x22xf32, #tpu.memory_space<vmem>>, vector<1x1x16xf32>,
    %138 = vector.extract_strided_slice %57 {offsets = [0, 128], sizes = [1, 16], strides = [1, 1]} : vector<1x256xf32> to vector<1x16xf32>
    %139 = vector.shape_cast %138 : vector<1x16xf32> to vector<16xf32>
    %c0_71 = arith.constant 0 : index
    %c11 = arith.constant 11 : index
    %c3_72 = arith.constant 3 : index
    %140 = vector.load %arg6[%c0_71, %c11, %c3_72] : memref<2x22x22xf32, #tpu.memory_space<vmem>>, vector<1x1x16xf32>
    %141 = vector.shape_cast %140 : vector<1x1x16xf32> to vector<16xf32>
    %142 = vector.shape_cast %139 : vector<16xf32> to vector<1x1x16xf32>
    tpu.vector_store %arg6[%c0_71, %c11, %c3_72], %142 {strides = array<i32>} : memref<2x22x22xf32, #tpu.memory_space<vmem>>, vector<1x1x16xf32>,
    %143 = vector.extract_strided_slice %55 {offsets = [0, 128], sizes = [1, 16], strides = [1, 1]} : vector<1x256xf32> to vector<1x16xf32>
    %144 = vector.shape_cast %143 : vector<1x16xf32> to vector<16xf32>
    %c1_73 = arith.constant 1 : index
    %c11_74 = arith.constant 11 : index
    %c3_75 = arith.constant 3 : index
    %145 = vector.load %arg6[%c1_73, %c11_74, %c3_75] : memref<2x22x22xf32, #tpu.memory_space<vmem>>, vector<1x1x16xf32>
    %146 = vector.shape_cast %145 : vector<1x1x16xf32> to vector<16xf32>
    %147 = vector.shape_cast %144 : vector<16xf32> to vector<1x1x16xf32>
    tpu.vector_store %arg6[%c1_73, %c11_74, %c3_75], %147 {strides = array<i32>} : memref<2x22x22xf32, #tpu.memory_space<vmem>>, vector<1x1x16xf32>,
    %148 = vector.extract_strided_slice %57 {offsets = [0, 144], sizes = [1, 16], strides = [1, 1]} : vector<1x256xf32> to vector<1x16xf32>
    %149 = vector.shape_cast %148 : vector<1x16xf32> to vector<16xf32>
    %c0_76 = arith.constant 0 : index
    %c12 = arith.constant 12 : index
    %c3_77 = arith.constant 3 : index
    %150 = vector.load %arg6[%c0_76, %c12, %c3_77] : memref<2x22x22xf32, #tpu.memory_space<vmem>>, vector<1x1x16xf32>
    %151 = vector.shape_cast %150 : vector<1x1x16xf32> to vector<16xf32>
    %152 = vector.shape_cast %149 : vector<16xf32> to vector<1x1x16xf32>
    tpu.vector_store %arg6[%c0_76, %c12, %c3_77], %152 {strides = array<i32>} : memref<2x22x22xf32, #tpu.memory_space<vmem>>, vector<1x1x16xf32>,
    %153 = vector.extract_strided_slice %55 {offsets = [0, 144], sizes = [1, 16], strides = [1, 1]} : vector<1x256xf32> to vector<1x16xf32>
    %154 = vector.shape_cast %153 : vector<1x16xf32> to vector<16xf32>
    %c1_78 = arith.constant 1 : index
    %c12_79 = arith.constant 12 : index
    %c3_80 = arith.constant 3 : index
    %155 = vector.load %arg6[%c1_78, %c12_79, %c3_80] : memref<2x22x22xf32, #tpu.memory_space<vmem>>, vector<1x1x16xf32>
    %156 = vector.shape_cast %155 : vector<1x1x16xf32> to vector<16xf32>
    %157 = vector.shape_cast %154 : vector<16xf32> to vector<1x1x16xf32>
    tpu.vector_store %arg6[%c1_78, %c12_79, %c3_80], %157 {strides = array<i32>} : memref<2x22x22xf32, #tpu.memory_space<vmem>>, vector<1x1x16xf32>,
    %158 = vector.extract_strided_slice %57 {offsets = [0, 160], sizes = [1, 16], strides = [1, 1]} : vector<1x256xf32> to vector<1x16xf32>
    %159 = vector.shape_cast %158 : vector<1x16xf32> to vector<16xf32>
    %c0_81 = arith.constant 0 : index
    %c13 = arith.constant 13 : index
    %c3_82 = arith.constant 3 : index
    %160 = vector.load %arg6[%c0_81, %c13, %c3_82] : memref<2x22x22xf32, #tpu.memory_space<vmem>>, vector<1x1x16xf32>
    %161 = vector.shape_cast %160 : vector<1x1x16xf32> to vector<16xf32>
    %162 = vector.shape_cast %159 : vector<16xf32> to vector<1x1x16xf32>
    tpu.vector_store %arg6[%c0_81, %c13, %c3_82], %162 {strides = array<i32>} : memref<2x22x22xf32, #tpu.memory_space<vmem>>, vector<1x1x16xf32>,
    %163 = vector.extract_strided_slice %55 {offsets = [0, 160], sizes = [1, 16], strides = [1, 1]} : vector<1x256xf32> to vector<1x16xf32>
    %164 = vector.shape_cast %163 : vector<1x16xf32> to vector<16xf32>
    %c1_83 = arith.constant 1 : index
    %c13_84 = arith.constant 13 : index
    %c3_85 = arith.constant 3 : index
    %165 = vector.load %arg6[%c1_83, %c13_84, %c3_85] : memref<2x22x22xf32, #tpu.memory_space<vmem>>, vector<1x1x16xf32>
    %166 = vector.shape_cast %165 : vector<1x1x16xf32> to vector<16xf32>
    %167 = vector.shape_cast %164 : vector<16xf32> to vector<1x1x16xf32>
    tpu.vector_store %arg6[%c1_83, %c13_84, %c3_85], %167 {strides = array<i32>} : memref<2x22x22xf32, #tpu.memory_space<vmem>>, vector<1x1x16xf32>,
    %168 = vector.extract_strided_slice %57 {offsets = [0, 176], sizes = [1, 16], strides = [1, 1]} : vector<1x256xf32> to vector<1x16xf32>
    %169 = vector.shape_cast %168 : vector<1x16xf32> to vector<16xf32>
    %c0_86 = arith.constant 0 : index
    %c14 = arith.constant 14 : index
    %c3_87 = arith.constant 3 : index
    %170 = vector.load %arg6[%c0_86, %c14, %c3_87] : memref<2x22x22xf32, #tpu.memory_space<vmem>>, vector<1x1x16xf32>
    %171 = vector.shape_cast %170 : vector<1x1x16xf32> to vector<16xf32>
    %172 = vector.shape_cast %169 : vector<16xf32> to vector<1x1x16xf32>
    tpu.vector_store %arg6[%c0_86, %c14, %c3_87], %172 {strides = array<i32>} : memref<2x22x22xf32, #tpu.memory_space<vmem>>, vector<1x1x16xf32>,
    %173 = vector.extract_strided_slice %55 {offsets = [0, 176], sizes = [1, 16], strides = [1, 1]} : vector<1x256xf32> to vector<1x16xf32>
    %174 = vector.shape_cast %173 : vector<1x16xf32> to vector<16xf32>
    %c1_88 = arith.constant 1 : index
    %c14_89 = arith.constant 14 : index
    %c3_90 = arith.constant 3 : index
    %175 = vector.load %arg6[%c1_88, %c14_89, %c3_90] : memref<2x22x22xf32, #tpu.memory_space<vmem>>, vector<1x1x16xf32>
    %176 = vector.shape_cast %175 : vector<1x1x16xf32> to vector<16xf32>
    %177 = vector.shape_cast %174 : vector<16xf32> to vector<1x1x16xf32>
    tpu.vector_store %arg6[%c1_88, %c14_89, %c3_90], %177 {strides = array<i32>} : memref<2x22x22xf32, #tpu.memory_space<vmem>>, vector<1x1x16xf32>,
    %178 = vector.extract_strided_slice %57 {offsets = [0, 192], sizes = [1, 16], strides = [1, 1]} : vector<1x256xf32> to vector<1x16xf32>
    %179 = vector.shape_cast %178 : vector<1x16xf32> to vector<16xf32>
    %c0_91 = arith.constant 0 : index
    %c15 = arith.constant 15 : index
    %c3_92 = arith.constant 3 : index
    %180 = vector.load %arg6[%c0_91, %c15, %c3_92] : memref<2x22x22xf32, #tpu.memory_space<vmem>>, vector<1x1x16xf32>
    %181 = vector.shape_cast %180 : vector<1x1x16xf32> to vector<16xf32>
    %182 = vector.shape_cast %179 : vector<16xf32> to vector<1x1x16xf32>
    tpu.vector_store %arg6[%c0_91, %c15, %c3_92], %182 {strides = array<i32>} : memref<2x22x22xf32, #tpu.memory_space<vmem>>, vector<1x1x16xf32>,
    %183 = vector.extract_strided_slice %55 {offsets = [0, 192], sizes = [1, 16], strides = [1, 1]} : vector<1x256xf32> to vector<1x16xf32>
    %184 = vector.shape_cast %183 : vector<1x16xf32> to vector<16xf32>
    %c1_93 = arith.constant 1 : index
    %c15_94 = arith.constant 15 : index
    %c3_95 = arith.constant 3 : index
    %185 = vector.load %arg6[%c1_93, %c15_94, %c3_95] : memref<2x22x22xf32, #tpu.memory_space<vmem>>, vector<1x1x16xf32>
    %186 = vector.shape_cast %185 : vector<1x1x16xf32> to vector<16xf32>
    %187 = vector.shape_cast %184 : vector<16xf32> to vector<1x1x16xf32>
    tpu.vector_store %arg6[%c1_93, %c15_94, %c3_95], %187 {strides = array<i32>} : memref<2x22x22xf32, #tpu.memory_space<vmem>>, vector<1x1x16xf32>,
    %188 = vector.extract_strided_slice %57 {offsets = [0, 208], sizes = [1, 16], strides = [1, 1]} : vector<1x256xf32> to vector<1x16xf32>
    %189 = vector.shape_cast %188 : vector<1x16xf32> to vector<16xf32>
    %c0_96 = arith.constant 0 : index
    %c16 = arith.constant 16 : index
    %c3_97 = arith.constant 3 : index
    %190 = vector.load %arg6[%c0_96, %c16, %c3_97] : memref<2x22x22xf32, #tpu.memory_space<vmem>>, vector<1x1x16xf32>
    %191 = vector.shape_cast %190 : vector<1x1x16xf32> to vector<16xf32>
    %192 = vector.shape_cast %189 : vector<16xf32> to vector<1x1x16xf32>
    tpu.vector_store %arg6[%c0_96, %c16, %c3_97], %192 {strides = array<i32>} : memref<2x22x22xf32, #tpu.memory_space<vmem>>, vector<1x1x16xf32>,
    %193 = vector.extract_strided_slice %55 {offsets = [0, 208], sizes = [1, 16], strides = [1, 1]} : vector<1x256xf32> to vector<1x16xf32>
    %194 = vector.shape_cast %193 : vector<1x16xf32> to vector<16xf32>
    %c1_98 = arith.constant 1 : index
    %c16_99 = arith.constant 16 : index
    %c3_100 = arith.constant 3 : index
    %195 = vector.load %arg6[%c1_98, %c16_99, %c3_100] : memref<2x22x22xf32, #tpu.memory_space<vmem>>, vector<1x1x16xf32>
    %196 = vector.shape_cast %195 : vector<1x1x16xf32> to vector<16xf32>
    %197 = vector.shape_cast %194 : vector<16xf32> to vector<1x1x16xf32>
    tpu.vector_store %arg6[%c1_98, %c16_99, %c3_100], %197 {strides = array<i32>} : memref<2x22x22xf32, #tpu.memory_space<vmem>>, vector<1x1x16xf32>,
    %198 = vector.extract_strided_slice %57 {offsets = [0, 224], sizes = [1, 16], strides = [1, 1]} : vector<1x256xf32> to vector<1x16xf32>
    %199 = vector.shape_cast %198 : vector<1x16xf32> to vector<16xf32>
    %c0_101 = arith.constant 0 : index
    %c17 = arith.constant 17 : index
    %c3_102 = arith.constant 3 : index
    %200 = vector.load %arg6[%c0_101, %c17, %c3_102] : memref<2x22x22xf32, #tpu.memory_space<vmem>>, vector<1x1x16xf32>
    %201 = vector.shape_cast %200 : vector<1x1x16xf32> to vector<16xf32>
    %202 = vector.shape_cast %199 : vector<16xf32> to vector<1x1x16xf32>
    tpu.vector_store %arg6[%c0_101, %c17, %c3_102], %202 {strides = array<i32>} : memref<2x22x22xf32, #tpu.memory_space<vmem>>, vector<1x1x16xf32>,
    %203 = vector.extract_strided_slice %55 {offsets = [0, 224], sizes = [1, 16], strides = [1, 1]} : vector<1x256xf32> to vector<1x16xf32>
    %204 = vector.shape_cast %203 : vector<1x16xf32> to vector<16xf32>
    %c1_103 = arith.constant 1 : index
    %c17_104 = arith.constant 17 : index
    %c3_105 = arith.constant 3 : index
    %205 = vector.load %arg6[%c1_103, %c17_104, %c3_105] : memref<2x22x22xf32, #tpu.memory_space<vmem>>, vector<1x1x16xf32>
    %206 = vector.shape_cast %205 : vector<1x1x16xf32> to vector<16xf32>
    %207 = vector.shape_cast %204 : vector<16xf32> to vector<1x1x16xf32>
    tpu.vector_store %arg6[%c1_103, %c17_104, %c3_105], %207 {strides = array<i32>} : memref<2x22x22xf32, #tpu.memory_space<vmem>>, vector<1x1x16xf32>,
    %208 = vector.extract_strided_slice %57 {offsets = [0, 240], sizes = [1, 16], strides = [1, 1]} : vector<1x256xf32> to vector<1x16xf32>
    %209 = vector.shape_cast %208 : vector<1x16xf32> to vector<16xf32>
    %c0_106 = arith.constant 0 : index
    %c18 = arith.constant 18 : index
    %c3_107 = arith.constant 3 : index
    %210 = vector.load %arg6[%c0_106, %c18, %c3_107] : memref<2x22x22xf32, #tpu.memory_space<vmem>>, vector<1x1x16xf32>
    %211 = vector.shape_cast %210 : vector<1x1x16xf32> to vector<16xf32>
    %212 = vector.shape_cast %209 : vector<16xf32> to vector<1x1x16xf32>
    tpu.vector_store %arg6[%c0_106, %c18, %c3_107], %212 {strides = array<i32>} : memref<2x22x22xf32, #tpu.memory_space<vmem>>, vector<1x1x16xf32>,
    %213 = vector.extract_strided_slice %55 {offsets = [0, 240], sizes = [1, 16], strides = [1, 1]} : vector<1x256xf32> to vector<1x16xf32>
    %214 = vector.shape_cast %213 : vector<1x16xf32> to vector<16xf32>
    %c1_108 = arith.constant 1 : index
    %c18_109 = arith.constant 18 : index
    %c3_110 = arith.constant 3 : index
    %215 = vector.load %arg6[%c1_108, %c18_109, %c3_110] : memref<2x22x22xf32, #tpu.memory_space<vmem>>, vector<1x1x16xf32>
    %216 = vector.shape_cast %215 : vector<1x1x16xf32> to vector<16xf32>
    %217 = vector.shape_cast %214 : vector<16xf32> to vector<1x1x16xf32>
    tpu.vector_store %arg6[%c1_108, %c18_109, %c3_110], %217 {strides = array<i32>} : memref<2x22x22xf32, #tpu.memory_space<vmem>>, vector<1x1x16xf32>,
    %cst_111 = arith.constant 0.000000e+00 : f32
    %218 = vector.broadcast %cst_111 : f32 to vector<16x16xf32>
    %cst_112 = arith.constant 0.000000e+00 : f32
    %219 = vector.broadcast %cst_112 : f32 to vector<16x16xf32>
    %cst_113 = arith.constant 0.000000e+00 : f32
    %220 = vector.broadcast %cst_113 : f32 to vector<16x16xf32>
    %cst_114 = arith.constant 0.000000e+00 : f32
    %221 = vector.broadcast %cst_114 : f32 to vector<16x16xf32>
    %c0_115 = arith.constant 0 : index
    %c0_116 = arith.constant 0 : index
    %c0_117 = arith.constant 0 : index
    %222 = vector.load %arg6[%c0_115, %c0_116, %c0_117] : memref<2x22x22xf32, #tpu.memory_space<vmem>>, vector<1x22x22xf32>
    %223 = vector.shape_cast %222 : vector<1x22x22xf32> to vector<22x22xf32>
    %224 = vector.extract_strided_slice %223 {offsets = [0, 0], sizes = [22, 16], strides = [1, 1]} : vector<22x22xf32> to vector<22x16xf32>
    %c0_118 = arith.constant 0 : index
    %225 = memref.load %arg4[%c0_118] : memref<98xf32, #tpu.memory_space<smem>>
    %226 = vector.extract_strided_slice %224 {offsets = [0, 0], sizes = [16, 16], strides = [1, 1]} : vector<22x16xf32> to vector<16x16xf32>
    %227 = vector.broadcast %225 : f32 to vector<16x16xf32>
    %228 = arith.mulf %227, %226 : vector<16x16xf32>
    %229 = arith.addf %218, %228 : vector<16x16xf32>
    %c7_119 = arith.constant 7 : index
    %230 = memref.load %arg4[%c7_119] : memref<98xf32, #tpu.memory_space<smem>>
    %231 = vector.extract_strided_slice %224 {offsets = [1, 0], sizes = [16, 16], strides = [1, 1]} : vector<22x16xf32> to vector<16x16xf32>
    %232 = vector.broadcast %230 : f32 to vector<16x16xf32>
    %233 = arith.mulf %232, %231 : vector<16x16xf32>
    %234 = arith.addf %219, %233 : vector<16x16xf32>
    %c14_120 = arith.constant 14 : index
    %235 = memref.load %arg4[%c14_120] : memref<98xf32, #tpu.memory_space<smem>>
    %236 = vector.extract_strided_slice %224 {offsets = [2, 0], sizes = [16, 16], strides = [1, 1]} : vector<22x16xf32> to vector<16x16xf32>
    %237 = vector.broadcast %235 : f32 to vector<16x16xf32>
    %238 = arith.mulf %237, %236 : vector<16x16xf32>
    %239 = arith.addf %220, %238 : vector<16x16xf32>
    %c21 = arith.constant 21 : index
    %240 = memref.load %arg4[%c21] : memref<98xf32, #tpu.memory_space<smem>>
    %241 = vector.extract_strided_slice %224 {offsets = [3, 0], sizes = [16, 16], strides = [1, 1]} : vector<22x16xf32> to vector<16x16xf32>
    %242 = vector.broadcast %240 : f32 to vector<16x16xf32>
    %243 = arith.mulf %242, %241 : vector<16x16xf32>
    %244 = arith.addf %221, %243 : vector<16x16xf32>
    %c28 = arith.constant 28 : index
    %245 = memref.load %arg4[%c28] : memref<98xf32, #tpu.memory_space<smem>>
    %246 = vector.extract_strided_slice %224 {offsets = [4, 0], sizes = [16, 16], strides = [1, 1]} : vector<22x16xf32> to vector<16x16xf32>
    %247 = vector.broadcast %245 : f32 to vector<16x16xf32>
    %248 = arith.mulf %247, %246 : vector<16x16xf32>
    %249 = arith.addf %229, %248 : vector<16x16xf32>
    %c35 = arith.constant 35 : index
    %250 = memref.load %arg4[%c35] : memref<98xf32, #tpu.memory_space<smem>>
    %251 = vector.extract_strided_slice %224 {offsets = [5, 0], sizes = [16, 16], strides = [1, 1]} : vector<22x16xf32> to vector<16x16xf32>
    %252 = vector.broadcast %250 : f32 to vector<16x16xf32>
    %253 = arith.mulf %252, %251 : vector<16x16xf32>
    %254 = arith.addf %234, %253 : vector<16x16xf32>
    %c42 = arith.constant 42 : index
    %255 = memref.load %arg4[%c42] : memref<98xf32, #tpu.memory_space<smem>>
    %256 = vector.extract_strided_slice %224 {offsets = [6, 0], sizes = [16, 16], strides = [1, 1]} : vector<22x16xf32> to vector<16x16xf32>
    %257 = vector.broadcast %255 : f32 to vector<16x16xf32>
    %258 = arith.mulf %257, %256 : vector<16x16xf32>
    %259 = arith.addf %239, %258 : vector<16x16xf32>
    %260 = vector.extract_strided_slice %223 {offsets = [0, 1], sizes = [22, 16], strides = [1, 1]} : vector<22x22xf32> to vector<22x16xf32>
    %c1_121 = arith.constant 1 : index
    %261 = memref.load %arg4[%c1_121] : memref<98xf32, #tpu.memory_space<smem>>
    %262 = vector.extract_strided_slice %260 {offsets = [0, 0], sizes = [16, 16], strides = [1, 1]} : vector<22x16xf32> to vector<16x16xf32>
    %263 = vector.broadcast %261 : f32 to vector<16x16xf32>
    %264 = arith.mulf %263, %262 : vector<16x16xf32>
    %265 = arith.addf %244, %264 : vector<16x16xf32>
    %c8_122 = arith.constant 8 : index
    %266 = memref.load %arg4[%c8_122] : memref<98xf32, #tpu.memory_space<smem>>
    %267 = vector.extract_strided_slice %260 {offsets = [1, 0], sizes = [16, 16], strides = [1, 1]} : vector<22x16xf32> to vector<16x16xf32>
    %268 = vector.broadcast %266 : f32 to vector<16x16xf32>
    %269 = arith.mulf %268, %267 : vector<16x16xf32>
    %270 = arith.addf %249, %269 : vector<16x16xf32>
    %c15_123 = arith.constant 15 : index
    %271 = memref.load %arg4[%c15_123] : memref<98xf32, #tpu.memory_space<smem>>
    %272 = vector.extract_strided_slice %260 {offsets = [2, 0], sizes = [16, 16], strides = [1, 1]} : vector<22x16xf32> to vector<16x16xf32>
    %273 = vector.broadcast %271 : f32 to vector<16x16xf32>
    %274 = arith.mulf %273, %272 : vector<16x16xf32>
    %275 = arith.addf %254, %274 : vector<16x16xf32>
    %c22 = arith.constant 22 : index
    %276 = memref.load %arg4[%c22] : memref<98xf32, #tpu.memory_space<smem>>
    %277 = vector.extract_strided_slice %260 {offsets = [3, 0], sizes = [16, 16], strides = [1, 1]} : vector<22x16xf32> to vector<16x16xf32>
    %278 = vector.broadcast %276 : f32 to vector<16x16xf32>
    %279 = arith.mulf %278, %277 : vector<16x16xf32>
    %280 = arith.addf %259, %279 : vector<16x16xf32>
    %c29 = arith.constant 29 : index
    %281 = memref.load %arg4[%c29] : memref<98xf32, #tpu.memory_space<smem>>
    %282 = vector.extract_strided_slice %260 {offsets = [4, 0], sizes = [16, 16], strides = [1, 1]} : vector<22x16xf32> to vector<16x16xf32>
    %283 = vector.broadcast %281 : f32 to vector<16x16xf32>
    %284 = arith.mulf %283, %282 : vector<16x16xf32>
    %285 = arith.addf %265, %284 : vector<16x16xf32>
    %c36 = arith.constant 36 : index
    %286 = memref.load %arg4[%c36] : memref<98xf32, #tpu.memory_space<smem>>
    %287 = vector.extract_strided_slice %260 {offsets = [5, 0], sizes = [16, 16], strides = [1, 1]} : vector<22x16xf32> to vector<16x16xf32>
    %288 = vector.broadcast %286 : f32 to vector<16x16xf32>
    %289 = arith.mulf %288, %287 : vector<16x16xf32>
    %290 = arith.addf %270, %289 : vector<16x16xf32>
    %c43 = arith.constant 43 : index
    %291 = memref.load %arg4[%c43] : memref<98xf32, #tpu.memory_space<smem>>
    %292 = vector.extract_strided_slice %260 {offsets = [6, 0], sizes = [16, 16], strides = [1, 1]} : vector<22x16xf32> to vector<16x16xf32>
    %293 = vector.broadcast %291 : f32 to vector<16x16xf32>
    %294 = arith.mulf %293, %292 : vector<16x16xf32>
    %295 = arith.addf %275, %294 : vector<16x16xf32>
    %296 = vector.extract_strided_slice %223 {offsets = [0, 2], sizes = [22, 16], strides = [1, 1]} : vector<22x22xf32> to vector<22x16xf32>
    %c2 = arith.constant 2 : index
    %297 = memref.load %arg4[%c2] : memref<98xf32, #tpu.memory_space<smem>>
    %298 = vector.extract_strided_slice %296 {offsets = [0, 0], sizes = [16, 16], strides = [1, 1]} : vector<22x16xf32> to vector<16x16xf32>
    %299 = vector.broadcast %297 : f32 to vector<16x16xf32>
    %300 = arith.mulf %299, %298 : vector<16x16xf32>
    %301 = arith.addf %280, %300 : vector<16x16xf32>
    %c9_124 = arith.constant 9 : index
    %302 = memref.load %arg4[%c9_124] : memref<98xf32, #tpu.memory_space<smem>>
    %303 = vector.extract_strided_slice %296 {offsets = [1, 0], sizes = [16, 16], strides = [1, 1]} : vector<22x16xf32> to vector<16x16xf32>
    %304 = vector.broadcast %302 : f32 to vector<16x16xf32>
    %305 = arith.mulf %304, %303 : vector<16x16xf32>
    %306 = arith.addf %285, %305 : vector<16x16xf32>
    %c16_125 = arith.constant 16 : index
    %307 = memref.load %arg4[%c16_125] : memref<98xf32, #tpu.memory_space<smem>>
    %308 = vector.extract_strided_slice %296 {offsets = [2, 0], sizes = [16, 16], strides = [1, 1]} : vector<22x16xf32> to vector<16x16xf32>
    %309 = vector.broadcast %307 : f32 to vector<16x16xf32>
    %310 = arith.mulf %309, %308 : vector<16x16xf32>
    %311 = arith.addf %290, %310 : vector<16x16xf32>
    %c23 = arith.constant 23 : index
    %312 = memref.load %arg4[%c23] : memref<98xf32, #tpu.memory_space<smem>>
    %313 = vector.extract_strided_slice %296 {offsets = [3, 0], sizes = [16, 16], strides = [1, 1]} : vector<22x16xf32> to vector<16x16xf32>
    %314 = vector.broadcast %312 : f32 to vector<16x16xf32>
    %315 = arith.mulf %314, %313 : vector<16x16xf32>
    %316 = arith.addf %295, %315 : vector<16x16xf32>
    %c30 = arith.constant 30 : index
    %317 = memref.load %arg4[%c30] : memref<98xf32, #tpu.memory_space<smem>>
    %318 = vector.extract_strided_slice %296 {offsets = [4, 0], sizes = [16, 16], strides = [1, 1]} : vector<22x16xf32> to vector<16x16xf32>
    %319 = vector.broadcast %317 : f32 to vector<16x16xf32>
    %320 = arith.mulf %319, %318 : vector<16x16xf32>
    %321 = arith.addf %301, %320 : vector<16x16xf32>
    %c37 = arith.constant 37 : index
    %322 = memref.load %arg4[%c37] : memref<98xf32, #tpu.memory_space<smem>>
    %323 = vector.extract_strided_slice %296 {offsets = [5, 0], sizes = [16, 16], strides = [1, 1]} : vector<22x16xf32> to vector<16x16xf32>
    %324 = vector.broadcast %322 : f32 to vector<16x16xf32>
    %325 = arith.mulf %324, %323 : vector<16x16xf32>
    %326 = arith.addf %306, %325 : vector<16x16xf32>
    %c44 = arith.constant 44 : index
    %327 = memref.load %arg4[%c44] : memref<98xf32, #tpu.memory_space<smem>>
    %328 = vector.extract_strided_slice %296 {offsets = [6, 0], sizes = [16, 16], strides = [1, 1]} : vector<22x16xf32> to vector<16x16xf32>
    %329 = vector.broadcast %327 : f32 to vector<16x16xf32>
    %330 = arith.mulf %329, %328 : vector<16x16xf32>
    %331 = arith.addf %311, %330 : vector<16x16xf32>
    %332 = vector.extract_strided_slice %223 {offsets = [0, 3], sizes = [22, 16], strides = [1, 1]} : vector<22x22xf32> to vector<22x16xf32>
    %c3_126 = arith.constant 3 : index
    %333 = memref.load %arg4[%c3_126] : memref<98xf32, #tpu.memory_space<smem>>
    %334 = vector.extract_strided_slice %332 {offsets = [0, 0], sizes = [16, 16], strides = [1, 1]} : vector<22x16xf32> to vector<16x16xf32>
    %335 = vector.broadcast %333 : f32 to vector<16x16xf32>
    %336 = arith.mulf %335, %334 : vector<16x16xf32>
    %337 = arith.addf %316, %336 : vector<16x16xf32>
    %c10_127 = arith.constant 10 : index
    %338 = memref.load %arg4[%c10_127] : memref<98xf32, #tpu.memory_space<smem>>
    %339 = vector.extract_strided_slice %332 {offsets = [1, 0], sizes = [16, 16], strides = [1, 1]} : vector<22x16xf32> to vector<16x16xf32>
    %340 = vector.broadcast %338 : f32 to vector<16x16xf32>
    %341 = arith.mulf %340, %339 : vector<16x16xf32>
    %342 = arith.addf %321, %341 : vector<16x16xf32>
    %c17_128 = arith.constant 17 : index
    %343 = memref.load %arg4[%c17_128] : memref<98xf32, #tpu.memory_space<smem>>
    %344 = vector.extract_strided_slice %332 {offsets = [2, 0], sizes = [16, 16], strides = [1, 1]} : vector<22x16xf32> to vector<16x16xf32>
    %345 = vector.broadcast %343 : f32 to vector<16x16xf32>
    %346 = arith.mulf %345, %344 : vector<16x16xf32>
    %347 = arith.addf %326, %346 : vector<16x16xf32>
    %c24 = arith.constant 24 : index
    %348 = memref.load %arg4[%c24] : memref<98xf32, #tpu.memory_space<smem>>
    %349 = vector.extract_strided_slice %332 {offsets = [3, 0], sizes = [16, 16], strides = [1, 1]} : vector<22x16xf32> to vector<16x16xf32>
    %350 = vector.broadcast %348 : f32 to vector<16x16xf32>
    %351 = arith.mulf %350, %349 : vector<16x16xf32>
    %352 = arith.addf %331, %351 : vector<16x16xf32>
    %c31 = arith.constant 31 : index
    %353 = memref.load %arg4[%c31] : memref<98xf32, #tpu.memory_space<smem>>
    %354 = vector.extract_strided_slice %332 {offsets = [4, 0], sizes = [16, 16], strides = [1, 1]} : vector<22x16xf32> to vector<16x16xf32>
    %355 = vector.broadcast %353 : f32 to vector<16x16xf32>
    %356 = arith.mulf %355, %354 : vector<16x16xf32>
    %357 = arith.addf %337, %356 : vector<16x16xf32>
    %c38 = arith.constant 38 : index
    %358 = memref.load %arg4[%c38] : memref<98xf32, #tpu.memory_space<smem>>
    %359 = vector.extract_strided_slice %332 {offsets = [5, 0], sizes = [16, 16], strides = [1, 1]} : vector<22x16xf32> to vector<16x16xf32>
    %360 = vector.broadcast %358 : f32 to vector<16x16xf32>
    %361 = arith.mulf %360, %359 : vector<16x16xf32>
    %362 = arith.addf %342, %361 : vector<16x16xf32>
    %c45 = arith.constant 45 : index
    %363 = memref.load %arg4[%c45] : memref<98xf32, #tpu.memory_space<smem>>
    %364 = vector.extract_strided_slice %332 {offsets = [6, 0], sizes = [16, 16], strides = [1, 1]} : vector<22x16xf32> to vector<16x16xf32>
    %365 = vector.broadcast %363 : f32 to vector<16x16xf32>
    %366 = arith.mulf %365, %364 : vector<16x16xf32>
    %367 = arith.addf %347, %366 : vector<16x16xf32>
    %368 = vector.extract_strided_slice %223 {offsets = [0, 4], sizes = [22, 16], strides = [1, 1]} : vector<22x22xf32> to vector<22x16xf32>
    %c4_129 = arith.constant 4 : index
    %369 = memref.load %arg4[%c4_129] : memref<98xf32, #tpu.memory_space<smem>>
    %370 = vector.extract_strided_slice %368 {offsets = [0, 0], sizes = [16, 16], strides = [1, 1]} : vector<22x16xf32> to vector<16x16xf32>
    %371 = vector.broadcast %369 : f32 to vector<16x16xf32>
    %372 = arith.mulf %371, %370 : vector<16x16xf32>
    %373 = arith.addf %352, %372 : vector<16x16xf32>
    %c11_130 = arith.constant 11 : index
    %374 = memref.load %arg4[%c11_130] : memref<98xf32, #tpu.memory_space<smem>>
    %375 = vector.extract_strided_slice %368 {offsets = [1, 0], sizes = [16, 16], strides = [1, 1]} : vector<22x16xf32> to vector<16x16xf32>
    %376 = vector.broadcast %374 : f32 to vector<16x16xf32>
    %377 = arith.mulf %376, %375 : vector<16x16xf32>
    %378 = arith.addf %357, %377 : vector<16x16xf32>
    %c18_131 = arith.constant 18 : index
    %379 = memref.load %arg4[%c18_131] : memref<98xf32, #tpu.memory_space<smem>>
    %380 = vector.extract_strided_slice %368 {offsets = [2, 0], sizes = [16, 16], strides = [1, 1]} : vector<22x16xf32> to vector<16x16xf32>
    %381 = vector.broadcast %379 : f32 to vector<16x16xf32>
    %382 = arith.mulf %381, %380 : vector<16x16xf32>
    %383 = arith.addf %362, %382 : vector<16x16xf32>
    %c25 = arith.constant 25 : index
    %384 = memref.load %arg4[%c25] : memref<98xf32, #tpu.memory_space<smem>>
    %385 = vector.extract_strided_slice %368 {offsets = [3, 0], sizes = [16, 16], strides = [1, 1]} : vector<22x16xf32> to vector<16x16xf32>
    %386 = vector.broadcast %384 : f32 to vector<16x16xf32>
    %387 = arith.mulf %386, %385 : vector<16x16xf32>
    %388 = arith.addf %367, %387 : vector<16x16xf32>
    %c32 = arith.constant 32 : index
    %389 = memref.load %arg4[%c32] : memref<98xf32, #tpu.memory_space<smem>>
    %390 = vector.extract_strided_slice %368 {offsets = [4, 0], sizes = [16, 16], strides = [1, 1]} : vector<22x16xf32> to vector<16x16xf32>
    %391 = vector.broadcast %389 : f32 to vector<16x16xf32>
    %392 = arith.mulf %391, %390 : vector<16x16xf32>
    %393 = arith.addf %373, %392 : vector<16x16xf32>
    %c39 = arith.constant 39 : index
    %394 = memref.load %arg4[%c39] : memref<98xf32, #tpu.memory_space<smem>>
    %395 = vector.extract_strided_slice %368 {offsets = [5, 0], sizes = [16, 16], strides = [1, 1]} : vector<22x16xf32> to vector<16x16xf32>
    %396 = vector.broadcast %394 : f32 to vector<16x16xf32>
    %397 = arith.mulf %396, %395 : vector<16x16xf32>
    %398 = arith.addf %378, %397 : vector<16x16xf32>
    %c46 = arith.constant 46 : index
    %399 = memref.load %arg4[%c46] : memref<98xf32, #tpu.memory_space<smem>>
    %400 = vector.extract_strided_slice %368 {offsets = [6, 0], sizes = [16, 16], strides = [1, 1]} : vector<22x16xf32> to vector<16x16xf32>
    %401 = vector.broadcast %399 : f32 to vector<16x16xf32>
    %402 = arith.mulf %401, %400 : vector<16x16xf32>
    %403 = arith.addf %383, %402 : vector<16x16xf32>
    %404 = vector.extract_strided_slice %223 {offsets = [0, 5], sizes = [22, 16], strides = [1, 1]} : vector<22x22xf32> to vector<22x16xf32>
    %c5_132 = arith.constant 5 : index
    %405 = memref.load %arg4[%c5_132] : memref<98xf32, #tpu.memory_space<smem>>
    %406 = vector.extract_strided_slice %404 {offsets = [0, 0], sizes = [16, 16], strides = [1, 1]} : vector<22x16xf32> to vector<16x16xf32>
    %407 = vector.broadcast %405 : f32 to vector<16x16xf32>
    %408 = arith.mulf %407, %406 : vector<16x16xf32>
    %409 = arith.addf %388, %408 : vector<16x16xf32>
    %c12_133 = arith.constant 12 : index
    %410 = memref.load %arg4[%c12_133] : memref<98xf32, #tpu.memory_space<smem>>
    %411 = vector.extract_strided_slice %404 {offsets = [1, 0], sizes = [16, 16], strides = [1, 1]} : vector<22x16xf32> to vector<16x16xf32>
    %412 = vector.broadcast %410 : f32 to vector<16x16xf32>
    %413 = arith.mulf %412, %411 : vector<16x16xf32>
    %414 = arith.addf %393, %413 : vector<16x16xf32>
    %c19 = arith.constant 19 : index
    %415 = memref.load %arg4[%c19] : memref<98xf32, #tpu.memory_space<smem>>
    %416 = vector.extract_strided_slice %404 {offsets = [2, 0], sizes = [16, 16], strides = [1, 1]} : vector<22x16xf32> to vector<16x16xf32>
    %417 = vector.broadcast %415 : f32 to vector<16x16xf32>
    %418 = arith.mulf %417, %416 : vector<16x16xf32>
    %419 = arith.addf %398, %418 : vector<16x16xf32>
    %c26 = arith.constant 26 : index
    %420 = memref.load %arg4[%c26] : memref<98xf32, #tpu.memory_space<smem>>
    %421 = vector.extract_strided_slice %404 {offsets = [3, 0], sizes = [16, 16], strides = [1, 1]} : vector<22x16xf32> to vector<16x16xf32>
    %422 = vector.broadcast %420 : f32 to vector<16x16xf32>
    %423 = arith.mulf %422, %421 : vector<16x16xf32>
    %424 = arith.addf %403, %423 : vector<16x16xf32>
    %c33 = arith.constant 33 : index
    %425 = memref.load %arg4[%c33] : memref<98xf32, #tpu.memory_space<smem>>
    %426 = vector.extract_strided_slice %404 {offsets = [4, 0], sizes = [16, 16], strides = [1, 1]} : vector<22x16xf32> to vector<16x16xf32>
    %427 = vector.broadcast %425 : f32 to vector<16x16xf32>
    %428 = arith.mulf %427, %426 : vector<16x16xf32>
    %429 = arith.addf %409, %428 : vector<16x16xf32>
    %c40 = arith.constant 40 : index
    %430 = memref.load %arg4[%c40] : memref<98xf32, #tpu.memory_space<smem>>
    %431 = vector.extract_strided_slice %404 {offsets = [5, 0], sizes = [16, 16], strides = [1, 1]} : vector<22x16xf32> to vector<16x16xf32>
    %432 = vector.broadcast %430 : f32 to vector<16x16xf32>
    %433 = arith.mulf %432, %431 : vector<16x16xf32>
    %434 = arith.addf %414, %433 : vector<16x16xf32>
    %c47 = arith.constant 47 : index
    %435 = memref.load %arg4[%c47] : memref<98xf32, #tpu.memory_space<smem>>
    %436 = vector.extract_strided_slice %404 {offsets = [6, 0], sizes = [16, 16], strides = [1, 1]} : vector<22x16xf32> to vector<16x16xf32>
    %437 = vector.broadcast %435 : f32 to vector<16x16xf32>
    %438 = arith.mulf %437, %436 : vector<16x16xf32>
    %439 = arith.addf %419, %438 : vector<16x16xf32>
    %440 = vector.extract_strided_slice %223 {offsets = [0, 6], sizes = [22, 16], strides = [1, 1]} : vector<22x22xf32> to vector<22x16xf32>
    %c6_134 = arith.constant 6 : index
    %441 = memref.load %arg4[%c6_134] : memref<98xf32, #tpu.memory_space<smem>>
    %442 = vector.extract_strided_slice %440 {offsets = [0, 0], sizes = [16, 16], strides = [1, 1]} : vector<22x16xf32> to vector<16x16xf32>
    %443 = vector.broadcast %441 : f32 to vector<16x16xf32>
    %444 = arith.mulf %443, %442 : vector<16x16xf32>
    %445 = arith.addf %424, %444 : vector<16x16xf32>
    %c13_135 = arith.constant 13 : index
    %446 = memref.load %arg4[%c13_135] : memref<98xf32, #tpu.memory_space<smem>>
    %447 = vector.extract_strided_slice %440 {offsets = [1, 0], sizes = [16, 16], strides = [1, 1]} : vector<22x16xf32> to vector<16x16xf32>
    %448 = vector.broadcast %446 : f32 to vector<16x16xf32>
    %449 = arith.mulf %448, %447 : vector<16x16xf32>
    %450 = arith.addf %429, %449 : vector<16x16xf32>
    %c20 = arith.constant 20 : index
    %451 = memref.load %arg4[%c20] : memref<98xf32, #tpu.memory_space<smem>>
    %452 = vector.extract_strided_slice %440 {offsets = [2, 0], sizes = [16, 16], strides = [1, 1]} : vector<22x16xf32> to vector<16x16xf32>
    %453 = vector.broadcast %451 : f32 to vector<16x16xf32>
    %454 = arith.mulf %453, %452 : vector<16x16xf32>
    %455 = arith.addf %434, %454 : vector<16x16xf32>
    %c27 = arith.constant 27 : index
    %456 = memref.load %arg4[%c27] : memref<98xf32, #tpu.memory_space<smem>>
    %457 = vector.extract_strided_slice %440 {offsets = [3, 0], sizes = [16, 16], strides = [1, 1]} : vector<22x16xf32> to vector<16x16xf32>
    %458 = vector.broadcast %456 : f32 to vector<16x16xf32>
    %459 = arith.mulf %458, %457 : vector<16x16xf32>
    %460 = arith.addf %439, %459 : vector<16x16xf32>
    %c34 = arith.constant 34 : index
    %461 = memref.load %arg4[%c34] : memref<98xf32, #tpu.memory_space<smem>>
    %462 = vector.extract_strided_slice %440 {offsets = [4, 0], sizes = [16, 16], strides = [1, 1]} : vector<22x16xf32> to vector<16x16xf32>
    %463 = vector.broadcast %461 : f32 to vector<16x16xf32>
    %464 = arith.mulf %463, %462 : vector<16x16xf32>
    %465 = arith.addf %445, %464 : vector<16x16xf32>
    %c41 = arith.constant 41 : index
    %466 = memref.load %arg4[%c41] : memref<98xf32, #tpu.memory_space<smem>>
    %467 = vector.extract_strided_slice %440 {offsets = [5, 0], sizes = [16, 16], strides = [1, 1]} : vector<22x16xf32> to vector<16x16xf32>
    %468 = vector.broadcast %466 : f32 to vector<16x16xf32>
    %469 = arith.mulf %468, %467 : vector<16x16xf32>
    %470 = arith.addf %450, %469 : vector<16x16xf32>
    %c48 = arith.constant 48 : index
    %471 = memref.load %arg4[%c48] : memref<98xf32, #tpu.memory_space<smem>>
    %472 = vector.extract_strided_slice %440 {offsets = [6, 0], sizes = [16, 16], strides = [1, 1]} : vector<22x16xf32> to vector<16x16xf32>
    %473 = vector.broadcast %471 : f32 to vector<16x16xf32>
    %474 = arith.mulf %473, %472 : vector<16x16xf32>
    %475 = arith.addf %455, %474 : vector<16x16xf32>
    %c1_136 = arith.constant 1 : index
    %c0_137 = arith.constant 0 : index
    %c0_138 = arith.constant 0 : index
    %476 = vector.load %arg6[%c1_136, %c0_137, %c0_138] : memref<2x22x22xf32, #tpu.memory_space<vmem>>, vector<1x22x22xf32>
    %477 = vector.shape_cast %476 : vector<1x22x22xf32> to vector<22x22xf32>
    %478 = vector.extract_strided_slice %477 {offsets = [0, 0], sizes = [22, 16], strides = [1, 1]} : vector<22x22xf32> to vector<22x16xf32>
    %c49 = arith.constant 49 : index
    %479 = memref.load %arg4[%c49] : memref<98xf32, #tpu.memory_space<smem>>
    %480 = vector.extract_strided_slice %478 {offsets = [0, 0], sizes = [16, 16], strides = [1, 1]} : vector<22x16xf32> to vector<16x16xf32>
    %481 = vector.broadcast %479 : f32 to vector<16x16xf32>
    %482 = arith.mulf %481, %480 : vector<16x16xf32>
    %483 = arith.addf %460, %482 : vector<16x16xf32>
    %c56 = arith.constant 56 : index
    %484 = memref.load %arg4[%c56] : memref<98xf32, #tpu.memory_space<smem>>
    %485 = vector.extract_strided_slice %478 {offsets = [1, 0], sizes = [16, 16], strides = [1, 1]} : vector<22x16xf32> to vector<16x16xf32>
    %486 = vector.broadcast %484 : f32 to vector<16x16xf32>
    %487 = arith.mulf %486, %485 : vector<16x16xf32>
    %488 = arith.addf %465, %487 : vector<16x16xf32>
    %c63 = arith.constant 63 : index
    %489 = memref.load %arg4[%c63] : memref<98xf32, #tpu.memory_space<smem>>
    %490 = vector.extract_strided_slice %478 {offsets = [2, 0], sizes = [16, 16], strides = [1, 1]} : vector<22x16xf32> to vector<16x16xf32>
    %491 = vector.broadcast %489 : f32 to vector<16x16xf32>
    %492 = arith.mulf %491, %490 : vector<16x16xf32>
    %493 = arith.addf %470, %492 : vector<16x16xf32>
    %c70 = arith.constant 70 : index
    %494 = memref.load %arg4[%c70] : memref<98xf32, #tpu.memory_space<smem>>
    %495 = vector.extract_strided_slice %478 {offsets = [3, 0], sizes = [16, 16], strides = [1, 1]} : vector<22x16xf32> to vector<16x16xf32>
    %496 = vector.broadcast %494 : f32 to vector<16x16xf32>
    %497 = arith.mulf %496, %495 : vector<16x16xf32>
    %498 = arith.addf %475, %497 : vector<16x16xf32>
    %c77 = arith.constant 77 : index
    %499 = memref.load %arg4[%c77] : memref<98xf32, #tpu.memory_space<smem>>
    %500 = vector.extract_strided_slice %478 {offsets = [4, 0], sizes = [16, 16], strides = [1, 1]} : vector<22x16xf32> to vector<16x16xf32>
    %501 = vector.broadcast %499 : f32 to vector<16x16xf32>
    %502 = arith.mulf %501, %500 : vector<16x16xf32>
    %503 = arith.addf %483, %502 : vector<16x16xf32>
    %c84 = arith.constant 84 : index
    %504 = memref.load %arg4[%c84] : memref<98xf32, #tpu.memory_space<smem>>
    %505 = vector.extract_strided_slice %478 {offsets = [5, 0], sizes = [16, 16], strides = [1, 1]} : vector<22x16xf32> to vector<16x16xf32>
    %506 = vector.broadcast %504 : f32 to vector<16x16xf32>
    %507 = arith.mulf %506, %505 : vector<16x16xf32>
    %508 = arith.addf %488, %507 : vector<16x16xf32>
    %c91 = arith.constant 91 : index
    %509 = memref.load %arg4[%c91] : memref<98xf32, #tpu.memory_space<smem>>
    %510 = vector.extract_strided_slice %478 {offsets = [6, 0], sizes = [16, 16], strides = [1, 1]} : vector<22x16xf32> to vector<16x16xf32>
    %511 = vector.broadcast %509 : f32 to vector<16x16xf32>
    %512 = arith.mulf %511, %510 : vector<16x16xf32>
    %513 = arith.addf %493, %512 : vector<16x16xf32>
    %514 = vector.extract_strided_slice %477 {offsets = [0, 1], sizes = [22, 16], strides = [1, 1]} : vector<22x22xf32> to vector<22x16xf32>
    %c50 = arith.constant 50 : index
    %515 = memref.load %arg4[%c50] : memref<98xf32, #tpu.memory_space<smem>>
    %516 = vector.extract_strided_slice %514 {offsets = [0, 0], sizes = [16, 16], strides = [1, 1]} : vector<22x16xf32> to vector<16x16xf32>
    %517 = vector.broadcast %515 : f32 to vector<16x16xf32>
    %518 = arith.mulf %517, %516 : vector<16x16xf32>
    %519 = arith.addf %498, %518 : vector<16x16xf32>
    %c57 = arith.constant 57 : index
    %520 = memref.load %arg4[%c57] : memref<98xf32, #tpu.memory_space<smem>>
    %521 = vector.extract_strided_slice %514 {offsets = [1, 0], sizes = [16, 16], strides = [1, 1]} : vector<22x16xf32> to vector<16x16xf32>
    %522 = vector.broadcast %520 : f32 to vector<16x16xf32>
    %523 = arith.mulf %522, %521 : vector<16x16xf32>
    %524 = arith.addf %503, %523 : vector<16x16xf32>
    %c64 = arith.constant 64 : index
    %525 = memref.load %arg4[%c64] : memref<98xf32, #tpu.memory_space<smem>>
    %526 = vector.extract_strided_slice %514 {offsets = [2, 0], sizes = [16, 16], strides = [1, 1]} : vector<22x16xf32> to vector<16x16xf32>
    %527 = vector.broadcast %525 : f32 to vector<16x16xf32>
    %528 = arith.mulf %527, %526 : vector<16x16xf32>
    %529 = arith.addf %508, %528 : vector<16x16xf32>
    %c71 = arith.constant 71 : index
    %530 = memref.load %arg4[%c71] : memref<98xf32, #tpu.memory_space<smem>>
    %531 = vector.extract_strided_slice %514 {offsets = [3, 0], sizes = [16, 16], strides = [1, 1]} : vector<22x16xf32> to vector<16x16xf32>
    %532 = vector.broadcast %530 : f32 to vector<16x16xf32>
    %533 = arith.mulf %532, %531 : vector<16x16xf32>
    %534 = arith.addf %513, %533 : vector<16x16xf32>
    %c78 = arith.constant 78 : index
    %535 = memref.load %arg4[%c78] : memref<98xf32, #tpu.memory_space<smem>>
    %536 = vector.extract_strided_slice %514 {offsets = [4, 0], sizes = [16, 16], strides = [1, 1]} : vector<22x16xf32> to vector<16x16xf32>
    %537 = vector.broadcast %535 : f32 to vector<16x16xf32>
    %538 = arith.mulf %537, %536 : vector<16x16xf32>
    %539 = arith.addf %519, %538 : vector<16x16xf32>
    %c85 = arith.constant 85 : index
    %540 = memref.load %arg4[%c85] : memref<98xf32, #tpu.memory_space<smem>>
    %541 = vector.extract_strided_slice %514 {offsets = [5, 0], sizes = [16, 16], strides = [1, 1]} : vector<22x16xf32> to vector<16x16xf32>
    %542 = vector.broadcast %540 : f32 to vector<16x16xf32>
    %543 = arith.mulf %542, %541 : vector<16x16xf32>
    %544 = arith.addf %524, %543 : vector<16x16xf32>
    %c92 = arith.constant 92 : index
    %545 = memref.load %arg4[%c92] : memref<98xf32, #tpu.memory_space<smem>>
    %546 = vector.extract_strided_slice %514 {offsets = [6, 0], sizes = [16, 16], strides = [1, 1]} : vector<22x16xf32> to vector<16x16xf32>
    %547 = vector.broadcast %545 : f32 to vector<16x16xf32>
    %548 = arith.mulf %547, %546 : vector<16x16xf32>
    %549 = arith.addf %529, %548 : vector<16x16xf32>
    %550 = vector.extract_strided_slice %477 {offsets = [0, 2], sizes = [22, 16], strides = [1, 1]} : vector<22x22xf32> to vector<22x16xf32>
    %c51 = arith.constant 51 : index
    %551 = memref.load %arg4[%c51] : memref<98xf32, #tpu.memory_space<smem>>
    %552 = vector.extract_strided_slice %550 {offsets = [0, 0], sizes = [16, 16], strides = [1, 1]} : vector<22x16xf32> to vector<16x16xf32>
    %553 = vector.broadcast %551 : f32 to vector<16x16xf32>
    %554 = arith.mulf %553, %552 : vector<16x16xf32>
    %555 = arith.addf %534, %554 : vector<16x16xf32>
    %c58 = arith.constant 58 : index
    %556 = memref.load %arg4[%c58] : memref<98xf32, #tpu.memory_space<smem>>
    %557 = vector.extract_strided_slice %550 {offsets = [1, 0], sizes = [16, 16], strides = [1, 1]} : vector<22x16xf32> to vector<16x16xf32>
    %558 = vector.broadcast %556 : f32 to vector<16x16xf32>
    %559 = arith.mulf %558, %557 : vector<16x16xf32>
    %560 = arith.addf %539, %559 : vector<16x16xf32>
    %c65 = arith.constant 65 : index
    %561 = memref.load %arg4[%c65] : memref<98xf32, #tpu.memory_space<smem>>
    %562 = vector.extract_strided_slice %550 {offsets = [2, 0], sizes = [16, 16], strides = [1, 1]} : vector<22x16xf32> to vector<16x16xf32>
    %563 = vector.broadcast %561 : f32 to vector<16x16xf32>
    %564 = arith.mulf %563, %562 : vector<16x16xf32>
    %565 = arith.addf %544, %564 : vector<16x16xf32>
    %c72 = arith.constant 72 : index
    %566 = memref.load %arg4[%c72] : memref<98xf32, #tpu.memory_space<smem>>
    %567 = vector.extract_strided_slice %550 {offsets = [3, 0], sizes = [16, 16], strides = [1, 1]} : vector<22x16xf32> to vector<16x16xf32>
    %568 = vector.broadcast %566 : f32 to vector<16x16xf32>
    %569 = arith.mulf %568, %567 : vector<16x16xf32>
    %570 = arith.addf %549, %569 : vector<16x16xf32>
    %c79 = arith.constant 79 : index
    %571 = memref.load %arg4[%c79] : memref<98xf32, #tpu.memory_space<smem>>
    %572 = vector.extract_strided_slice %550 {offsets = [4, 0], sizes = [16, 16], strides = [1, 1]} : vector<22x16xf32> to vector<16x16xf32>
    %573 = vector.broadcast %571 : f32 to vector<16x16xf32>
    %574 = arith.mulf %573, %572 : vector<16x16xf32>
    %575 = arith.addf %555, %574 : vector<16x16xf32>
    %c86 = arith.constant 86 : index
    %576 = memref.load %arg4[%c86] : memref<98xf32, #tpu.memory_space<smem>>
    %577 = vector.extract_strided_slice %550 {offsets = [5, 0], sizes = [16, 16], strides = [1, 1]} : vector<22x16xf32> to vector<16x16xf32>
    %578 = vector.broadcast %576 : f32 to vector<16x16xf32>
    %579 = arith.mulf %578, %577 : vector<16x16xf32>
    %580 = arith.addf %560, %579 : vector<16x16xf32>
    %c93 = arith.constant 93 : index
    %581 = memref.load %arg4[%c93] : memref<98xf32, #tpu.memory_space<smem>>
    %582 = vector.extract_strided_slice %550 {offsets = [6, 0], sizes = [16, 16], strides = [1, 1]} : vector<22x16xf32> to vector<16x16xf32>
    %583 = vector.broadcast %581 : f32 to vector<16x16xf32>
    %584 = arith.mulf %583, %582 : vector<16x16xf32>
    %585 = arith.addf %565, %584 : vector<16x16xf32>
    %586 = vector.extract_strided_slice %477 {offsets = [0, 3], sizes = [22, 16], strides = [1, 1]} : vector<22x22xf32> to vector<22x16xf32>
    %c52 = arith.constant 52 : index
    %587 = memref.load %arg4[%c52] : memref<98xf32, #tpu.memory_space<smem>>
    %588 = vector.extract_strided_slice %586 {offsets = [0, 0], sizes = [16, 16], strides = [1, 1]} : vector<22x16xf32> to vector<16x16xf32>
    %589 = vector.broadcast %587 : f32 to vector<16x16xf32>
    %590 = arith.mulf %589, %588 : vector<16x16xf32>
    %591 = arith.addf %570, %590 : vector<16x16xf32>
    %c59 = arith.constant 59 : index
    %592 = memref.load %arg4[%c59] : memref<98xf32, #tpu.memory_space<smem>>
    %593 = vector.extract_strided_slice %586 {offsets = [1, 0], sizes = [16, 16], strides = [1, 1]} : vector<22x16xf32> to vector<16x16xf32>
    %594 = vector.broadcast %592 : f32 to vector<16x16xf32>
    %595 = arith.mulf %594, %593 : vector<16x16xf32>
    %596 = arith.addf %575, %595 : vector<16x16xf32>
    %c66 = arith.constant 66 : index
    %597 = memref.load %arg4[%c66] : memref<98xf32, #tpu.memory_space<smem>>
    %598 = vector.extract_strided_slice %586 {offsets = [2, 0], sizes = [16, 16], strides = [1, 1]} : vector<22x16xf32> to vector<16x16xf32>
    %599 = vector.broadcast %597 : f32 to vector<16x16xf32>
    %600 = arith.mulf %599, %598 : vector<16x16xf32>
    %601 = arith.addf %580, %600 : vector<16x16xf32>
    %c73 = arith.constant 73 : index
    %602 = memref.load %arg4[%c73] : memref<98xf32, #tpu.memory_space<smem>>
    %603 = vector.extract_strided_slice %586 {offsets = [3, 0], sizes = [16, 16], strides = [1, 1]} : vector<22x16xf32> to vector<16x16xf32>
    %604 = vector.broadcast %602 : f32 to vector<16x16xf32>
    %605 = arith.mulf %604, %603 : vector<16x16xf32>
    %606 = arith.addf %585, %605 : vector<16x16xf32>
    %c80 = arith.constant 80 : index
    %607 = memref.load %arg4[%c80] : memref<98xf32, #tpu.memory_space<smem>>
    %608 = vector.extract_strided_slice %586 {offsets = [4, 0], sizes = [16, 16], strides = [1, 1]} : vector<22x16xf32> to vector<16x16xf32>
    %609 = vector.broadcast %607 : f32 to vector<16x16xf32>
    %610 = arith.mulf %609, %608 : vector<16x16xf32>
    %611 = arith.addf %591, %610 : vector<16x16xf32>
    %c87 = arith.constant 87 : index
    %612 = memref.load %arg4[%c87] : memref<98xf32, #tpu.memory_space<smem>>
    %613 = vector.extract_strided_slice %586 {offsets = [5, 0], sizes = [16, 16], strides = [1, 1]} : vector<22x16xf32> to vector<16x16xf32>
    %614 = vector.broadcast %612 : f32 to vector<16x16xf32>
    %615 = arith.mulf %614, %613 : vector<16x16xf32>
    %616 = arith.addf %596, %615 : vector<16x16xf32>
    %c94 = arith.constant 94 : index
    %617 = memref.load %arg4[%c94] : memref<98xf32, #tpu.memory_space<smem>>
    %618 = vector.extract_strided_slice %586 {offsets = [6, 0], sizes = [16, 16], strides = [1, 1]} : vector<22x16xf32> to vector<16x16xf32>
    %619 = vector.broadcast %617 : f32 to vector<16x16xf32>
    %620 = arith.mulf %619, %618 : vector<16x16xf32>
    %621 = arith.addf %601, %620 : vector<16x16xf32>
    %622 = vector.extract_strided_slice %477 {offsets = [0, 4], sizes = [22, 16], strides = [1, 1]} : vector<22x22xf32> to vector<22x16xf32>
    %c53 = arith.constant 53 : index
    %623 = memref.load %arg4[%c53] : memref<98xf32, #tpu.memory_space<smem>>
    %624 = vector.extract_strided_slice %622 {offsets = [0, 0], sizes = [16, 16], strides = [1, 1]} : vector<22x16xf32> to vector<16x16xf32>
    %625 = vector.broadcast %623 : f32 to vector<16x16xf32>
    %626 = arith.mulf %625, %624 : vector<16x16xf32>
    %627 = arith.addf %606, %626 : vector<16x16xf32>
    %c60 = arith.constant 60 : index
    %628 = memref.load %arg4[%c60] : memref<98xf32, #tpu.memory_space<smem>>
    %629 = vector.extract_strided_slice %622 {offsets = [1, 0], sizes = [16, 16], strides = [1, 1]} : vector<22x16xf32> to vector<16x16xf32>
    %630 = vector.broadcast %628 : f32 to vector<16x16xf32>
    %631 = arith.mulf %630, %629 : vector<16x16xf32>
    %632 = arith.addf %611, %631 : vector<16x16xf32>
    %c67 = arith.constant 67 : index
    %633 = memref.load %arg4[%c67] : memref<98xf32, #tpu.memory_space<smem>>
    %634 = vector.extract_strided_slice %622 {offsets = [2, 0], sizes = [16, 16], strides = [1, 1]} : vector<22x16xf32> to vector<16x16xf32>
    %635 = vector.broadcast %633 : f32 to vector<16x16xf32>
    %636 = arith.mulf %635, %634 : vector<16x16xf32>
    %637 = arith.addf %616, %636 : vector<16x16xf32>
    %c74 = arith.constant 74 : index
    %638 = memref.load %arg4[%c74] : memref<98xf32, #tpu.memory_space<smem>>
    %639 = vector.extract_strided_slice %622 {offsets = [3, 0], sizes = [16, 16], strides = [1, 1]} : vector<22x16xf32> to vector<16x16xf32>
    %640 = vector.broadcast %638 : f32 to vector<16x16xf32>
    %641 = arith.mulf %640, %639 : vector<16x16xf32>
    %642 = arith.addf %621, %641 : vector<16x16xf32>
    %c81 = arith.constant 81 : index
    %643 = memref.load %arg4[%c81] : memref<98xf32, #tpu.memory_space<smem>>
    %644 = vector.extract_strided_slice %622 {offsets = [4, 0], sizes = [16, 16], strides = [1, 1]} : vector<22x16xf32> to vector<16x16xf32>
    %645 = vector.broadcast %643 : f32 to vector<16x16xf32>
    %646 = arith.mulf %645, %644 : vector<16x16xf32>
    %647 = arith.addf %627, %646 : vector<16x16xf32>
    %c88 = arith.constant 88 : index
    %648 = memref.load %arg4[%c88] : memref<98xf32, #tpu.memory_space<smem>>
    %649 = vector.extract_strided_slice %622 {offsets = [5, 0], sizes = [16, 16], strides = [1, 1]} : vector<22x16xf32> to vector<16x16xf32>
    %650 = vector.broadcast %648 : f32 to vector<16x16xf32>
    %651 = arith.mulf %650, %649 : vector<16x16xf32>
    %652 = arith.addf %632, %651 : vector<16x16xf32>
    %c95 = arith.constant 95 : index
    %653 = memref.load %arg4[%c95] : memref<98xf32, #tpu.memory_space<smem>>
    %654 = vector.extract_strided_slice %622 {offsets = [6, 0], sizes = [16, 16], strides = [1, 1]} : vector<22x16xf32> to vector<16x16xf32>
    %655 = vector.broadcast %653 : f32 to vector<16x16xf32>
    %656 = arith.mulf %655, %654 : vector<16x16xf32>
    %657 = arith.addf %637, %656 : vector<16x16xf32>
    %658 = vector.extract_strided_slice %477 {offsets = [0, 5], sizes = [22, 16], strides = [1, 1]} : vector<22x22xf32> to vector<22x16xf32>
    %c54 = arith.constant 54 : index
    %659 = memref.load %arg4[%c54] : memref<98xf32, #tpu.memory_space<smem>>
    %660 = vector.extract_strided_slice %658 {offsets = [0, 0], sizes = [16, 16], strides = [1, 1]} : vector<22x16xf32> to vector<16x16xf32>
    %661 = vector.broadcast %659 : f32 to vector<16x16xf32>
    %662 = arith.mulf %661, %660 : vector<16x16xf32>
    %663 = arith.addf %642, %662 : vector<16x16xf32>
    %c61 = arith.constant 61 : index
    %664 = memref.load %arg4[%c61] : memref<98xf32, #tpu.memory_space<smem>>
    %665 = vector.extract_strided_slice %658 {offsets = [1, 0], sizes = [16, 16], strides = [1, 1]} : vector<22x16xf32> to vector<16x16xf32>
    %666 = vector.broadcast %664 : f32 to vector<16x16xf32>
    %667 = arith.mulf %666, %665 : vector<16x16xf32>
    %668 = arith.addf %647, %667 : vector<16x16xf32>
    %c68 = arith.constant 68 : index
    %669 = memref.load %arg4[%c68] : memref<98xf32, #tpu.memory_space<smem>>
    %670 = vector.extract_strided_slice %658 {offsets = [2, 0], sizes = [16, 16], strides = [1, 1]} : vector<22x16xf32> to vector<16x16xf32>
    %671 = vector.broadcast %669 : f32 to vector<16x16xf32>
    %672 = arith.mulf %671, %670 : vector<16x16xf32>
    %673 = arith.addf %652, %672 : vector<16x16xf32>
    %c75 = arith.constant 75 : index
    %674 = memref.load %arg4[%c75] : memref<98xf32, #tpu.memory_space<smem>>
    %675 = vector.extract_strided_slice %658 {offsets = [3, 0], sizes = [16, 16], strides = [1, 1]} : vector<22x16xf32> to vector<16x16xf32>
    %676 = vector.broadcast %674 : f32 to vector<16x16xf32>
    %677 = arith.mulf %676, %675 : vector<16x16xf32>
    %678 = arith.addf %657, %677 : vector<16x16xf32>
    %c82 = arith.constant 82 : index
    %679 = memref.load %arg4[%c82] : memref<98xf32, #tpu.memory_space<smem>>
    %680 = vector.extract_strided_slice %658 {offsets = [4, 0], sizes = [16, 16], strides = [1, 1]} : vector<22x16xf32> to vector<16x16xf32>
    %681 = vector.broadcast %679 : f32 to vector<16x16xf32>
    %682 = arith.mulf %681, %680 : vector<16x16xf32>
    %683 = arith.addf %663, %682 : vector<16x16xf32>
    %c89 = arith.constant 89 : index
    %684 = memref.load %arg4[%c89] : memref<98xf32, #tpu.memory_space<smem>>
    %685 = vector.extract_strided_slice %658 {offsets = [5, 0], sizes = [16, 16], strides = [1, 1]} : vector<22x16xf32> to vector<16x16xf32>
    %686 = vector.broadcast %684 : f32 to vector<16x16xf32>
    %687 = arith.mulf %686, %685 : vector<16x16xf32>
    %688 = arith.addf %668, %687 : vector<16x16xf32>
    %c96 = arith.constant 96 : index
    %689 = memref.load %arg4[%c96] : memref<98xf32, #tpu.memory_space<smem>>
    %690 = vector.extract_strided_slice %658 {offsets = [6, 0], sizes = [16, 16], strides = [1, 1]} : vector<22x16xf32> to vector<16x16xf32>
    %691 = vector.broadcast %689 : f32 to vector<16x16xf32>
    %692 = arith.mulf %691, %690 : vector<16x16xf32>
    %693 = arith.addf %673, %692 : vector<16x16xf32>
    %694 = vector.extract_strided_slice %477 {offsets = [0, 6], sizes = [22, 16], strides = [1, 1]} : vector<22x22xf32> to vector<22x16xf32>
    %c55 = arith.constant 55 : index
    %695 = memref.load %arg4[%c55] : memref<98xf32, #tpu.memory_space<smem>>
    %696 = vector.extract_strided_slice %694 {offsets = [0, 0], sizes = [16, 16], strides = [1, 1]} : vector<22x16xf32> to vector<16x16xf32>
    %697 = vector.broadcast %695 : f32 to vector<16x16xf32>
    %698 = arith.mulf %697, %696 : vector<16x16xf32>
    %699 = arith.addf %678, %698 : vector<16x16xf32>
    %c62 = arith.constant 62 : index
    %700 = memref.load %arg4[%c62] : memref<98xf32, #tpu.memory_space<smem>>
    %701 = vector.extract_strided_slice %694 {offsets = [1, 0], sizes = [16, 16], strides = [1, 1]} : vector<22x16xf32> to vector<16x16xf32>
    %702 = vector.broadcast %700 : f32 to vector<16x16xf32>
    %703 = arith.mulf %702, %701 : vector<16x16xf32>
    %704 = arith.addf %683, %703 : vector<16x16xf32>
    %c69 = arith.constant 69 : index
    %705 = memref.load %arg4[%c69] : memref<98xf32, #tpu.memory_space<smem>>
    %706 = vector.extract_strided_slice %694 {offsets = [2, 0], sizes = [16, 16], strides = [1, 1]} : vector<22x16xf32> to vector<16x16xf32>
    %707 = vector.broadcast %705 : f32 to vector<16x16xf32>
    %708 = arith.mulf %707, %706 : vector<16x16xf32>
    %709 = arith.addf %688, %708 : vector<16x16xf32>
    %c76 = arith.constant 76 : index
    %710 = memref.load %arg4[%c76] : memref<98xf32, #tpu.memory_space<smem>>
    %711 = vector.extract_strided_slice %694 {offsets = [3, 0], sizes = [16, 16], strides = [1, 1]} : vector<22x16xf32> to vector<16x16xf32>
    %712 = vector.broadcast %710 : f32 to vector<16x16xf32>
    %713 = arith.mulf %712, %711 : vector<16x16xf32>
    %714 = arith.addf %693, %713 : vector<16x16xf32>
    %c83 = arith.constant 83 : index
    %715 = memref.load %arg4[%c83] : memref<98xf32, #tpu.memory_space<smem>>
    %716 = vector.extract_strided_slice %694 {offsets = [4, 0], sizes = [16, 16], strides = [1, 1]} : vector<22x16xf32> to vector<16x16xf32>
    %717 = vector.broadcast %715 : f32 to vector<16x16xf32>
    %718 = arith.mulf %717, %716 : vector<16x16xf32>
    %719 = arith.addf %699, %718 : vector<16x16xf32>
    %c90 = arith.constant 90 : index
    %720 = memref.load %arg4[%c90] : memref<98xf32, #tpu.memory_space<smem>>
    %721 = vector.extract_strided_slice %694 {offsets = [5, 0], sizes = [16, 16], strides = [1, 1]} : vector<22x16xf32> to vector<16x16xf32>
    %722 = vector.broadcast %720 : f32 to vector<16x16xf32>
    %723 = arith.mulf %722, %721 : vector<16x16xf32>
    %724 = arith.addf %704, %723 : vector<16x16xf32>
    %c97 = arith.constant 97 : index
    %725 = memref.load %arg4[%c97] : memref<98xf32, #tpu.memory_space<smem>>
    %726 = vector.extract_strided_slice %694 {offsets = [6, 0], sizes = [16, 16], strides = [1, 1]} : vector<22x16xf32> to vector<16x16xf32>
    %727 = vector.broadcast %725 : f32 to vector<16x16xf32>
    %728 = arith.mulf %727, %726 : vector<16x16xf32>
    %729 = arith.addf %709, %728 : vector<16x16xf32>
    %730 = arith.addf %724, %729 : vector<16x16xf32>
    %731 = arith.addf %714, %719 : vector<16x16xf32>
    %732 = arith.addf %730, %731 : vector<16x16xf32>
    %733 = arith.negf %732 : vector<16x16xf32>
    %734 = math.exp %733 : vector<16x16xf32>
    %cst_139 = arith.constant 1.000000e+00 : f32
    %735 = vector.broadcast %cst_139 : f32 to vector<16x16xf32>
    %736 = arith.addf %735, %734 : vector<16x16xf32>
    %737 = arith.divf %735, %736 : vector<16x16xf32>
    %738 = vector.extract_strided_slice %737 {offsets = [0, 0], sizes = [1, 16], strides = [1, 1]} : vector<16x16xf32> to vector<1x16xf32>
    %739 = vector.shape_cast %738 : vector<1x16xf32> to vector<16xf32>
    %c0_140 = arith.constant 0 : index
    %c0_141 = arith.constant 0 : index
    %740 = vector.load %arg7[%c0_140, %c0_141] : memref<1x256xf32, #tpu.memory_space<vmem>>, vector<1x16xf32>
    %741 = vector.shape_cast %740 : vector<1x16xf32> to vector<16xf32>
    %742 = vector.shape_cast %739 : vector<16xf32> to vector<1x16xf32>
    tpu.vector_store %arg7[%c0_140, %c0_141], %742 {strides = array<i32>} : memref<1x256xf32, #tpu.memory_space<vmem>>, vector<1x16xf32>,
    %743 = vector.extract_strided_slice %737 {offsets = [1, 0], sizes = [1, 16], strides = [1, 1]} : vector<16x16xf32> to vector<1x16xf32>
    %744 = vector.shape_cast %743 : vector<1x16xf32> to vector<16xf32>
    %c0_142 = arith.constant 0 : index
    %c16_143 = arith.constant 16 : index
    %745 = vector.load %arg7[%c0_142, %c16_143] : memref<1x256xf32, #tpu.memory_space<vmem>>, vector<1x16xf32>
    %746 = vector.shape_cast %745 : vector<1x16xf32> to vector<16xf32>
    %747 = vector.shape_cast %744 : vector<16xf32> to vector<1x16xf32>
    tpu.vector_store %arg7[%c0_142, %c16_143], %747 {strides = array<i32>} : memref<1x256xf32, #tpu.memory_space<vmem>>, vector<1x16xf32>,
    %748 = vector.extract_strided_slice %737 {offsets = [2, 0], sizes = [1, 16], strides = [1, 1]} : vector<16x16xf32> to vector<1x16xf32>
    %749 = vector.shape_cast %748 : vector<1x16xf32> to vector<16xf32>
    %c0_144 = arith.constant 0 : index
    %c32_145 = arith.constant 32 : index
    %750 = vector.load %arg7[%c0_144, %c32_145] : memref<1x256xf32, #tpu.memory_space<vmem>>, vector<1x16xf32>
    %751 = vector.shape_cast %750 : vector<1x16xf32> to vector<16xf32>
    %752 = vector.shape_cast %749 : vector<16xf32> to vector<1x16xf32>
    tpu.vector_store %arg7[%c0_144, %c32_145], %752 {strides = array<i32>} : memref<1x256xf32, #tpu.memory_space<vmem>>, vector<1x16xf32>,
    %753 = vector.extract_strided_slice %737 {offsets = [3, 0], sizes = [1, 16], strides = [1, 1]} : vector<16x16xf32> to vector<1x16xf32>
    %754 = vector.shape_cast %753 : vector<1x16xf32> to vector<16xf32>
    %c0_146 = arith.constant 0 : index
    %c48_147 = arith.constant 48 : index
    %755 = vector.load %arg7[%c0_146, %c48_147] : memref<1x256xf32, #tpu.memory_space<vmem>>, vector<1x16xf32>
    %756 = vector.shape_cast %755 : vector<1x16xf32> to vector<16xf32>
    %757 = vector.shape_cast %754 : vector<16xf32> to vector<1x16xf32>
    tpu.vector_store %arg7[%c0_146, %c48_147], %757 {strides = array<i32>} : memref<1x256xf32, #tpu.memory_space<vmem>>, vector<1x16xf32>,
    %758 = vector.extract_strided_slice %737 {offsets = [4, 0], sizes = [1, 16], strides = [1, 1]} : vector<16x16xf32> to vector<1x16xf32>
    %759 = vector.shape_cast %758 : vector<1x16xf32> to vector<16xf32>
    %c0_148 = arith.constant 0 : index
    %c64_149 = arith.constant 64 : index
    %760 = vector.load %arg7[%c0_148, %c64_149] : memref<1x256xf32, #tpu.memory_space<vmem>>, vector<1x16xf32>
    %761 = vector.shape_cast %760 : vector<1x16xf32> to vector<16xf32>
    %762 = vector.shape_cast %759 : vector<16xf32> to vector<1x16xf32>
    tpu.vector_store %arg7[%c0_148, %c64_149], %762 {strides = array<i32>} : memref<1x256xf32, #tpu.memory_space<vmem>>, vector<1x16xf32>,
    %763 = vector.extract_strided_slice %737 {offsets = [5, 0], sizes = [1, 16], strides = [1, 1]} : vector<16x16xf32> to vector<1x16xf32>
    %764 = vector.shape_cast %763 : vector<1x16xf32> to vector<16xf32>
    %c0_150 = arith.constant 0 : index
    %c80_151 = arith.constant 80 : index
    %765 = vector.load %arg7[%c0_150, %c80_151] : memref<1x256xf32, #tpu.memory_space<vmem>>, vector<1x16xf32>
    %766 = vector.shape_cast %765 : vector<1x16xf32> to vector<16xf32>
    %767 = vector.shape_cast %764 : vector<16xf32> to vector<1x16xf32>
    tpu.vector_store %arg7[%c0_150, %c80_151], %767 {strides = array<i32>} : memref<1x256xf32, #tpu.memory_space<vmem>>, vector<1x16xf32>,
    %768 = vector.extract_strided_slice %737 {offsets = [6, 0], sizes = [1, 16], strides = [1, 1]} : vector<16x16xf32> to vector<1x16xf32>
    %769 = vector.shape_cast %768 : vector<1x16xf32> to vector<16xf32>
    %c0_152 = arith.constant 0 : index
    %c96_153 = arith.constant 96 : index
    %770 = vector.load %arg7[%c0_152, %c96_153] : memref<1x256xf32, #tpu.memory_space<vmem>>, vector<1x16xf32>
    %771 = vector.shape_cast %770 : vector<1x16xf32> to vector<16xf32>
    %772 = vector.shape_cast %769 : vector<16xf32> to vector<1x16xf32>
    tpu.vector_store %arg7[%c0_152, %c96_153], %772 {strides = array<i32>} : memref<1x256xf32, #tpu.memory_space<vmem>>, vector<1x16xf32>,
    %773 = vector.extract_strided_slice %737 {offsets = [7, 0], sizes = [1, 16], strides = [1, 1]} : vector<16x16xf32> to vector<1x16xf32>
    %774 = vector.shape_cast %773 : vector<1x16xf32> to vector<16xf32>
    %c0_154 = arith.constant 0 : index
    %c112 = arith.constant 112 : index
    %775 = vector.load %arg7[%c0_154, %c112] : memref<1x256xf32, #tpu.memory_space<vmem>>, vector<1x16xf32>
    %776 = vector.shape_cast %775 : vector<1x16xf32> to vector<16xf32>
    %777 = vector.shape_cast %774 : vector<16xf32> to vector<1x16xf32>
    tpu.vector_store %arg7[%c0_154, %c112], %777 {strides = array<i32>} : memref<1x256xf32, #tpu.memory_space<vmem>>, vector<1x16xf32>,
    %778 = vector.extract_strided_slice %737 {offsets = [8, 0], sizes = [1, 16], strides = [1, 1]} : vector<16x16xf32> to vector<1x16xf32>
    %779 = vector.shape_cast %778 : vector<1x16xf32> to vector<16xf32>
    %c0_155 = arith.constant 0 : index
    %c128 = arith.constant 128 : index
    %780 = vector.load %arg7[%c0_155, %c128] : memref<1x256xf32, #tpu.memory_space<vmem>>, vector<1x16xf32>
    %781 = vector.shape_cast %780 : vector<1x16xf32> to vector<16xf32>
    %782 = vector.shape_cast %779 : vector<16xf32> to vector<1x16xf32>
    tpu.vector_store %arg7[%c0_155, %c128], %782 {strides = array<i32>} : memref<1x256xf32, #tpu.memory_space<vmem>>, vector<1x16xf32>,
    %783 = vector.extract_strided_slice %737 {offsets = [9, 0], sizes = [1, 16], strides = [1, 1]} : vector<16x16xf32> to vector<1x16xf32>
    %784 = vector.shape_cast %783 : vector<1x16xf32> to vector<16xf32>
    %c0_156 = arith.constant 0 : index
    %c144 = arith.constant 144 : index
    %785 = vector.load %arg7[%c0_156, %c144] : memref<1x256xf32, #tpu.memory_space<vmem>>, vector<1x16xf32>
    %786 = vector.shape_cast %785 : vector<1x16xf32> to vector<16xf32>
    %787 = vector.shape_cast %784 : vector<16xf32> to vector<1x16xf32>
    tpu.vector_store %arg7[%c0_156, %c144], %787 {strides = array<i32>} : memref<1x256xf32, #tpu.memory_space<vmem>>, vector<1x16xf32>,
    %788 = vector.extract_strided_slice %737 {offsets = [10, 0], sizes = [1, 16], strides = [1, 1]} : vector<16x16xf32> to vector<1x16xf32>
    %789 = vector.shape_cast %788 : vector<1x16xf32> to vector<16xf32>
    %c0_157 = arith.constant 0 : index
    %c160 = arith.constant 160 : index
    %790 = vector.load %arg7[%c0_157, %c160] : memref<1x256xf32, #tpu.memory_space<vmem>>, vector<1x16xf32>
    %791 = vector.shape_cast %790 : vector<1x16xf32> to vector<16xf32>
    %792 = vector.shape_cast %789 : vector<16xf32> to vector<1x16xf32>
    tpu.vector_store %arg7[%c0_157, %c160], %792 {strides = array<i32>} : memref<1x256xf32, #tpu.memory_space<vmem>>, vector<1x16xf32>,
    %793 = vector.extract_strided_slice %737 {offsets = [11, 0], sizes = [1, 16], strides = [1, 1]} : vector<16x16xf32> to vector<1x16xf32>
    %794 = vector.shape_cast %793 : vector<1x16xf32> to vector<16xf32>
    %c0_158 = arith.constant 0 : index
    %c176 = arith.constant 176 : index
    %795 = vector.load %arg7[%c0_158, %c176] : memref<1x256xf32, #tpu.memory_space<vmem>>, vector<1x16xf32>
    %796 = vector.shape_cast %795 : vector<1x16xf32> to vector<16xf32>
    %797 = vector.shape_cast %794 : vector<16xf32> to vector<1x16xf32>
    tpu.vector_store %arg7[%c0_158, %c176], %797 {strides = array<i32>} : memref<1x256xf32, #tpu.memory_space<vmem>>, vector<1x16xf32>,
    %798 = vector.extract_strided_slice %737 {offsets = [12, 0], sizes = [1, 16], strides = [1, 1]} : vector<16x16xf32> to vector<1x16xf32>
    %799 = vector.shape_cast %798 : vector<1x16xf32> to vector<16xf32>
    %c0_159 = arith.constant 0 : index
    %c192 = arith.constant 192 : index
    %800 = vector.load %arg7[%c0_159, %c192] : memref<1x256xf32, #tpu.memory_space<vmem>>, vector<1x16xf32>
    %801 = vector.shape_cast %800 : vector<1x16xf32> to vector<16xf32>
    %802 = vector.shape_cast %799 : vector<16xf32> to vector<1x16xf32>
    tpu.vector_store %arg7[%c0_159, %c192], %802 {strides = array<i32>} : memref<1x256xf32, #tpu.memory_space<vmem>>, vector<1x16xf32>,
    %803 = vector.extract_strided_slice %737 {offsets = [13, 0], sizes = [1, 16], strides = [1, 1]} : vector<16x16xf32> to vector<1x16xf32>
    %804 = vector.shape_cast %803 : vector<1x16xf32> to vector<16xf32>
    %c0_160 = arith.constant 0 : index
    %c208 = arith.constant 208 : index
    %805 = vector.load %arg7[%c0_160, %c208] : memref<1x256xf32, #tpu.memory_space<vmem>>, vector<1x16xf32>
    %806 = vector.shape_cast %805 : vector<1x16xf32> to vector<16xf32>
    %807 = vector.shape_cast %804 : vector<16xf32> to vector<1x16xf32>
    tpu.vector_store %arg7[%c0_160, %c208], %807 {strides = array<i32>} : memref<1x256xf32, #tpu.memory_space<vmem>>, vector<1x16xf32>,
    %808 = vector.extract_strided_slice %737 {offsets = [14, 0], sizes = [1, 16], strides = [1, 1]} : vector<16x16xf32> to vector<1x16xf32>
    %809 = vector.shape_cast %808 : vector<1x16xf32> to vector<16xf32>
    %c0_161 = arith.constant 0 : index
    %c224 = arith.constant 224 : index
    %810 = vector.load %arg7[%c0_161, %c224] : memref<1x256xf32, #tpu.memory_space<vmem>>, vector<1x16xf32>
    %811 = vector.shape_cast %810 : vector<1x16xf32> to vector<16xf32>
    %812 = vector.shape_cast %809 : vector<16xf32> to vector<1x16xf32>
    tpu.vector_store %arg7[%c0_161, %c224], %812 {strides = array<i32>} : memref<1x256xf32, #tpu.memory_space<vmem>>, vector<1x16xf32>,
    %813 = vector.extract_strided_slice %737 {offsets = [15, 0], sizes = [1, 16], strides = [1, 1]} : vector<16x16xf32> to vector<1x16xf32>
    %814 = vector.shape_cast %813 : vector<1x16xf32> to vector<16xf32>
    %c0_162 = arith.constant 0 : index
    %c240 = arith.constant 240 : index
    %815 = vector.load %arg7[%c0_162, %c240] : memref<1x256xf32, #tpu.memory_space<vmem>>, vector<1x16xf32>
    %816 = vector.shape_cast %815 : vector<1x16xf32> to vector<16xf32>
    %817 = vector.shape_cast %814 : vector<16xf32> to vector<1x16xf32>
    tpu.vector_store %arg7[%c0_162, %c240], %817 {strides = array<i32>} : memref<1x256xf32, #tpu.memory_space<vmem>>, vector<1x16xf32>,
    %c0_163 = arith.constant 0 : index
    %c0_164 = arith.constant 0 : index
    %818 = vector.load %arg7[%c0_163, %c0_164] : memref<1x256xf32, #tpu.memory_space<vmem>>, vector<1x256xf32>
    %c0_i32_165 = arith.constant 0 : i32
    %c32_i32_166 = arith.constant 32 : i32
    %819 = arith.muli %c0_i32_165, %c32_i32_166 : i32
    %820 = tpu.assume_multiple %819, 8 : i32
    %c0_167 = arith.constant 0 : index
    %821 = arith.index_cast %820 : i32 to index
    %c0_168 = arith.constant 0 : index
    %822 = vector.load %arg1[%c0_167, %821, %c0_168] : memref<1x32x256xf32, #tpu.memory_space<vmem>>, vector<1x32x256xf32>
    %823 = vector.shape_cast %822 : vector<1x32x256xf32> to vector<32x256xf32>
    %824 = arith.index_cast %820 : i32 to index
    %c0_169 = arith.constant 0 : index
    %825 = vector.load %arg9[%824, %c0_169] : memref<32x1xf32, #tpu.memory_space<vmem>>, vector<32x1xf32>
    %826 = vector.broadcast %825 : vector<32x1xf32> to vector<32x256xf32>
    %827 = arith.mulf %823, %826 : vector<32x256xf32>
    %828 = vector.broadcast %818 : vector<1x256xf32> to vector<32x256xf32>
    %829 = arith.mulf %827, %828 : vector<32x256xf32>
    %c0_170 = arith.constant 0 : index
    %830 = arith.index_cast %820 : i32 to index
    %c0_171 = arith.constant 0 : index
    %831 = vector.load %arg5[%c0_170, %830, %c0_171] : memref<1x32x256xf32, #tpu.memory_space<vmem>>, vector<1x32x256xf32>
    %832 = vector.shape_cast %831 : vector<1x32x256xf32> to vector<32x256xf32>
    %833 = vector.shape_cast %829 : vector<32x256xf32> to vector<1x32x256xf32>
    tpu.vector_store %arg5[%c0_170, %830, %c0_171], %833 {strides = array<i32>} : memref<1x32x256xf32, #tpu.memory_space<vmem>>, vector<1x32x256xf32>,
    %c1_i32_172 = arith.constant 1 : i32
    return
  }
  func.func @transform_0(%arg0: i32) -> (i32, i32, i32) {
    %c0_i32 = arith.constant 0 : i32
    %c0_i32_0 = arith.constant 0 : i32
    %c0_i32_1 = arith.constant 0 : i32
    return %arg0, %c0_i32, %c0_i32_0 : i32, i32, i32
  }
  func.func @transform_1(%arg0: i32) -> (i32, i32) {
    %c0_i32 = arith.constant 0 : i32
    %c0_i32_0 = arith.constant 0 : i32
    %c0_i32_1 = arith.constant 0 : i32
    return %c0_i32, %c0_i32_0 : i32, i32
  }
  func.func @transform_2(%arg0: i32) -> (i32, i32) {
    %c0_i32 = arith.constant 0 : i32
    %c0_i32_0 = arith.constant 0 : i32
    %c0_i32_1 = arith.constant 0 : i32
    return %c0_i32, %c0_i32_0 : i32, i32
  }
  func.func @transform_3(%arg0: i32) -> i32 {
    %c0_i32 = arith.constant 0 : i32
    %c0_i32_0 = arith.constant 0 : i32
    return %c0_i32 : i32
  }
  func.func @transform_4(%arg0: i32) -> (i32, i32, i32) {
    %c0_i32 = arith.constant 0 : i32
    %c0_i32_0 = arith.constant 0 : i32
    %c0_i32_1 = arith.constant 0 : i32
    return %arg0, %c0_i32, %c0_i32_0 : i32, i32, i32
  }
}

</mosaic_0001>

<llo_original>
// kernel: tpu_custom_call.1
$region0: #{tpu_custom_call.1}
  #allocation0 [shape = 'u32[]', space=smem, size = 0x4, offset = 0x4, fixed_abs, tag = 'smem constant byte address 0x4 - core index']
  #allocation1 [shape = 'u32[72,128]{1,0:T(1,128)}', space=vmem, size = 0x9000, scoped, tag = 'internal scratch']
  #allocation2 [shape = 'f32[2,22,22]{2,1,0:T(8,128)}', space=vmem, size = 0x6000, scoped, tag = 'scratch operand']
  #allocation3 [shape = 'f32[1,256]{1,0:T(1,128)}', space=vmem, size = 0x400, scoped, tag = 'scratch operand']
  #allocation4 [shape = 'f32[32,2]{1,0:T(8,128)}', space=vmem, size = 0x4000, scoped, tag = 'scratch operand']
  #allocation5 [shape = 'f32[32,1]{1,0:T(8,128)}', space=vmem, size = 0x4000, scoped, tag = 'scratch operand']
  %s0 = inlined_call_operand.hbm [shape: f32[2,32,256], index: 0, kind: input, shape index: {}]
  %s1 = inlined_call_operand.vmem [shape: f32[2,32], index: 1, kind: input, shape index: {}]
  %s2 = inlined_call_operand.vmem [shape: f32[32,2], index: 2, kind: input, shape index: {}]
  %s3 = inlined_call_operand.vmem [shape: f32[98], index: 3, kind: input, shape index: {}]
  %s4 = inlined_call_operand.hbm [shape: f32[2,32,256], index: 4, kind: output, shape index: {}]
  %s5 = sld [smem:[#allocation0]]
  $region57: #{tpu_custom_call.1} parent=0
    _
  %s7 = ssub.s32 1, %s5
  %s8 = scalar_select 0, %s7, %s5
  $region1: #{tpu_custom_call.1} parent=0
    #allocation6 [shape = 'u8[65536]{0}', space=vmem, size = 0x10000, scoped, tag = 'input window, operand 0']
    #allocation7 [shape = 's32[2]{0}', space=sflag, size = 0x8, scoped, tag = 'scoped memory for tpu_custom_call.1']
    #allocation8 [shape = 's32[2]{0}', space=sflag, size = 0x8, scoped, tag = 'scoped memory for tpu_custom_call.1']
    #allocation9 [shape = 's32[2]{0}', space=sflag, size = 0x8, scoped, tag = 'scoped memory for tpu_custom_call.1']
    #allocation10 [shape = 'u8[512]{0}', space=smem, size = 0x200, scoped, tag = 'input window, operand 3, single buffered']
    #allocation11 [shape = 'u8[65536]{0}', space=vmem, size = 0x10000, scoped, tag = 'output window, operand 0']
    %9 = vsyncpa [#allocation7], 0
    %s10 = scalar_lea.sflag [#allocation7], 1
    %11 = vsyncpa %s10, 0
    %12 = vsyncpa [#allocation9], 0
    %13 = vsyncpa [#allocation8], 0
    %s14 = scalar_lea.sflag [#allocation8], 1
    %15 = vsyncpa %s14, 0
    loop: start=0, step=1, limit=4
    $region2: #{tpu_custom_call.1} parent=1 // loop_pre_header
      _
    $region3: #{tpu_custom_call.1} parent=1 // loop_header
      %s17 = sphi 0, %s21
      %p18 = scmp.ge.s32.totalorder %s17, 4
      %s27 = sphi 0, %s29
      %s30 = sphi 0, %s27
      %s31 = sphi 0, %s30
      %s47 = sphi 0, %s31
      %s51 = sphi 0, %s51
      %s53 = sphi 0, %s51
      %s54 = sphi 0, %s53
      %s68 = sphi 0, %s54
      %s72 = sphi 0, %s72
      %s74 = sphi 0, %s72
      %s75 = sphi 0, %s74
      %s89 = sphi 0, %s75
      %s93 = sphi 0, %s93
      %s95 = sphi 0, %s93
      %s96 = sphi 0, %s95
      %s110 = sphi 0, %s96
      %s116 = sphi 0, %s118
      %s119 = sphi 0, %s116
      %s120 = sphi 0, %s119
      %s136 = sphi 0, %s120
    $region4: #{tpu_custom_call.1} parent=1 // loop_header_branch
      %20 = sbr.rel (%p18) target = $region8
    $region5: #{tpu_custom_call.1} parent=1 // loop_body
      %s22 = ssub.s32 %s17, 1
      %s23 = ssub.s32 %s17, 2
      %s24 = sadd.s32 %s17, 1
      %s25 = ssub.s32 %s17, %s24
      %p26 = scmp.eq.s32.totalorder %s25, 0
      %s28 = sadd.s32 %s27, 1
      %s29 = scalar_select %p26, %s27, %s28
      %p32 = pneg %p26
      %p33 = scmp.eq.s32.totalorder %s17, 1
      %p34 = por %p32, %p33
      %p35 = scmp.ne.s32.totalorder %s27, %s30
      %p36 = scmp.eq.s32.totalorder %s17, 0
      %p37 = por %p35, %p36
      %p38 = scmp.ne.s32.totalorder %s27, %s30
      %p39 = scmp.eq.s32.totalorder %s22, 1
      %p40 = por %p38, %p39
      %p41 = scmp.ne.s32.totalorder %s30, %s31
      %p42 = scmp.eq.s32.totalorder %s22, 0
      %p43 = por %p41, %p42
      %p44 = scmp.ne.s32.totalorder %s30, %s31
      %p45 = scmp.eq.s32.totalorder %s23, 1
      %p46 = por %p44, %p45
      %p48 = scmp.ne.s32.totalorder %s31, %s47
      %p49 = scmp.eq.s32.totalorder %s23, 0
      %p50 = por %p48, %p49
      %s52 = sadd.s32 %s51, 1
      %p55 = scmp.eq.s32.totalorder %s17, 1
      %p56 = scmp.ne.s32.totalorder %s51, %s53
      %p57 = scmp.eq.s32.totalorder %s17, 0
      %p58 = por %p56, %p57
      %p59 = scmp.ne.s32.totalorder %s51, %s53
      %p60 = scmp.eq.s32.totalorder %s22, 1
      %p61 = por %p59, %p60
      %p62 = scmp.ne.s32.totalorder %s53, %s54
      %p63 = scmp.eq.s32.totalorder %s22, 0
      %p64 = por %p62, %p63
      %p65 = scmp.ne.s32.totalorder %s53, %s54
      %p66 = scmp.eq.s32.totalorder %s23, 1
      %p67 = por %p65, %p66
      %p69 = scmp.ne.s32.totalorder %s54, %s68
      %p70 = scmp.eq.s32.totalorder %s23, 0
      %p71 = por %p69, %p70
      %s73 = sadd.s32 %s72, 1
      %p76 = scmp.eq.s32.totalorder %s17, 1
      %p77 = scmp.ne.s32.totalorder %s72, %s74
      %p78 = scmp.eq.s32.totalorder %s17, 0
      %p79 = por %p77, %p78
      %p80 = scmp.ne.s32.totalorder %s72, %s74
      %p81 = scmp.eq.s32.totalorder %s22, 1
      %p82 = por %p80, %p81
      %p83 = scmp.ne.s32.totalorder %s74, %s75
      %p84 = scmp.eq.s32.totalorder %s22, 0
      %p85 = por %p83, %p84
      %p86 = scmp.ne.s32.totalorder %s74, %s75
      %p87 = scmp.eq.s32.totalorder %s23, 1
      %p88 = por %p86, %p87
      %p90 = scmp.ne.s32.totalorder %s75, %s89
      %p91 = scmp.eq.s32.totalorder %s23, 0
      %p92 = por %p90, %p91
      %s94 = sadd.s32 %s93, 1
      %p97 = scmp.eq.s32.totalorder %s17, 1
      %p98 = scmp.ne.s32.totalorder %s93, %s95
      %p99 = scmp.eq.s32.totalorder %s17, 0
      %p100 = por %p98, %p99
      %p101 = scmp.ne.s32.totalorder %s93, %s95
      %p102 = scmp.eq.s32.totalorder %s22, 1
      %p103 = por %p101, %p102
      %p104 = scmp.ne.s32.totalorder %s95, %s96
      %p105 = scmp.eq.s32.totalorder %s22, 0
      %p106 = por %p104, %p105
      %p107 = scmp.ne.s32.totalorder %s95, %s96
      %p108 = scmp.eq.s32.totalorder %s23, 1
      %p109 = por %p107, %p108
      %p111 = scmp.ne.s32.totalorder %s96, %s110
      %p112 = scmp.eq.s32.totalorder %s23, 0
      %p113 = por %p111, %p112
      %s114 = ssub.s32 %s17, %s24
      %p115 = scmp.eq.s32.totalorder %s114, 0
      %s117 = sadd.s32 %s116, 1
      %s118 = scalar_select %p115, %s116, %s117
      %p121 = pneg %p115
      %p122 = scmp.eq.s32.totalorder %s17, 1
      %p123 = por %p121, %p122
      %p124 = scmp.ne.s32.totalorder %s116, %s119
      %p125 = scmp.eq.s32.totalorder %s17, 0
      %p126 = por %p124, %p125
      %p127 = scmp.ne.s32.totalorder %s116, %s119
      %p128 = scmp.eq.s32.totalorder %s22, 1
      %p129 = por %p127, %p128
      %p130 = scmp.ne.s32.totalorder %s119, %s120
      %p131 = scmp.eq.s32.totalorder %s22, 0
      %p132 = por %p130, %p131
      %p133 = scmp.ne.s32.totalorder %s119, %s120
      %p134 = scmp.eq.s32.totalorder %s23, 1
      %p135 = por %p133, %p134
      %p137 = scmp.ne.s32.totalorder %s120, %s136
      %p138 = scmp.eq.s32.totalorder %s23, 0
      %p139 = por %p137, %p138
      %p140 = scmp.le.s32.totalorder 1, %s17
      %p141 = scmp.lt.s32.totalorder %s17, 3
      %p142 = pnand %p140, %p141
      %p143 = pneg %p142
      // Predicated region
      $region9: #{tpu_custom_call.1} parent=5 // pred_check
        _
      $region10: #{tpu_custom_call.1} parent=5 // pred_check_branch
        %145 = sbr.rel (%p142) target = $region12
      $region11: #{tpu_custom_call.1} parent=5 // pred_region
        %s146 = ssub.s32 %s17, 1
        // Predicated region
        $region13: #{tpu_custom_call.1} parent=11 // pred_check
          %p147 = pneg %p64
        $region14: #{tpu_custom_call.1} parent=11 // pred_check_branch
          %149 = sbr.rel (%p147) target = $region16
        $region15: #{tpu_custom_call.1} parent=11 // pred_region
          _
        $region16: #{tpu_custom_call.1} parent=11 // pred_fallthru
          _
        // Predicated region
        $region17: #{tpu_custom_call.1} parent=11 // pred_check
          %p150 = pneg %p85
        $region18: #{tpu_custom_call.1} parent=11 // pred_check_branch
          %152 = sbr.rel (%p150) target = $region20
        $region19: #{tpu_custom_call.1} parent=11 // pred_region
          _
        $region20: #{tpu_custom_call.1} parent=11 // pred_fallthru
          _
        // Predicated region
        $region21: #{tpu_custom_call.1} parent=11 // pred_check
          %p153 = pneg %p106
        $region22: #{tpu_custom_call.1} parent=11 // pred_check_branch
          %155 = sbr.rel (%p153) target = $region24
        $region23: #{tpu_custom_call.1} parent=11 // pred_region
          %157 = vsyncadd [#allocation9], 0
          %s159 = sshll.u32 %s3, 4
          %s160 = int_to_ptr.vmem [resolvable:$true] %s159
          %162 = dma.vmem_to_smem %s160, 16, [#allocation10], [#allocation9]
        $region24: #{tpu_custom_call.1} parent=11 // pred_fallthru
          _
      $region12: #{tpu_custom_call.1} parent=5 // pred_fallthru
        _
      %p163 = scmp.lt.s32.totalorder %s17, 2
      // Predicated region
      $region25: #{tpu_custom_call.1} parent=5 // pred_check
        %p164 = pneg %p163
      $region26: #{tpu_custom_call.1} parent=5 // pred_check_branch
        %166 = sbr.rel (%p164) target = $region28
      $region27: #{tpu_custom_call.1} parent=5 // pred_region
        // Predicated region
        $region29: #{tpu_custom_call.1} parent=27 // pred_check
          %p167 = pneg %p37
        $region30: #{tpu_custom_call.1} parent=27 // pred_check_branch
          %169 = sbr.rel (%p167) target = $region32
        $region31: #{tpu_custom_call.1} parent=27 // pred_region
          %s170 = sand.u32 %s27, 1
          %s171 = scalar_lea.sflag [#allocation7], %s170
          %s172 = sand.u32 %s27, 1
          %s173 = smul.addr %s172, 64
          %s174 = scalar_lea.vmem [#allocation6], %s173
          %176 = vsyncadd %s171, 0
          %s177 = smul.addr %s17, 8
          %s178 = smul.addr %s177, 8
          %s179 = scalar_lea.hbm %s0, %s178
          %s180 = sshll.u32 %s179, 4
          %s181 = int_to_ptr.hbm [resolvable:$true] %s180
          %s182 = sshll.u32 %s174, 4
          %s183 = int_to_ptr.vmem [resolvable:$true] %s182
          %188 = dma.hbm_to_vmem [thread:$0]  %s181, 1024, %s183, %s171, 256, 256, 16
        $region32: #{tpu_custom_call.1} parent=27 // pred_fallthru
          _
      $region28: #{tpu_custom_call.1} parent=5 // pred_fallthru
        _
      %p189 = scmp.le.s32.totalorder 1, %s17
      %p190 = scmp.lt.s32.totalorder %s17, 3
      %p191 = pnand %p189, %p190
      %p192 = pneg %p191
      // Predicated region
      $region33: #{tpu_custom_call.1} parent=5 // pred_check
        _
      $region34: #{tpu_custom_call.1} parent=5 // pred_check_branch
        %194 = sbr.rel (%p191) target = $region36
      $region35: #{tpu_custom_call.1} parent=5 // pred_region
        %s195 = ssub.s32 %s17, 1
        %s196 = sand.u32 %s30, 1
        %s197 = scalar_lea.sflag [#allocation7], %s196
        %s198 = sand.u32 %s30, 1
        %s199 = smul.addr %s198, 64
        %s200 = scalar_lea.vmem [#allocation6], %s199
        // Predicated region
        $region37: #{tpu_custom_call.1} parent=35 // pred_check
          %p201 = pneg %p43
        $region38: #{tpu_custom_call.1} parent=35 // pred_check_branch
          %203 = sbr.rel (%p201) target = $region40
        $region39: #{tpu_custom_call.1} parent=35 // pred_region
          %205 = dma.done %s197, 1024
        $region40: #{tpu_custom_call.1} parent=35 // pred_fallthru
          _
        // Predicated region
        $region41: #{tpu_custom_call.1} parent=35 // pred_check
          %p206 = pneg %p106
        $region42: #{tpu_custom_call.1} parent=35 // pred_check_branch
          %208 = sbr.rel (%p206) target = $region44
        $region43: #{tpu_custom_call.1} parent=35 // pred_region
          %210 = dma.done [#allocation9], 16
        $region44: #{tpu_custom_call.1} parent=35 // pred_fallthru
          _
        %211 = sfence
        %s212 = sand.u32 %s30, 1
        %s213 = scalar_lea.sflag [#allocation7], %s212
        %s214 = sand.u32 %s30, 1
        %s215 = smul.addr %s214, 64
        %s216 = scalar_lea.vmem [#allocation6], %s215
        %p217 = pneg %p43
        %p218 = pneg %p40
        %p219 = pneg %p64
        %p220 = pneg %p61
        %p221 = pneg %p85
        %p222 = pneg %p82
        %p223 = pneg %p106
        %p224 = pneg %p103
        %p225 = pneg %p132
        %p226 = pneg %p129
        %s227 = sand.u32 %s119, 1
        %s228 = scalar_lea.sflag [#allocation8], %s227
        %s229 = sand.u32 %s119, 1
        %s230 = smul.addr %s229, 64
        %s231 = scalar_lea.vmem [#allocation11], %s230
        %s232 = smul.u32 0, 2
        %s233 = smul.addr %s232, 8
        %s234 = scalar_lea.vmem %s200, %s233 [#allocation6]
        %v235 = vld [vmem:[%s234] sm:$0xff]
        %v236 = vld [vmem:[%s234 + $0x8] sm:$0xff]
        %v237 = vld [vmem:[%s234 + $0x10] sm:$0xff]
        %v238 = vld [vmem:[%s234 + $0x18] sm:$0xff]
        %v239 = vld [vmem:[%s234 + $0x20] sm:$0xff]
        %v240 = vld [vmem:[%s234 + $0x28] sm:$0xff]
        %v241 = vld [vmem:[%s234 + $0x30] sm:$0xff]
        %v242 = vld [vmem:[%s234 + $0x38] sm:$0xff]
        %v243 = vadd.f32 %v235, %v236
        %244 = vadd.xlane.f32.xlu0 %v243
        %v245 = vpop.xlane.xlu0 %244
        %v246 = vadd.f32 %v237, %v238
        %247 = vadd.xlane.f32.xlu0 %v246
        %v248 = vpop.xlane.xlu0 %247
        %v249 = vadd.f32 %v239, %v240
        %250 = vadd.xlane.f32.xlu0 %v249
        %v251 = vpop.xlane.xlu0 %250
        %v252 = vadd.f32 %v241, %v242
        %253 = vadd.xlane.f32.xlu0 %v252
        %v254 = vpop.xlane.xlu0 %253
        %v255 = vmul.f32 %v245, 0.00390625
        %v256 = vmul.f32 %v248, 0.00390625
        %v257 = vmul.f32 %v251, 0.00390625
        %v258 = vmul.f32 %v254, 0.00390625
        %v259 = vmax.f32 %v235, %v236
        %260 = vmax.xlane.f32.xlu0 %v259
        %v261 = vpop.xlane.xlu0 %260
        %v262 = vmax.f32 %v237, %v238
        %263 = vmax.xlane.f32.xlu0 %v262
        %v264 = vpop.xlane.xlu0 %263
        %v265 = vmax.f32 %v239, %v240
        %266 = vmax.xlane.f32.xlu0 %v265
        %v267 = vpop.xlane.xlu0 %266
        %v268 = vmax.f32 %v241, %v242
        %269 = vmax.xlane.f32.xlu0 %v268
        %v270 = vpop.xlane.xlu0 %269
        %v271 = vlaneseq
        %v272 = vand.u32 %v271, 127
        %vm273 = vcmp.eq.s32.totalorder %v272, 0
        %v274 = vsel %vm273, %v255, %v261
        %v275 = vsel %vm273, %v256, %v264
        %v276 = vsel %vm273, %v257, %v267
        %v277 = vsel %vm273, %v258, %v270
        %vm278 = vcmask 15360
        %279 = vst.msk [vmem:[#allocation4] sm:$0xff] %vm278, %v274
        %280 = vst.msk [vmem:[#allocation4 + $0x8] sm:$0xff] %vm278, %v275
        %281 = vst.msk [vmem:[#allocation4 + $0x10] sm:$0xff] %vm278, %v276
        %282 = vst.msk [vmem:[#allocation4 + $0x18] sm:$0xff] %vm278, %v277
        %v283 = vld [vmem:[#allocation4] sm:$0xff]
        %v284 = vld [vmem:[#allocation4 + $0x8] sm:$0xff]
        %v285 = vld [vmem:[#allocation4 + $0x10] sm:$0xff]
        %v286 = vld [vmem:[#allocation4 + $0x18] sm:$0xff]
        %v287 = vld [vmem:[%s1] sm:$0x3]
        %vm288 = vcmask 261120
        %v290 = vsel %vm288, %v287, 0
        %292 = vmatpush.msra.mxu0 0.0
        %293 = vmatpush.msra.mxu0 0.0
        %294 = vmatpush.msra.mxu0 0.0
        %295 = vmatpush.msra.mxu0 0.0
        %296 = vmatpush.msra.mxu0 0.0
        %297 = vmatpush.msra.mxu0 0.0
        %298 = vmatpush.msra.mxu0 0.0
        %299 = vmatpush.msra.mxu0 0.0
        %300 = vmatpush.msra.mxu0 0.0
        %301 = vmatpush.msra.mxu0 0.0
        %302 = vmatpush.msra.mxu0 0.0
        %303 = vmatpush.msra.mxu0 0.0
        %304 = vmatpush.msra.mxu0 %v286
        %305 = vmatpush.msra.mxu0 %v285
        %306 = vmatpush.msra.mxu0 %v284
        %307 = vmatpush.msra.mxu0 %v283
        %308 = vmatmul.f32.gmra.mxu0 %v290
        %v309 = vpop.f32.mrf.mxu0
        %v310 = vadd.f32 0.0, %v309
        %311 = vdwg.mxu0
        %v312 = vmax.f32 %v310, 0.0
        %v313 = vld [vmem:[%s2] sm:$0xff]
        %v314 = vld [vmem:[%s2 + $0x8] sm:$0xff]
        %v315 = vld [vmem:[%s2 + $0x10] sm:$0xff]
        %v316 = vld [vmem:[%s2 + $0x18] sm:$0xff]
        %v318 = vsel %vm278, %v313, 0
        %v321 = vsel %vm278, %v314, 0
        %v324 = vsel %vm278, %v315, 0
        %v327 = vsel %vm278, %v316, 0
        %vm329 = vcmask 1041408
        %v331 = vsel %vm329, %v312, 0
        %333 = vmatpush.msra.mxu0 0.0
        %334 = vmatpush.msra.mxu0 0.0
        %335 = vmatpush.msra.mxu0 0.0
        %336 = vmatpush.msra.mxu0 0.0
        %337 = vmatpush.msra.mxu0 0.0
        %338 = vmatpush.msra.mxu0 0.0
        %339 = vmatpush.msra.mxu0 0.0
        %340 = vmatpush.msra.mxu0 0.0
        %341 = vmatpush.msra.mxu0 0.0
        %342 = vmatpush.msra.mxu0 0.0
        %343 = vmatpush.msra.mxu0 0.0
        %344 = vmatpush.msra.mxu0 0.0
        %345 = vmatpush.msra.mxu0 0.0
        %346 = vmatpush.msra.mxu0 0.0
        %347 = vmatpush.msra.mxu0 0.0
        %348 = vmatpush.msra.mxu0 %v331
        %349 = vmatmul.f32.gmra.mxu0 %v318
        %v350 = vpop.f32.mrf.mxu0
        %v351 = vadd.f32 0.0, %v350
        %352 = vmatmul.f32.gmra.mxu0 %v321
        %v353 = vpop.f32.mrf.mxu0
        %v354 = vadd.f32 0.0, %v353
        %355 = vmatmul.f32.gmra.mxu0 %v324
        %v356 = vpop.f32.mrf.mxu0
        %v357 = vadd.f32 0.0, %v356
        %358 = vmatmul.f32.gmra.mxu0 %v327
        %v359 = vpop.f32.mrf.mxu0
        %v360 = vadd.f32 0.0, %v359
        %361 = vdwg.mxu0
        %366 = vrot.lane.b32.xlu0 %v351, 127
        %v367 = vpop.permute.xlu0 %366
        %368 = vrot.lane.b32.xlu0 %v354, 127
        %v369 = vpop.permute.xlu0 %368
        %370 = vrot.lane.b32.xlu0 %v357, 127
        %v371 = vpop.permute.xlu0 %370
        %372 = vrot.lane.b32.xlu0 %v360, 127
        %v373 = vpop.permute.xlu0 %372
        %v378 = vadd.f32 %v351, %v367
        %v379 = vadd.f32 %v354, %v369
        %v380 = vadd.f32 %v357, %v371
        %v381 = vadd.f32 %v360, %v373
        %v382 = vxor.u32 %v378, 2147483648
        %v383 = vxor.u32 %v379, 2147483648
        %v384 = vxor.u32 %v380, 2147483648
        %v385 = vxor.u32 %v381, 2147483648
        %v386 = vmul.f32 %v382, 1.442695
        %v387 = vpow.pop %v386
        %v388 = vmul.f32 %v383, 1.442695
        %v389 = vpow.pop %v388
        %v390 = vmul.f32 %v384, 1.442695
        %v391 = vpow.pop %v390
        %v392 = vmul.f32 %v385, 1.442695
        %v393 = vpow.pop %v392
        %v394 = vadd.f32 %v387, 1.0
        %v395 = vadd.f32 %v389, 1.0
        %v396 = vadd.f32 %v391, 1.0
        %v397 = vadd.f32 %v393, 1.0
        %v398 = vrcp.pop %v394
        %v399 = vmul.f32 %v394, %v398
        %v400 = vsub.f32 1.0, %v399
        %v401 = vmul.f32 %v398, %v400
        %v402 = vadd.f32 %v398, %v401
        %vm403 = vweird.f32 %v394
        %vm404 = vweird.f32 %v398
        %vm405 = vmor %vm403, %vm404
        %v406 = vsel %vm405, %v398, %v402
        %v407 = vand.u32 2147483647, %v394
        %vm408 = vcmp.eq.f32.partialorder %v407, 8.507059e+37
        %v409 = vand.u32 %v394, 2147483648
        %v410 = vor.u32 1.1754944e-38, %v409
        %v411 = vsel %vm408, %v410, %v406
        %v412 = vmul.f32 1.0, %v411
        %v413 = vrcp.pop %v395
        %v414 = vmul.f32 %v395, %v413
        %v415 = vsub.f32 1.0, %v414
        %v416 = vmul.f32 %v413, %v415
        %v417 = vadd.f32 %v413, %v416
        %vm418 = vweird.f32 %v395
        %vm419 = vweird.f32 %v413
        %vm420 = vmor %vm418, %vm419
        %v421 = vsel %vm420, %v413, %v417
        %v422 = vand.u32 2147483647, %v395
        %vm423 = vcmp.eq.f32.partialorder %v422, 8.507059e+37
        %v424 = vand.u32 %v395, 2147483648
        %v425 = vor.u32 1.1754944e-38, %v424
        %v426 = vsel %vm423, %v425, %v421
        %v427 = vmul.f32 1.0, %v426
        %v428 = vrcp.pop %v396
        %v429 = vmul.f32 %v396, %v428
        %v430 = vsub.f32 1.0, %v429
        %v431 = vmul.f32 %v428, %v430
        %v432 = vadd.f32 %v428, %v431
        %vm433 = vweird.f32 %v396
        %vm434 = vweird.f32 %v428
        %vm435 = vmor %vm433, %vm434
        %v436 = vsel %vm435, %v428, %v432
        %v437 = vand.u32 2147483647, %v396
        %vm438 = vcmp.eq.f32.partialorder %v437, 8.507059e+37
        %v439 = vand.u32 %v396, 2147483648
        %v440 = vor.u32 1.1754944e-38, %v439
        %v441 = vsel %vm438, %v440, %v436
        %v442 = vmul.f32 1.0, %v441
        %v443 = vrcp.pop %v397
        %v444 = vmul.f32 %v397, %v443
        %v445 = vsub.f32 1.0, %v444
        %v446 = vmul.f32 %v443, %v445
        %v447 = vadd.f32 %v443, %v446
        %vm448 = vweird.f32 %v397
        %vm449 = vweird.f32 %v443
        %vm450 = vmor %vm448, %vm449
        %v451 = vsel %vm450, %v443, %v447
        %v452 = vand.u32 2147483647, %v397
        %vm453 = vcmp.eq.f32.partialorder %v452, 8.507059e+37
        %v454 = vand.u32 %v397, 2147483648
        %v455 = vor.u32 1.1754944e-38, %v454
        %v456 = vsel %vm453, %v455, %v451
        %v457 = vmul.f32 1.0, %v456
        %vm458 = vcmask 7168
        %459 = vst.msk [vmem:[#allocation5] sm:$0xff] %vm458, %v412
        %460 = vst.msk [vmem:[#allocation5 + $0x8] sm:$0xff] %vm458, %v427
        %461 = vst.msk [vmem:[#allocation5 + $0x10] sm:$0xff] %vm458, %v442
        %462 = vst.msk [vmem:[#allocation5 + $0x18] sm:$0xff] %vm458, %v457
        %vm463 = vcmask 179200
        %464 = vst.msk [vmem:[#allocation2] sm:$0xff] %vm463, 0.0
        %465 = vst.msk [vmem:[#allocation2 + $0x8] sm:$0xff] %vm463, 0.0
        %vm466 = vcmask 177152
        %467 = vst.msk [vmem:[#allocation2 + $0x10] sm:$0x3f] %vm466, 0.0
        %468 = vst.msk [vmem:[#allocation2 + $0x18] sm:$0xff] %vm463, 0.0
        %469 = vst.msk [vmem:[#allocation2 + $0x20] sm:$0xff] %vm463, 0.0
        %470 = vst.msk [vmem:[#allocation2 + $0x28] sm:$0x3f] %vm466, 0.0
        %v471 = vld [vmem:[%s234] sm:$0xff]
        %v472 = vld [vmem:[%s234 + $0x8] sm:$0xff]
        %v473 = vld [vmem:[%s234 + $0x10] sm:$0xff]
        %v474 = vld [vmem:[%s234 + $0x18] sm:$0xff]
        %v475 = vld [vmem:[%s234 + $0x20] sm:$0xff]
        %v476 = vld [vmem:[%s234 + $0x28] sm:$0xff]
        %v477 = vld [vmem:[%s234 + $0x30] sm:$0xff]
        %v478 = vld [vmem:[%s234 + $0x38] sm:$0xff]
        %v479 = vld [vmem:[#allocation5] sm:$0xff]
        %v480 = vld [vmem:[#allocation5 + $0x8] sm:$0xff]
        %v481 = vld [vmem:[#allocation5 + $0x10] sm:$0xff]
        %v482 = vld [vmem:[#allocation5 + $0x18] sm:$0xff]
        %484 = vset.pattern.permute.xlu0 0
        %485 = vperm.xlu0 %484, %v479
        %v486 = vpop.permute.xlu0 %485
        %489 = vset.pattern.permute.xlu0 0
        %490 = vperm.xlu0 %489, %v480
        %v491 = vpop.permute.xlu0 %490
        %494 = vset.pattern.permute.xlu0 0
        %495 = vperm.xlu0 %494, %v481
        %v496 = vpop.permute.xlu0 %495
        %499 = vset.pattern.permute.xlu0 0
        %500 = vperm.xlu0 %499, %v482
        %v501 = vpop.permute.xlu0 %500
        %v503 = vmul.f32 %v471, %v486
        %v504 = vmul.f32 %v472, %v486
        %v505 = vmul.f32 %v473, %v491
        %v506 = vmul.f32 %v474, %v491
        %v507 = vmul.f32 %v475, %v496
        %v508 = vmul.f32 %v476, %v496
        %v509 = vmul.f32 %v477, %v501
        %v510 = vmul.f32 %v478, %v501
        %v511 = vadd.f32 %v503, %v505
        %v512 = vadd.f32 %v511, %v507
        %v513 = vadd.f32 %v512, %v509
        %v514 = vrot.slane %v513, 4
        %v515 = vadd.f32 %v513, %v514
        %v516 = vrot.slane %v515, 2
        %v517 = vadd.f32 %v515, %v516
        %v518 = vrot.slane %v517, 1
        %v519 = vadd.f32 %v517, %v518
        %v520 = vadd.f32 %v504, %v506
        %v521 = vadd.f32 %v520, %v508
        %v522 = vadd.f32 %v521, %v510
        %v523 = vrot.slane %v522, 4
        %v524 = vadd.f32 %v522, %v523
        %v525 = vrot.slane %v524, 2
        %v526 = vadd.f32 %v524, %v525
        %v527 = vrot.slane %v526, 1
        %v528 = vadd.f32 %v526, %v527
        %v529 = vadd.f32 %v519, 0.0
        %v530 = vadd.f32 %v528, 0.0
        %v531 = vmax.f32 %v503, %v507
        %v532 = vmax.f32 %v505, %v509
        %v533 = vmax.f32 %v531, %v532
        %v534 = vrot.slane %v533, 4
        %v535 = vmax.f32 %v533, %v534
        %v536 = vrot.slane %v535, 2
        %v537 = vmax.f32 %v535, %v536
        %v538 = vrot.slane %v537, 1
        %v539 = vmax.f32 %v537, %v538
        %v540 = vmax.f32 %v504, %v508
        %v541 = vmax.f32 %v506, %v510
        %v542 = vmax.f32 %v540, %v541
        %v543 = vrot.slane %v542, 4
        %v544 = vmax.f32 %v542, %v543
        %v545 = vrot.slane %v544, 2
        %v546 = vmax.f32 %v544, %v545
        %v547 = vrot.slane %v546, 1
        %v548 = vmax.f32 %v546, %v547
        %v549 = vmul.f32 %v529, 0.03125
        %v550 = vmul.f32 %v530, 0.03125
        %552 = vrot.lane.b32.xlu0 %v549, 3
        %v553 = vpop.permute.xlu0 %552
        %vm555 = vcmask 147480
        %556 = vst.msk [vmem:[#allocation2 + $0x3] sm:$0x1] %vm555, %v553
        %558 = vrot.lane.b32.xlu0 %v539, 3
        %v559 = vpop.permute.xlu0 %558
        %s561 = scalar_lea.vmem [#allocation2], 24
        %562 = vst.msk [vmem:[%s561 + $0x3] sm:$0x1] %vm555, %v559
        %563 = vrot.lane.b32.xlu0 %v549, 115
        %v564 = vpop.permute.xlu0 %563
        %566 = vst.msk [vmem:[#allocation2 + $0x4] sm:$0x1] %vm555, %v564
        %567 = vrot.lane.b32.xlu0 %v539, 115
        %v568 = vpop.permute.xlu0 %567
        %570 = vst.msk [vmem:[%s561 + $0x4] sm:$0x1] %vm555, %v568
        %571 = vrot.lane.b32.xlu0 %v549, 99
        %v572 = vpop.permute.xlu0 %571
        %574 = vst.msk [vmem:[#allocation2 + $0x5] sm:$0x1] %vm555, %v572
        %575 = vrot.lane.b32.xlu0 %v539, 99
        %v576 = vpop.permute.xlu0 %575
        %578 = vst.msk [vmem:[%s561 + $0x5] sm:$0x1] %vm555, %v576
        %579 = vrot.lane.b32.xlu0 %v549, 83
        %v580 = vpop.permute.xlu0 %579
        %582 = vst.msk [vmem:[#allocation2 + $0x6] sm:$0x1] %vm555, %v580
        %583 = vrot.lane.b32.xlu0 %v539, 83
        %v584 = vpop.permute.xlu0 %583
        %586 = vst.msk [vmem:[%s561 + $0x6] sm:$0x1] %vm555, %v584
        %587 = vrot.lane.b32.xlu0 %v549, 67
        %v588 = vpop.permute.xlu0 %587
        %590 = vst.msk [vmem:[#allocation2 + $0x7] sm:$0x1] %vm555, %v588
        %591 = vrot.lane.b32.xlu0 %v539, 67
        %v592 = vpop.permute.xlu0 %591
        %594 = vst.msk [vmem:[%s561 + $0x7] sm:$0x1] %vm555, %v592
        %595 = vrot.lane.b32.xlu0 %v549, 51
        %v596 = vpop.permute.xlu0 %595
        %598 = vst.msk [vmem:[#allocation2 + $0x8] sm:$0x1] %vm555, %v596
        %599 = vrot.lane.b32.xlu0 %v539, 51
        %v600 = vpop.permute.xlu0 %599
        %602 = vst.msk [vmem:[%s561 + $0x8] sm:$0x1] %vm555, %v600
        %603 = vrot.lane.b32.xlu0 %v549, 35
        %v604 = vpop.permute.xlu0 %603
        %606 = vst.msk [vmem:[#allocation2 + $0x9] sm:$0x1] %vm555, %v604
        %607 = vrot.lane.b32.xlu0 %v539, 35
        %v608 = vpop.permute.xlu0 %607
        %610 = vst.msk [vmem:[%s561 + $0x9] sm:$0x1] %vm555, %v608
        %611 = vrot.lane.b32.xlu0 %v549, 19
        %v612 = vpop.permute.xlu0 %611
        %614 = vst.msk [vmem:[#allocation2 + $0xa] sm:$0x1] %vm555, %v612
        %615 = vrot.lane.b32.xlu0 %v539, 19
        %v616 = vpop.permute.xlu0 %615
        %618 = vst.msk [vmem:[%s561 + $0xa] sm:$0x1] %vm555, %v616
        %620 = vrot.lane.b32.xlu0 %v550, 3
        %v621 = vpop.permute.xlu0 %620
        %623 = vst.msk [vmem:[#allocation2 + $0xb] sm:$0x1] %vm555, %v621
        %625 = vrot.lane.b32.xlu0 %v548, 3
        %v626 = vpop.permute.xlu0 %625
        %628 = vst.msk [vmem:[%s561 + $0xb] sm:$0x1] %vm555, %v626
        %629 = vrot.lane.b32.xlu0 %v550, 115
        %v630 = vpop.permute.xlu0 %629
        %632 = vst.msk [vmem:[#allocation2 + $0xc] sm:$0x1] %vm555, %v630
        %633 = vrot.lane.b32.xlu0 %v548, 115
        %v634 = vpop.permute.xlu0 %633
        %636 = vst.msk [vmem:[%s561 + $0xc] sm:$0x1] %vm555, %v634
        %637 = vrot.lane.b32.xlu0 %v550, 99
        %v638 = vpop.permute.xlu0 %637
        %640 = vst.msk [vmem:[#allocation2 + $0xd] sm:$0x1] %vm555, %v638
        %641 = vrot.lane.b32.xlu0 %v548, 99
        %v642 = vpop.permute.xlu0 %641
        %644 = vst.msk [vmem:[%s561 + $0xd] sm:$0x1] %vm555, %v642
        %645 = vrot.lane.b32.xlu0 %v550, 83
        %v646 = vpop.permute.xlu0 %645
        %648 = vst.msk [vmem:[#allocation2 + $0xe] sm:$0x1] %vm555, %v646
        %649 = vrot.lane.b32.xlu0 %v548, 83
        %v650 = vpop.permute.xlu0 %649
        %652 = vst.msk [vmem:[%s561 + $0xe] sm:$0x1] %vm555, %v650
        %653 = vrot.lane.b32.xlu0 %v550, 67
        %v654 = vpop.permute.xlu0 %653
        %656 = vst.msk [vmem:[#allocation2 + $0xf] sm:$0x1] %vm555, %v654
        %657 = vrot.lane.b32.xlu0 %v548, 67
        %v658 = vpop.permute.xlu0 %657
        %660 = vst.msk [vmem:[%s561 + $0xf] sm:$0x1] %vm555, %v658
        %661 = vrot.lane.b32.xlu0 %v550, 51
        %v662 = vpop.permute.xlu0 %661
        %664 = vst.msk [vmem:[#allocation2 + $0x10] sm:$0x1] %vm555, %v662
        %665 = vrot.lane.b32.xlu0 %v548, 51
        %v666 = vpop.permute.xlu0 %665
        %668 = vst.msk [vmem:[%s561 + $0x10] sm:$0x1] %vm555, %v666
        %669 = vrot.lane.b32.xlu0 %v550, 35
        %v670 = vpop.permute.xlu0 %669
        %672 = vst.msk [vmem:[#allocation2 + $0x11] sm:$0x1] %vm555, %v670
        %673 = vrot.lane.b32.xlu0 %v548, 35
        %v674 = vpop.permute.xlu0 %673
        %676 = vst.msk [vmem:[%s561 + $0x11] sm:$0x1] %vm555, %v674
        %677 = vrot.lane.b32.xlu0 %v550, 19
        %v678 = vpop.permute.xlu0 %677
        %680 = vst.msk [vmem:[#allocation2 + $0x12] sm:$0x1] %vm555, %v678
        %681 = vrot.lane.b32.xlu0 %v548, 19
        %v682 = vpop.permute.xlu0 %681
        %684 = vst.msk [vmem:[%s561 + $0x12] sm:$0x1] %vm555, %v682
        %v685 = vld [vmem:[#allocation2] sm:$0xff]
        %v686 = vld [vmem:[#allocation2 + $0x8] sm:$0xff]
        %v687 = vld [vmem:[#allocation2 + $0x10] sm:$0x3f]
        %s688 = sld [smem:[#allocation10]]
        %v689 = vstv %s688
        %v690 = vmul.f32 %v689, %v685
        %v691 = vmul.f32 %v689, %v686
        %v692 = vadd.f32 %v690, 0.0
        %v693 = vadd.f32 %v691, 0.0
        %s694 = sld [smem:[#allocation10 + $0x7]]
        %v695 = vstv %s694
        %v696 = vmul.f32 %v695, %v685
        %v697 = vmul.f32 %v695, %v686
        %v698 = vmul.f32 %v695, %v687
        %v699 = vadd.f32 %v696, 0.0
        %v700 = vadd.f32 %v697, 0.0
        %v701 = vadd.f32 %v698, 0.0
        %s702 = sld [smem:[#allocation10 + $0xe]]
        %v703 = vstv %s702
        %v704 = vmul.f32 %v703, %v685
        %v705 = vmul.f32 %v703, %v686
        %v706 = vmul.f32 %v703, %v687
        %v707 = vadd.f32 %v704, 0.0
        %v708 = vadd.f32 %v705, 0.0
        %v709 = vadd.f32 %v706, 0.0
        %s710 = sld [smem:[#allocation10 + $0x15]]
        %v711 = vstv %s710
        %v712 = vmul.f32 %v711, %v685
        %v713 = vmul.f32 %v711, %v686
        %v714 = vmul.f32 %v711, %v687
        %v715 = vadd.f32 %v712, 0.0
        %v716 = vadd.f32 %v713, 0.0
        %v717 = vadd.f32 %v714, 0.0
        %s718 = sld [smem:[#allocation10 + $0x1c]]
        %v719 = vstv %s718
        %v720 = vmul.f32 %v719, %v685
        %v721 = vmul.f32 %v719, %v686
        %v722 = vmul.f32 %v719, %v687
        %vm726 = vcmask 1043456
        %v727 = vrot.slane %v720, 4
        %v728 = vrot.slane %v721, 4
        %v729 = vsel %vm726, %v727, %v728
        %v730 = vrot.slane %v722, 4
        %v731 = vsel %vm726, %v728, %v730
        %v734 = vadd.f32 %v692, %v729
        %v735 = vadd.f32 %v693, %v731
        %s736 = sld [smem:[#allocation10 + $0x23]]
        %v737 = vstv %s736
        %v738 = vmul.f32 %v737, %v685
        %v739 = vmul.f32 %v737, %v686
        %v740 = vmul.f32 %v737, %v687
        %v744 = vrot.slane %v738, 4
        %v745 = vrot.slane %v739, 4
        %v746 = vsel %vm726, %v744, %v745
        %v747 = vrot.slane %v740, 4
        %v748 = vsel %vm726, %v745, %v747
        %v752 = vadd.f32 %v699, %v746
        %v753 = vadd.f32 %v700, %v748
        %v754 = vadd.f32 %v701, %v747
        %s755 = sld [smem:[#allocation10 + $0x2a]]
        %v756 = vstv %s755
        %v757 = vmul.f32 %v756, %v685
        %v758 = vmul.f32 %v756, %v686
        %v759 = vmul.f32 %v756, %v687
        %v763 = vrot.slane %v757, 4
        %v764 = vrot.slane %v758, 4
        %v765 = vsel %vm726, %v763, %v764
        %v766 = vrot.slane %v759, 4
        %v767 = vsel %vm726, %v764, %v766
        %v771 = vadd.f32 %v707, %v765
        %v772 = vadd.f32 %v708, %v767
        %v773 = vadd.f32 %v709, %v766
        %s774 = sld [smem:[#allocation10 + $0x1]]
        %v775 = vstv %s774
        %v776 = vmul.f32 %v775, %v685
        %v777 = vmul.f32 %v775, %v686
        %vm780 = vcmask 1042432
        %v781 = vrot.slane %v776, 5
        %v782 = vrot.slane %v777, 5
        %v783 = vsel %vm780, %v781, %v782
        %784 = vrot.lane.b32.xlu0 %v781, 127
        %v785 = vpop.permute.xlu0 %784
        %786 = vrot.lane.b32.xlu0 %v783, 127
        %v787 = vpop.permute.xlu0 %786
        %788 = vrot.lane.b32.xlu0 %v782, 127
        %v789 = vpop.permute.xlu0 %788
        %v793 = vadd.f32 %v715, %v785
        %v794 = vadd.f32 %v716, %v787
        %v795 = vadd.f32 %v717, %v789
        %s796 = sld [smem:[#allocation10 + $0x8]]
        %v797 = vstv %s796
        %v798 = vmul.f32 %v797, %v685
        %v799 = vmul.f32 %v797, %v686
        %v800 = vmul.f32 %v797, %v687
        %vm804 = vcmask 1046528
        %v805 = vrot.slane %v798, 1
        %v806 = vrot.slane %v799, 1
        %v807 = vsel %vm804, %v805, %v806
        %v808 = vrot.slane %v800, 1
        %v809 = vsel %vm804, %v806, %v808
        %810 = vrot.lane.b32.xlu0 %v807, 127
        %v811 = vpop.permute.xlu0 %810
        %812 = vrot.lane.b32.xlu0 %v809, 127
        %v813 = vpop.permute.xlu0 %812
        %v816 = vadd.f32 %v734, %v811
        %v817 = vadd.f32 %v735, %v813
        %s818 = sld [smem:[#allocation10 + $0xf]]
        %v819 = vstv %s818
        %v820 = vmul.f32 %v819, %v685
        %v821 = vmul.f32 %v819, %v686
        %v822 = vmul.f32 %v819, %v687
        %v826 = vrot.slane %v820, 1
        %v827 = vrot.slane %v821, 1
        %v828 = vsel %vm804, %v826, %v827
        %v829 = vrot.slane %v822, 1
        %v830 = vsel %vm804, %v827, %v829
        %831 = vrot.lane.b32.xlu0 %v828, 127
        %v832 = vpop.permute.xlu0 %831
        %833 = vrot.lane.b32.xlu0 %v830, 127
        %v834 = vpop.permute.xlu0 %833
        %835 = vrot.lane.b32.xlu0 %v829, 127
        %v836 = vpop.permute.xlu0 %835
        %v840 = vadd.f32 %v752, %v832
        %v841 = vadd.f32 %v753, %v834
        %v842 = vadd.f32 %v754, %v836
        %s843 = sld [smem:[#allocation10 + $0x16]]
        %v844 = vstv %s843
        %v845 = vmul.f32 %v844, %v685
        %v846 = vmul.f32 %v844, %v686
        %v847 = vmul.f32 %v844, %v687
        %v851 = vrot.slane %v845, 1
        %v852 = vrot.slane %v846, 1
        %v853 = vsel %vm804, %v851, %v852
        %v854 = vrot.slane %v847, 1
        %v855 = vsel %vm804, %v852, %v854
        %856 = vrot.lane.b32.xlu0 %v853, 127
        %v857 = vpop.permute.xlu0 %856
        %858 = vrot.lane.b32.xlu0 %v855, 127
        %v859 = vpop.permute.xlu0 %858
        %860 = vrot.lane.b32.xlu0 %v854, 127
        %v861 = vpop.permute.xlu0 %860
        %v865 = vadd.f32 %v771, %v857
        %v866 = vadd.f32 %v772, %v859
        %v867 = vadd.f32 %v773, %v861
        %s868 = sld [smem:[#allocation10 + $0x1d]]
        %v869 = vstv %s868
        %v870 = vmul.f32 %v869, %v685
        %v871 = vmul.f32 %v869, %v686
        %v872 = vmul.f32 %v869, %v687
        %v876 = vrot.slane %v870, 1
        %v877 = vrot.slane %v871, 1
        %v878 = vsel %vm804, %v876, %v877
        %v879 = vrot.slane %v872, 1
        %v880 = vsel %vm804, %v877, %v879
        %881 = vrot.lane.b32.xlu0 %v878, 127
        %v882 = vpop.permute.xlu0 %881
        %883 = vrot.lane.b32.xlu0 %v880, 127
        %v884 = vpop.permute.xlu0 %883
        %885 = vrot.lane.b32.xlu0 %v879, 127
        %v886 = vpop.permute.xlu0 %885
        %v890 = vadd.f32 %v793, %v882
        %v891 = vadd.f32 %v794, %v884
        %v892 = vadd.f32 %v795, %v886
        %s893 = sld [smem:[#allocation10 + $0x24]]
        %v894 = vstv %s893
        %v895 = vmul.f32 %v894, %v685
        %v896 = vmul.f32 %v894, %v686
        %v897 = vmul.f32 %v894, %v687
        %v901 = vrot.slane %v895, 5
        %v902 = vrot.slane %v896, 5
        %v903 = vsel %vm780, %v901, %v902
        %v904 = vrot.slane %v897, 5
        %v905 = vsel %vm780, %v902, %v904
        %906 = vrot.lane.b32.xlu0 %v903, 127
        %v907 = vpop.permute.xlu0 %906
        %908 = vrot.lane.b32.xlu0 %v905, 127
        %v909 = vpop.permute.xlu0 %908
        %v912 = vadd.f32 %v816, %v907
        %v913 = vadd.f32 %v817, %v909
        %s914 = sld [smem:[#allocation10 + $0x2b]]
        %v915 = vstv %s914
        %v916 = vmul.f32 %v915, %v685
        %v917 = vmul.f32 %v915, %v686
        %v918 = vmul.f32 %v915, %v687
        %v922 = vrot.slane %v916, 5
        %v923 = vrot.slane %v917, 5
        %v924 = vsel %vm780, %v922, %v923
        %v925 = vrot.slane %v918, 5
        %v926 = vsel %vm780, %v923, %v925
        %927 = vrot.lane.b32.xlu0 %v924, 127
        %v928 = vpop.permute.xlu0 %927
        %929 = vrot.lane.b32.xlu0 %v926, 127
        %v930 = vpop.permute.xlu0 %929
        %931 = vrot.lane.b32.xlu0 %v925, 127
        %v932 = vpop.permute.xlu0 %931
        %v936 = vadd.f32 %v840, %v928
        %v937 = vadd.f32 %v841, %v930
        %v938 = vadd.f32 %v842, %v932
        %s939 = sld [smem:[#allocation10 + $0x2]]
        %v940 = vstv %s939
        %v941 = vmul.f32 %v940, %v685
        %v942 = vmul.f32 %v940, %v686
        %v945 = vrot.slane %v941, 6
        %v946 = vrot.slane %v942, 6
        %v947 = vsel %vm329, %v945, %v946
        %948 = vrot.lane.b32.xlu0 %v945, 126
        %v949 = vpop.permute.xlu0 %948
        %950 = vrot.lane.b32.xlu0 %v947, 126
        %v951 = vpop.permute.xlu0 %950
        %952 = vrot.lane.b32.xlu0 %v946, 126
        %v953 = vpop.permute.xlu0 %952
        %v957 = vadd.f32 %v865, %v949
        %v958 = vadd.f32 %v866, %v951
        %v959 = vadd.f32 %v867, %v953
        %s960 = sld [smem:[#allocation10 + $0x9]]
        %v961 = vstv %s960
        %v962 = vmul.f32 %v961, %v685
        %v963 = vmul.f32 %v961, %v686
        %v964 = vmul.f32 %v961, %v687
        %v968 = vrot.slane %v962, 6
        %v969 = vrot.slane %v963, 6
        %v970 = vsel %vm329, %v968, %v969
        %v971 = vrot.slane %v964, 6
        %v972 = vsel %vm329, %v969, %v971
        %973 = vrot.lane.b32.xlu0 %v968, 126
        %v974 = vpop.permute.xlu0 %973
        %975 = vrot.lane.b32.xlu0 %v970, 126
        %v976 = vpop.permute.xlu0 %975
        %977 = vrot.lane.b32.xlu0 %v972, 126
        %v978 = vpop.permute.xlu0 %977
        %v982 = vadd.f32 %v890, %v974
        %v983 = vadd.f32 %v891, %v976
        %v984 = vadd.f32 %v892, %v978
        %s985 = sld [smem:[#allocation10 + $0x10]]
        %v986 = vstv %s985
        %v987 = vmul.f32 %v986, %v685
        %v988 = vmul.f32 %v986, %v686
        %v989 = vmul.f32 %v986, %v687
        %vm993 = vcmask 1045504
        %v994 = vrot.slane %v987, 2
        %v995 = vrot.slane %v988, 2
        %v996 = vsel %vm993, %v994, %v995
        %v997 = vrot.slane %v989, 2
        %v998 = vsel %vm993, %v995, %v997
        %999 = vrot.lane.b32.xlu0 %v996, 126
        %v1000 = vpop.permute.xlu0 %999
        %1001 = vrot.lane.b32.xlu0 %v998, 126
        %v1002 = vpop.permute.xlu0 %1001
        %v1005 = vadd.f32 %v912, %v1000
        %v1006 = vadd.f32 %v913, %v1002
        %s1007 = sld [smem:[#allocation10 + $0x17]]
        %v1008 = vstv %s1007
        %v1009 = vmul.f32 %v1008, %v685
        %v1010 = vmul.f32 %v1008, %v686
        %v1011 = vmul.f32 %v1008, %v687
        %v1015 = vrot.slane %v1009, 2
        %v1016 = vrot.slane %v1010, 2
        %v1017 = vsel %vm993, %v1015, %v1016
        %v1018 = vrot.slane %v1011, 2
        %v1019 = vsel %vm993, %v1016, %v1018
        %1020 = vrot.lane.b32.xlu0 %v1017, 126
        %v1021 = vpop.permute.xlu0 %1020
        %1022 = vrot.lane.b32.xlu0 %v1019, 126
        %v1023 = vpop.permute.xlu0 %1022
        %1024 = vrot.lane.b32.xlu0 %v1018, 126
        %v1025 = vpop.permute.xlu0 %1024
        %v1029 = vadd.f32 %v936, %v1021
        %v1030 = vadd.f32 %v937, %v1023
        %v1031 = vadd.f32 %v938, %v1025
        %s1032 = sld [smem:[#allocation10 + $0x1e]]
        %v1033 = vstv %s1032
        %v1034 = vmul.f32 %v1033, %v685
        %v1035 = vmul.f32 %v1033, %v686
        %v1036 = vmul.f32 %v1033, %v687
        %v1040 = vrot.slane %v1034, 2
        %v1041 = vrot.slane %v1035, 2
        %v1042 = vsel %vm993, %v1040, %v1041
        %v1043 = vrot.slane %v1036, 2
        %v1044 = vsel %vm993, %v1041, %v1043
        %1045 = vrot.lane.b32.xlu0 %v1042, 126
        %v1046 = vpop.permute.xlu0 %1045
        %1047 = vrot.lane.b32.xlu0 %v1044, 126
        %v1048 = vpop.permute.xlu0 %1047
        %1049 = vrot.lane.b32.xlu0 %v1043, 126
        %v1050 = vpop.permute.xlu0 %1049
        %v1054 = vadd.f32 %v957, %v1046
        %v1055 = vadd.f32 %v958, %v1048
        %v1056 = vadd.f32 %v959, %v1050
        %s1057 = sld [smem:[#allocation10 + $0x25]]
        %v1058 = vstv %s1057
        %v1059 = vmul.f32 %v1058, %v685
        %v1060 = vmul.f32 %v1058, %v686
        %v1061 = vmul.f32 %v1058, %v687
        %v1065 = vrot.slane %v1059, 2
        %v1066 = vrot.slane %v1060, 2
        %v1067 = vsel %vm993, %v1065, %v1066
        %v1068 = vrot.slane %v1061, 2
        %v1069 = vsel %vm993, %v1066, %v1068
        %1070 = vrot.lane.b32.xlu0 %v1067, 126
        %v1071 = vpop.permute.xlu0 %1070
        %1072 = vrot.lane.b32.xlu0 %v1069, 126
        %v1073 = vpop.permute.xlu0 %1072
        %1074 = vrot.lane.b32.xlu0 %v1068, 126
        %v1075 = vpop.permute.xlu0 %1074
        %v1079 = vadd.f32 %v982, %v1071
        %v1080 = vadd.f32 %v983, %v1073
        %v1081 = vadd.f32 %v984, %v1075
        %s1082 = sld [smem:[#allocation10 + $0x2c]]
        %v1083 = vstv %s1082
        %v1084 = vmul.f32 %v1083, %v685
        %v1085 = vmul.f32 %v1083, %v686
        %v1086 = vmul.f32 %v1083, %v687
        %v1090 = vrot.slane %v1084, 6
        %v1091 = vrot.slane %v1085, 6
        %v1092 = vsel %vm329, %v1090, %v1091
        %v1093 = vrot.slane %v1086, 6
        %v1094 = vsel %vm329, %v1091, %v1093
        %1095 = vrot.lane.b32.xlu0 %v1092, 126
        %v1096 = vpop.permute.xlu0 %1095
        %1097 = vrot.lane.b32.xlu0 %v1094, 126
        %v1098 = vpop.permute.xlu0 %1097
        %v1101 = vadd.f32 %v1005, %v1096
        %v1102 = vadd.f32 %v1006, %v1098
        %s1103 = sld [smem:[#allocation10 + $0x3]]
        %v1104 = vstv %s1103
        %v1105 = vmul.f32 %v1104, %v685
        %v1106 = vmul.f32 %v1104, %v686
        %vm1109 = vcmask 1040384
        %v1110 = vrot.slane %v1105, 7
        %v1111 = vrot.slane %v1106, 7
        %v1112 = vsel %vm1109, %v1110, %v1111
        %1113 = vrot.lane.b32.xlu0 %v1110, 125
        %v1114 = vpop.permute.xlu0 %1113
        %1115 = vrot.lane.b32.xlu0 %v1112, 125
        %v1116 = vpop.permute.xlu0 %1115
        %1117 = vrot.lane.b32.xlu0 %v1111, 125
        %v1118 = vpop.permute.xlu0 %1117
        %v1122 = vadd.f32 %v1029, %v1114
        %v1123 = vadd.f32 %v1030, %v1116
        %v1124 = vadd.f32 %v1031, %v1118
        %s1125 = sld [smem:[#allocation10 + $0xa]]
        %v1126 = vstv %s1125
        %v1127 = vmul.f32 %v1126, %v685
        %v1128 = vmul.f32 %v1126, %v686
        %v1129 = vmul.f32 %v1126, %v687
        %v1133 = vrot.slane %v1127, 7
        %v1134 = vrot.slane %v1128, 7
        %v1135 = vsel %vm1109, %v1133, %v1134
        %v1136 = vrot.slane %v1129, 7
        %v1137 = vsel %vm1109, %v1134, %v1136
        %1138 = vrot.lane.b32.xlu0 %v1133, 125
        %v1139 = vpop.permute.xlu0 %1138
        %1140 = vrot.lane.b32.xlu0 %v1135, 125
        %v1141 = vpop.permute.xlu0 %1140
        %1142 = vrot.lane.b32.xlu0 %v1137, 125
        %v1143 = vpop.permute.xlu0 %1142
        %v1147 = vadd.f32 %v1054, %v1139
        %v1148 = vadd.f32 %v1055, %v1141
        %v1149 = vadd.f32 %v1056, %v1143
        %s1150 = sld [smem:[#allocation10 + $0x11]]
        %v1151 = vstv %s1150
        %v1152 = vmul.f32 %v1151, %v685
        %v1153 = vmul.f32 %v1151, %v686
        %v1154 = vmul.f32 %v1151, %v687
        %v1158 = vrot.slane %v1152, 7
        %v1159 = vrot.slane %v1153, 7
        %v1160 = vsel %vm1109, %v1158, %v1159
        %v1161 = vrot.slane %v1154, 7
        %v1162 = vsel %vm1109, %v1159, %v1161
        %1163 = vrot.lane.b32.xlu0 %v1158, 125
        %v1164 = vpop.permute.xlu0 %1163
        %1165 = vrot.lane.b32.xlu0 %v1160, 125
        %v1166 = vpop.permute.xlu0 %1165
        %1167 = vrot.lane.b32.xlu0 %v1162, 125
        %v1168 = vpop.permute.xlu0 %1167
        %v1172 = vadd.f32 %v1079, %v1164
        %v1173 = vadd.f32 %v1080, %v1166
        %v1174 = vadd.f32 %v1081, %v1168
        %s1175 = sld [smem:[#allocation10 + $0x18]]
        %v1176 = vstv %s1175
        %v1177 = vmul.f32 %v1176, %v685
        %v1178 = vmul.f32 %v1176, %v686
        %v1179 = vmul.f32 %v1176, %v687
        %vm1183 = vcmask 1044480
        %v1184 = vrot.slane %v1177, 3
        %v1185 = vrot.slane %v1178, 3
        %v1186 = vsel %vm1183, %v1184, %v1185
        %v1187 = vrot.slane %v1179, 3
        %v1188 = vsel %vm1183, %v1185, %v1187
        %1189 = vrot.lane.b32.xlu0 %v1186, 125
        %v1190 = vpop.permute.xlu0 %1189
        %1191 = vrot.lane.b32.xlu0 %v1188, 125
        %v1192 = vpop.permute.xlu0 %1191
        %v1195 = vadd.f32 %v1101, %v1190
        %v1196 = vadd.f32 %v1102, %v1192
        %s1197 = sld [smem:[#allocation10 + $0x1f]]
        %v1198 = vstv %s1197
        %v1199 = vmul.f32 %v1198, %v685
        %v1200 = vmul.f32 %v1198, %v686
        %v1201 = vmul.f32 %v1198, %v687
        %v1205 = vrot.slane %v1199, 3
        %v1206 = vrot.slane %v1200, 3
        %v1207 = vsel %vm1183, %v1205, %v1206
        %v1208 = vrot.slane %v1201, 3
        %v1209 = vsel %vm1183, %v1206, %v1208
        %1210 = vrot.lane.b32.xlu0 %v1207, 125
        %v1211 = vpop.permute.xlu0 %1210
        %1212 = vrot.lane.b32.xlu0 %v1209, 125
        %v1213 = vpop.permute.xlu0 %1212
        %1214 = vrot.lane.b32.xlu0 %v1208, 125
        %v1215 = vpop.permute.xlu0 %1214
        %v1219 = vadd.f32 %v1122, %v1211
        %v1220 = vadd.f32 %v1123, %v1213
        %v1221 = vadd.f32 %v1124, %v1215
        %s1222 = sld [smem:[#allocation10 + $0x26]]
        %v1223 = vstv %s1222
        %v1224 = vmul.f32 %v1223, %v685
        %v1225 = vmul.f32 %v1223, %v686
        %v1226 = vmul.f32 %v1223, %v687
        %v1230 = vrot.slane %v1224, 3
        %v1231 = vrot.slane %v1225, 3
        %v1232 = vsel %vm1183, %v1230, %v1231
        %v1233 = vrot.slane %v1226, 3
        %v1234 = vsel %vm1183, %v1231, %v1233
        %1235 = vrot.lane.b32.xlu0 %v1232, 125
        %v1236 = vpop.permute.xlu0 %1235
        %1237 = vrot.lane.b32.xlu0 %v1234, 125
        %v1238 = vpop.permute.xlu0 %1237
        %1239 = vrot.lane.b32.xlu0 %v1233, 125
        %v1240 = vpop.permute.xlu0 %1239
        %v1244 = vadd.f32 %v1147, %v1236
        %v1245 = vadd.f32 %v1148, %v1238
        %v1246 = vadd.f32 %v1149, %v1240
        %s1247 = sld [smem:[#allocation10 + $0x2d]]
        %v1248 = vstv %s1247
        %v1249 = vmul.f32 %v1248, %v685
        %v1250 = vmul.f32 %v1248, %v686
        %v1251 = vmul.f32 %v1248, %v687
        %v1255 = vrot.slane %v1249, 3
        %v1256 = vrot.slane %v1250, 3
        %v1257 = vsel %vm1183, %v1255, %v1256
        %v1258 = vrot.slane %v1251, 3
        %v1259 = vsel %vm1183, %v1256, %v1258
        %1260 = vrot.lane.b32.xlu0 %v1257, 125
        %v1261 = vpop.permute.xlu0 %1260
        %1262 = vrot.lane.b32.xlu0 %v1259, 125
        %v1263 = vpop.permute.xlu0 %1262
        %1264 = vrot.lane.b32.xlu0 %v1258, 125
        %v1265 = vpop.permute.xlu0 %1264
        %v1269 = vadd.f32 %v1172, %v1261
        %v1270 = vadd.f32 %v1173, %v1263
        %v1271 = vadd.f32 %v1174, %v1265
        %s1272 = sld [smem:[#allocation10 + $0x4]]
        %v1273 = vstv %s1272
        %v1274 = vmul.f32 %v1273, %v685
        %v1275 = vmul.f32 %v1273, %v686
        %1278 = vrot.lane.b32.xlu0 %v1274, 124
        %v1279 = vpop.permute.xlu0 %1278
        %1280 = vrot.lane.b32.xlu0 %v1275, 124
        %v1281 = vpop.permute.xlu0 %1280
        %v1284 = vadd.f32 %v1195, %v1279
        %v1285 = vadd.f32 %v1196, %v1281
        %s1286 = sld [smem:[#allocation10 + $0xb]]
        %v1287 = vstv %s1286
        %v1288 = vmul.f32 %v1287, %v685
        %v1289 = vmul.f32 %v1287, %v686
        %v1290 = vmul.f32 %v1287, %v687
        %1294 = vrot.lane.b32.xlu0 %v1288, 124
        %v1295 = vpop.permute.xlu0 %1294
        %1296 = vrot.lane.b32.xlu0 %v1289, 124
        %v1297 = vpop.permute.xlu0 %1296
        %1298 = vrot.lane.b32.xlu0 %v1290, 124
        %v1299 = vpop.permute.xlu0 %1298
        %v1303 = vadd.f32 %v1219, %v1295
        %v1304 = vadd.f32 %v1220, %v1297
        %v1305 = vadd.f32 %v1221, %v1299
        %s1306 = sld [smem:[#allocation10 + $0x12]]
        %v1307 = vstv %s1306
        %v1308 = vmul.f32 %v1307, %v685
        %v1309 = vmul.f32 %v1307, %v686
        %v1310 = vmul.f32 %v1307, %v687
        %1314 = vrot.lane.b32.xlu0 %v1308, 124
        %v1315 = vpop.permute.xlu0 %1314
        %1316 = vrot.lane.b32.xlu0 %v1309, 124
        %v1317 = vpop.permute.xlu0 %1316
        %1318 = vrot.lane.b32.xlu0 %v1310, 124
        %v1319 = vpop.permute.xlu0 %1318
        %v1323 = vadd.f32 %v1244, %v1315
        %v1324 = vadd.f32 %v1245, %v1317
        %v1325 = vadd.f32 %v1246, %v1319
        %s1326 = sld [smem:[#allocation10 + $0x19]]
        %v1327 = vstv %s1326
        %v1328 = vmul.f32 %v1327, %v685
        %v1329 = vmul.f32 %v1327, %v686
        %v1330 = vmul.f32 %v1327, %v687
        %1334 = vrot.lane.b32.xlu0 %v1328, 124
        %v1335 = vpop.permute.xlu0 %1334
        %1336 = vrot.lane.b32.xlu0 %v1329, 124
        %v1337 = vpop.permute.xlu0 %1336
        %1338 = vrot.lane.b32.xlu0 %v1330, 124
        %v1339 = vpop.permute.xlu0 %1338
        %v1343 = vadd.f32 %v1269, %v1335
        %v1344 = vadd.f32 %v1270, %v1337
        %v1345 = vadd.f32 %v1271, %v1339
        %s1346 = sld [smem:[#allocation10 + $0x20]]
        %v1347 = vstv %s1346
        %v1348 = vmul.f32 %v1347, %v685
        %v1349 = vmul.f32 %v1347, %v686
        %v1350 = vmul.f32 %v1347, %v687
        %v1354 = vrot.slane %v1348, 4
        %v1355 = vrot.slane %v1349, 4
        %v1356 = vsel %vm726, %v1354, %v1355
        %v1357 = vrot.slane %v1350, 4
        %v1358 = vsel %vm726, %v1355, %v1357
        %1359 = vrot.lane.b32.xlu0 %v1356, 124
        %v1360 = vpop.permute.xlu0 %1359
        %1361 = vrot.lane.b32.xlu0 %v1358, 124
        %v1362 = vpop.permute.xlu0 %1361
        %v1365 = vadd.f32 %v1284, %v1360
        %v1366 = vadd.f32 %v1285, %v1362
        %s1367 = sld [smem:[#allocation10 + $0x27]]
        %v1368 = vstv %s1367
        %v1369 = vmul.f32 %v1368, %v685
        %v1370 = vmul.f32 %v1368, %v686
        %v1371 = vmul.f32 %v1368, %v687
        %v1375 = vrot.slane %v1369, 4
        %v1376 = vrot.slane %v1370, 4
        %v1377 = vsel %vm726, %v1375, %v1376
        %v1378 = vrot.slane %v1371, 4
        %v1379 = vsel %vm726, %v1376, %v1378
        %1380 = vrot.lane.b32.xlu0 %v1377, 124
        %v1381 = vpop.permute.xlu0 %1380
        %1382 = vrot.lane.b32.xlu0 %v1379, 124
        %v1383 = vpop.permute.xlu0 %1382
        %1384 = vrot.lane.b32.xlu0 %v1378, 124
        %v1385 = vpop.permute.xlu0 %1384
        %v1389 = vadd.f32 %v1303, %v1381
        %v1390 = vadd.f32 %v1304, %v1383
        %v1391 = vadd.f32 %v1305, %v1385
        %s1392 = sld [smem:[#allocation10 + $0x2e]]
        %v1393 = vstv %s1392
        %v1394 = vmul.f32 %v1393, %v685
        %v1395 = vmul.f32 %v1393, %v686
        %v1396 = vmul.f32 %v1393, %v687
        %v1400 = vrot.slane %v1394, 4
        %v1401 = vrot.slane %v1395, 4
        %v1402 = vsel %vm726, %v1400, %v1401
        %v1403 = vrot.slane %v1396, 4
        %v1404 = vsel %vm726, %v1401, %v1403
        %1405 = vrot.lane.b32.xlu0 %v1402, 124
        %v1406 = vpop.permute.xlu0 %1405
        %1407 = vrot.lane.b32.xlu0 %v1404, 124
        %v1408 = vpop.permute.xlu0 %1407
        %1409 = vrot.lane.b32.xlu0 %v1403, 124
        %v1410 = vpop.permute.xlu0 %1409
        %v1414 = vadd.f32 %v1323, %v1406
        %v1415 = vadd.f32 %v1324, %v1408
        %v1416 = vadd.f32 %v1325, %v1410
        %s1417 = sld [smem:[#allocation10 + $0x5]]
        %v1418 = vstv %s1417
        %v1419 = vmul.f32 %v1418, %v685
        %v1420 = vmul.f32 %v1418, %v686
        %v1423 = vrot.slane %v1419, 5
        %v1424 = vrot.slane %v1420, 5
        %v1425 = vsel %vm780, %v1423, %v1424
        %1426 = vrot.lane.b32.xlu0 %v1423, 123
        %v1427 = vpop.permute.xlu0 %1426
        %1428 = vrot.lane.b32.xlu0 %v1425, 123
        %v1429 = vpop.permute.xlu0 %1428
        %1430 = vrot.lane.b32.xlu0 %v1424, 123
        %v1431 = vpop.permute.xlu0 %1430
        %v1435 = vadd.f32 %v1343, %v1427
        %v1436 = vadd.f32 %v1344, %v1429
        %v1437 = vadd.f32 %v1345, %v1431
        %s1438 = sld [smem:[#allocation10 + $0xc]]
        %v1439 = vstv %s1438
        %v1440 = vmul.f32 %v1439, %v685
        %v1441 = vmul.f32 %v1439, %v686
        %v1442 = vmul.f32 %v1439, %v687
        %v1446 = vrot.slane %v1440, 1
        %v1447 = vrot.slane %v1441, 1
        %v1448 = vsel %vm804, %v1446, %v1447
        %v1449 = vrot.slane %v1442, 1
        %v1450 = vsel %vm804, %v1447, %v1449
        %1451 = vrot.lane.b32.xlu0 %v1448, 123
        %v1452 = vpop.permute.xlu0 %1451
        %1453 = vrot.lane.b32.xlu0 %v1450, 123
        %v1454 = vpop.permute.xlu0 %1453
        %v1457 = vadd.f32 %v1365, %v1452
        %v1458 = vadd.f32 %v1366, %v1454
        %s1459 = sld [smem:[#allocation10 + $0x13]]
        %v1460 = vstv %s1459
        %v1461 = vmul.f32 %v1460, %v685
        %v1462 = vmul.f32 %v1460, %v686
        %v1463 = vmul.f32 %v1460, %v687
        %v1467 = vrot.slane %v1461, 1
        %v1468 = vrot.slane %v1462, 1
        %v1469 = vsel %vm804, %v1467, %v1468
        %v1470 = vrot.slane %v1463, 1
        %v1471 = vsel %vm804, %v1468, %v1470
        %1472 = vrot.lane.b32.xlu0 %v1469, 123
        %v1473 = vpop.permute.xlu0 %1472
        %1474 = vrot.lane.b32.xlu0 %v1471, 123
        %v1475 = vpop.permute.xlu0 %1474
        %1476 = vrot.lane.b32.xlu0 %v1470, 123
        %v1477 = vpop.permute.xlu0 %1476
        %v1481 = vadd.f32 %v1389, %v1473
        %v1482 = vadd.f32 %v1390, %v1475
        %v1483 = vadd.f32 %v1391, %v1477
        %s1484 = sld [smem:[#allocation10 + $0x1a]]
        %v1485 = vstv %s1484
        %v1486 = vmul.f32 %v1485, %v685
        %v1487 = vmul.f32 %v1485, %v686
        %v1488 = vmul.f32 %v1485, %v687
        %v1492 = vrot.slane %v1486, 1
        %v1493 = vrot.slane %v1487, 1
        %v1494 = vsel %vm804, %v1492, %v1493
        %v1495 = vrot.slane %v1488, 1
        %v1496 = vsel %vm804, %v1493, %v1495
        %1497 = vrot.lane.b32.xlu0 %v1494, 123
        %v1498 = vpop.permute.xlu0 %1497
        %1499 = vrot.lane.b32.xlu0 %v1496, 123
        %v1500 = vpop.permute.xlu0 %1499
        %1501 = vrot.lane.b32.xlu0 %v1495, 123
        %v1502 = vpop.permute.xlu0 %1501
        %v1506 = vadd.f32 %v1414, %v1498
        %v1507 = vadd.f32 %v1415, %v1500
        %v1508 = vadd.f32 %v1416, %v1502
        %s1509 = sld [smem:[#allocation10 + $0x21]]
        %v1510 = vstv %s1509
        %v1511 = vmul.f32 %v1510, %v685
        %v1512 = vmul.f32 %v1510, %v686
        %v1513 = vmul.f32 %v1510, %v687
        %v1517 = vrot.slane %v1511, 1
        %v1518 = vrot.slane %v1512, 1
        %v1519 = vsel %vm804, %v1517, %v1518
        %v1520 = vrot.slane %v1513, 1
        %v1521 = vsel %vm804, %v1518, %v1520
        %1522 = vrot.lane.b32.xlu0 %v1519, 123
        %v1523 = vpop.permute.xlu0 %1522
        %1524 = vrot.lane.b32.xlu0 %v1521, 123
        %v1525 = vpop.permute.xlu0 %1524
        %1526 = vrot.lane.b32.xlu0 %v1520, 123
        %v1527 = vpop.permute.xlu0 %1526
        %v1531 = vadd.f32 %v1435, %v1523
        %v1532 = vadd.f32 %v1436, %v1525
        %v1533 = vadd.f32 %v1437, %v1527
        %s1534 = sld [smem:[#allocation10 + $0x28]]
        %v1535 = vstv %s1534
        %v1536 = vmul.f32 %v1535, %v685
        %v1537 = vmul.f32 %v1535, %v686
        %v1538 = vmul.f32 %v1535, %v687
        %v1542 = vrot.slane %v1536, 5
        %v1543 = vrot.slane %v1537, 5
        %v1544 = vsel %vm780, %v1542, %v1543
        %v1545 = vrot.slane %v1538, 5
        %v1546 = vsel %vm780, %v1543, %v1545
        %1547 = vrot.lane.b32.xlu0 %v1544, 123
        %v1548 = vpop.permute.xlu0 %1547
        %1549 = vrot.lane.b32.xlu0 %v1546, 123
        %v1550 = vpop.permute.xlu0 %1549
        %v1553 = vadd.f32 %v1457, %v1548
        %v1554 = vadd.f32 %v1458, %v1550
        %s1555 = sld [smem:[#allocation10 + $0x2f]]
        %v1556 = vstv %s1555
        %v1557 = vmul.f32 %v1556, %v685
        %v1558 = vmul.f32 %v1556, %v686
        %v1559 = vmul.f32 %v1556, %v687
        %v1563 = vrot.slane %v1557, 5
        %v1564 = vrot.slane %v1558, 5
        %v1565 = vsel %vm780, %v1563, %v1564
        %v1566 = vrot.slane %v1559, 5
        %v1567 = vsel %vm780, %v1564, %v1566
        %1568 = vrot.lane.b32.xlu0 %v1565, 123
        %v1569 = vpop.permute.xlu0 %1568
        %1570 = vrot.lane.b32.xlu0 %v1567, 123
        %v1571 = vpop.permute.xlu0 %1570
        %1572 = vrot.lane.b32.xlu0 %v1566, 123
        %v1573 = vpop.permute.xlu0 %1572
        %v1577 = vadd.f32 %v1481, %v1569
        %v1578 = vadd.f32 %v1482, %v1571
        %v1579 = vadd.f32 %v1483, %v1573
        %s1580 = sld [smem:[#allocation10 + $0x6]]
        %v1581 = vstv %s1580
        %v1582 = vmul.f32 %v1581, %v685
        %v1583 = vmul.f32 %v1581, %v686
        %v1586 = vrot.slane %v1582, 6
        %v1587 = vrot.slane %v1583, 6
        %v1588 = vsel %vm329, %v1586, %v1587
        %1589 = vrot.lane.b32.xlu0 %v1586, 122
        %v1590 = vpop.permute.xlu0 %1589
        %1591 = vrot.lane.b32.xlu0 %v1588, 122
        %v1592 = vpop.permute.xlu0 %1591
        %1593 = vrot.lane.b32.xlu0 %v1587, 122
        %v1594 = vpop.permute.xlu0 %1593
        %v1598 = vadd.f32 %v1506, %v1590
        %v1599 = vadd.f32 %v1507, %v1592
        %v1600 = vadd.f32 %v1508, %v1594
        %s1601 = sld [smem:[#allocation10 + $0xd]]
        %v1602 = vstv %s1601
        %v1603 = vmul.f32 %v1602, %v685
        %v1604 = vmul.f32 %v1602, %v686
        %v1605 = vmul.f32 %v1602, %v687
        %v1609 = vrot.slane %v1603, 6
        %v1610 = vrot.slane %v1604, 6
        %v1611 = vsel %vm329, %v1609, %v1610
        %v1612 = vrot.slane %v1605, 6
        %v1613 = vsel %vm329, %v1610, %v1612
        %1614 = vrot.lane.b32.xlu0 %v1609, 122
        %v1615 = vpop.permute.xlu0 %1614
        %1616 = vrot.lane.b32.xlu0 %v1611, 122
        %v1617 = vpop.permute.xlu0 %1616
        %1618 = vrot.lane.b32.xlu0 %v1613, 122
        %v1619 = vpop.permute.xlu0 %1618
        %v1623 = vadd.f32 %v1531, %v1615
        %v1624 = vadd.f32 %v1532, %v1617
        %v1625 = vadd.f32 %v1533, %v1619
        %s1626 = sld [smem:[#allocation10 + $0x14]]
        %v1627 = vstv %s1626
        %v1628 = vmul.f32 %v1627, %v685
        %v1629 = vmul.f32 %v1627, %v686
        %v1630 = vmul.f32 %v1627, %v687
        %v1634 = vrot.slane %v1628, 2
        %v1635 = vrot.slane %v1629, 2
        %v1636 = vsel %vm993, %v1634, %v1635
        %v1637 = vrot.slane %v1630, 2
        %v1638 = vsel %vm993, %v1635, %v1637
        %1639 = vrot.lane.b32.xlu0 %v1636, 122
        %v1640 = vpop.permute.xlu0 %1639
        %1641 = vrot.lane.b32.xlu0 %v1638, 122
        %v1642 = vpop.permute.xlu0 %1641
        %v1645 = vadd.f32 %v1553, %v1640
        %v1646 = vadd.f32 %v1554, %v1642
        %s1647 = sld [smem:[#allocation10 + $0x1b]]
        %v1648 = vstv %s1647
        %v1649 = vmul.f32 %v1648, %v685
        %v1650 = vmul.f32 %v1648, %v686
        %v1651 = vmul.f32 %v1648, %v687
        %v1655 = vrot.slane %v1649, 2
        %v1656 = vrot.slane %v1650, 2
        %v1657 = vsel %vm993, %v1655, %v1656
        %v1658 = vrot.slane %v1651, 2
        %v1659 = vsel %vm993, %v1656, %v1658
        %1660 = vrot.lane.b32.xlu0 %v1657, 122
        %v1661 = vpop.permute.xlu0 %1660
        %1662 = vrot.lane.b32.xlu0 %v1659, 122
        %v1663 = vpop.permute.xlu0 %1662
        %1664 = vrot.lane.b32.xlu0 %v1658, 122
        %v1665 = vpop.permute.xlu0 %1664
        %v1669 = vadd.f32 %v1577, %v1661
        %v1670 = vadd.f32 %v1578, %v1663
        %v1671 = vadd.f32 %v1579, %v1665
        %s1672 = sld [smem:[#allocation10 + $0x22]]
        %v1673 = vstv %s1672
        %v1674 = vmul.f32 %v1673, %v685
        %v1675 = vmul.f32 %v1673, %v686
        %v1676 = vmul.f32 %v1673, %v687
        %v1680 = vrot.slane %v1674, 2
        %v1681 = vrot.slane %v1675, 2
        %v1682 = vsel %vm993, %v1680, %v1681
        %v1683 = vrot.slane %v1676, 2
        %v1684 = vsel %vm993, %v1681, %v1683
        %1685 = vrot.lane.b32.xlu0 %v1682, 122
        %v1686 = vpop.permute.xlu0 %1685
        %1687 = vrot.lane.b32.xlu0 %v1684, 122
        %v1688 = vpop.permute.xlu0 %1687
        %1689 = vrot.lane.b32.xlu0 %v1683, 122
        %v1690 = vpop.permute.xlu0 %1689
        %v1694 = vadd.f32 %v1598, %v1686
        %v1695 = vadd.f32 %v1599, %v1688
        %v1696 = vadd.f32 %v1600, %v1690
        %s1697 = sld [smem:[#allocation10 + $0x29]]
        %v1698 = vstv %s1697
        %v1699 = vmul.f32 %v1698, %v685
        %v1700 = vmul.f32 %v1698, %v686
        %v1701 = vmul.f32 %v1698, %v687
        %v1705 = vrot.slane %v1699, 2
        %v1706 = vrot.slane %v1700, 2
        %v1707 = vsel %vm993, %v1705, %v1706
        %v1708 = vrot.slane %v1701, 2
        %v1709 = vsel %vm993, %v1706, %v1708
        %1710 = vrot.lane.b32.xlu0 %v1707, 122
        %v1711 = vpop.permute.xlu0 %1710
        %1712 = vrot.lane.b32.xlu0 %v1709, 122
        %v1713 = vpop.permute.xlu0 %1712
        %1714 = vrot.lane.b32.xlu0 %v1708, 122
        %v1715 = vpop.permute.xlu0 %1714
        %v1719 = vadd.f32 %v1623, %v1711
        %v1720 = vadd.f32 %v1624, %v1713
        %v1721 = vadd.f32 %v1625, %v1715
        %s1722 = sld [smem:[#allocation10 + $0x30]]
        %v1723 = vstv %s1722
        %v1724 = vmul.f32 %v1723, %v685
        %v1725 = vmul.f32 %v1723, %v686
        %v1726 = vmul.f32 %v1723, %v687
        %v1730 = vrot.slane %v1724, 6
        %v1731 = vrot.slane %v1725, 6
        %v1732 = vsel %vm329, %v1730, %v1731
        %v1733 = vrot.slane %v1726, 6
        %v1734 = vsel %vm329, %v1731, %v1733
        %1735 = vrot.lane.b32.xlu0 %v1732, 122
        %v1736 = vpop.permute.xlu0 %1735
        %1737 = vrot.lane.b32.xlu0 %v1734, 122
        %v1738 = vpop.permute.xlu0 %1737
        %v1741 = vadd.f32 %v1645, %v1736
        %v1742 = vadd.f32 %v1646, %v1738
        %v1743 = vld [vmem:[%s561] sm:$0xff]
        %v1744 = vld [vmem:[%s561 + $0x8] sm:$0xff]
        %v1745 = vld [vmem:[%s561 + $0x10] sm:$0x3f]
        %s1746 = sld [smem:[#allocation10 + $0x31]]
        %v1747 = vstv %s1746
        %v1748 = vmul.f32 %v1747, %v1743
        %v1749 = vmul.f32 %v1747, %v1744
        %v1752 = vrot.slane %v1748, 7
        %v1753 = vrot.slane %v1749, 7
        %v1754 = vsel %vm1109, %v1752, %v1753
        %v1758 = vadd.f32 %v1669, %v1752
        %v1759 = vadd.f32 %v1670, %v1754
        %v1760 = vadd.f32 %v1671, %v1753
        %s1761 = sld [smem:[#allocation10 + $0x38]]
        %v1762 = vstv %s1761
        %v1763 = vmul.f32 %v1762, %v1743
        %v1764 = vmul.f32 %v1762, %v1744
        %v1765 = vmul.f32 %v1762, %v1745
        %v1769 = vrot.slane %v1763, 7
        %v1770 = vrot.slane %v1764, 7
        %v1771 = vsel %vm1109, %v1769, %v1770
        %v1772 = vrot.slane %v1765, 7
        %v1773 = vsel %vm1109, %v1770, %v1772
        %v1777 = vadd.f32 %v1694, %v1769
        %v1778 = vadd.f32 %v1695, %v1771
        %v1779 = vadd.f32 %v1696, %v1773
        %s1780 = sld [smem:[#allocation10 + $0x3f]]
        %v1781 = vstv %s1780
        %v1782 = vmul.f32 %v1781, %v1743
        %v1783 = vmul.f32 %v1781, %v1744
        %v1784 = vmul.f32 %v1781, %v1745
        %v1788 = vrot.slane %v1782, 7
        %v1789 = vrot.slane %v1783, 7
        %v1790 = vsel %vm1109, %v1788, %v1789
        %v1791 = vrot.slane %v1784, 7
        %v1792 = vsel %vm1109, %v1789, %v1791
        %v1796 = vadd.f32 %v1719, %v1788
        %v1797 = vadd.f32 %v1720, %v1790
        %v1798 = vadd.f32 %v1721, %v1792
        %s1799 = sld [smem:[#allocation10 + $0x46]]
        %v1800 = vstv %s1799
        %v1801 = vmul.f32 %v1800, %v1743
        %v1802 = vmul.f32 %v1800, %v1744
        %v1803 = vmul.f32 %v1800, %v1745
        %v1807 = vrot.slane %v1801, 3
        %v1808 = vrot.slane %v1802, 3
        %v1809 = vsel %vm1183, %v1807, %v1808
        %v1810 = vrot.slane %v1803, 3
        %v1811 = vsel %vm1183, %v1808, %v1810
        %v1814 = vadd.f32 %v1741, %v1809
        %v1815 = vadd.f32 %v1742, %v1811
        %s1816 = sld [smem:[#allocation10 + $0x4d]]
        %v1817 = vstv %s1816
        %v1818 = vmul.f32 %v1817, %v1743
        %v1819 = vmul.f32 %v1817, %v1744
        %v1820 = vmul.f32 %v1817, %v1745
        %v1824 = vrot.slane %v1818, 3
        %v1825 = vrot.slane %v1819, 3
        %v1826 = vsel %vm1183, %v1824, %v1825
        %v1827 = vrot.slane %v1820, 3
        %v1828 = vsel %vm1183, %v1825, %v1827
        %v1832 = vadd.f32 %v1758, %v1826
        %v1833 = vadd.f32 %v1759, %v1828
        %v1834 = vadd.f32 %v1760, %v1827
        %s1835 = sld [smem:[#allocation10 + $0x54]]
        %v1836 = vstv %s1835
        %v1837 = vmul.f32 %v1836, %v1743
        %v1838 = vmul.f32 %v1836, %v1744
        %v1839 = vmul.f32 %v1836, %v1745
        %v1843 = vrot.slane %v1837, 3
        %v1844 = vrot.slane %v1838, 3
        %v1845 = vsel %vm1183, %v1843, %v1844
        %v1846 = vrot.slane %v1839, 3
        %v1847 = vsel %vm1183, %v1844, %v1846
        %v1851 = vadd.f32 %v1777, %v1845
        %v1852 = vadd.f32 %v1778, %v1847
        %v1853 = vadd.f32 %v1779, %v1846
        %s1854 = sld [smem:[#allocation10 + $0x5b]]
        %v1855 = vstv %s1854
        %v1856 = vmul.f32 %v1855, %v1743
        %v1857 = vmul.f32 %v1855, %v1744
        %v1858 = vmul.f32 %v1855, %v1745
        %v1862 = vrot.slane %v1856, 3
        %v1863 = vrot.slane %v1857, 3
        %v1864 = vsel %vm1183, %v1862, %v1863
        %v1865 = vrot.slane %v1858, 3
        %v1866 = vsel %vm1183, %v1863, %v1865
        %v1870 = vadd.f32 %v1796, %v1864
        %v1871 = vadd.f32 %v1797, %v1866
        %v1872 = vadd.f32 %v1798, %v1865
        %s1873 = sld [smem:[#allocation10 + $0x32]]
        %v1874 = vstv %s1873
        %v1875 = vmul.f32 %v1874, %v1743
        %v1876 = vmul.f32 %v1874, %v1744
        %1879 = vrot.lane.b32.xlu0 %v1875, 127
        %v1880 = vpop.permute.xlu0 %1879
        %1881 = vrot.lane.b32.xlu0 %v1876, 127
        %v1882 = vpop.permute.xlu0 %1881
        %v1885 = vadd.f32 %v1814, %v1880
        %v1886 = vadd.f32 %v1815, %v1882
        %s1887 = sld [smem:[#allocation10 + $0x39]]
        %v1888 = vstv %s1887
        %v1889 = vmul.f32 %v1888, %v1743
        %v1890 = vmul.f32 %v1888, %v1744
        %v1891 = vmul.f32 %v1888, %v1745
        %1895 = vrot.lane.b32.xlu0 %v1889, 127
        %v1896 = vpop.permute.xlu0 %1895
        %1897 = vrot.lane.b32.xlu0 %v1890, 127
        %v1898 = vpop.permute.xlu0 %1897
        %1899 = vrot.lane.b32.xlu0 %v1891, 127
        %v1900 = vpop.permute.xlu0 %1899
        %v1904 = vadd.f32 %v1832, %v1896
        %v1905 = vadd.f32 %v1833, %v1898
        %v1906 = vadd.f32 %v1834, %v1900
        %s1907 = sld [smem:[#allocation10 + $0x40]]
        %v1908 = vstv %s1907
        %v1909 = vmul.f32 %v1908, %v1743
        %v1910 = vmul.f32 %v1908, %v1744
        %v1911 = vmul.f32 %v1908, %v1745
        %1915 = vrot.lane.b32.xlu0 %v1909, 127
        %v1916 = vpop.permute.xlu0 %1915
        %1917 = vrot.lane.b32.xlu0 %v1910, 127
        %v1918 = vpop.permute.xlu0 %1917
        %1919 = vrot.lane.b32.xlu0 %v1911, 127
        %v1920 = vpop.permute.xlu0 %1919
        %v1924 = vadd.f32 %v1851, %v1916
        %v1925 = vadd.f32 %v1852, %v1918
        %v1926 = vadd.f32 %v1853, %v1920
        %s1927 = sld [smem:[#allocation10 + $0x47]]
        %v1928 = vstv %s1927
        %v1929 = vmul.f32 %v1928, %v1743
        %v1930 = vmul.f32 %v1928, %v1744
        %v1931 = vmul.f32 %v1928, %v1745
        %1935 = vrot.lane.b32.xlu0 %v1929, 127
        %v1936 = vpop.permute.xlu0 %1935
        %1937 = vrot.lane.b32.xlu0 %v1930, 127
        %v1938 = vpop.permute.xlu0 %1937
        %1939 = vrot.lane.b32.xlu0 %v1931, 127
        %v1940 = vpop.permute.xlu0 %1939
        %v1944 = vadd.f32 %v1870, %v1936
        %v1945 = vadd.f32 %v1871, %v1938
        %v1946 = vadd.f32 %v1872, %v1940
        %s1947 = sld [smem:[#allocation10 + $0x4e]]
        %v1948 = vstv %s1947
        %v1949 = vmul.f32 %v1948, %v1743
        %v1950 = vmul.f32 %v1948, %v1744
        %v1951 = vmul.f32 %v1948, %v1745
        %v1955 = vrot.slane %v1949, 4
        %v1956 = vrot.slane %v1950, 4
        %v1957 = vsel %vm726, %v1955, %v1956
        %v1958 = vrot.slane %v1951, 4
        %v1959 = vsel %vm726, %v1956, %v1958
        %1960 = vrot.lane.b32.xlu0 %v1957, 127
        %v1961 = vpop.permute.xlu0 %1960
        %1962 = vrot.lane.b32.xlu0 %v1959, 127
        %v1963 = vpop.permute.xlu0 %1962
        %v1966 = vadd.f32 %v1885, %v1961
        %v1967 = vadd.f32 %v1886, %v1963
        %s1968 = sld [smem:[#allocation10 + $0x55]]
        %v1969 = vstv %s1968
        %v1970 = vmul.f32 %v1969, %v1743
        %v1971 = vmul.f32 %v1969, %v1744
        %v1972 = vmul.f32 %v1969, %v1745
        %v1976 = vrot.slane %v1970, 4
        %v1977 = vrot.slane %v1971, 4
        %v1978 = vsel %vm726, %v1976, %v1977
        %v1979 = vrot.slane %v1972, 4
        %v1980 = vsel %vm726, %v1977, %v1979
        %1981 = vrot.lane.b32.xlu0 %v1978, 127
        %v1982 = vpop.permute.xlu0 %1981
        %1983 = vrot.lane.b32.xlu0 %v1980, 127
        %v1984 = vpop.permute.xlu0 %1983
        %1985 = vrot.lane.b32.xlu0 %v1979, 127
        %v1986 = vpop.permute.xlu0 %1985
        %v1990 = vadd.f32 %v1904, %v1982
        %v1991 = vadd.f32 %v1905, %v1984
        %v1992 = vadd.f32 %v1906, %v1986
        %s1993 = sld [smem:[#allocation10 + $0x5c]]
        %v1994 = vstv %s1993
        %v1995 = vmul.f32 %v1994, %v1743
        %v1996 = vmul.f32 %v1994, %v1744
        %v1997 = vmul.f32 %v1994, %v1745
        %v2001 = vrot.slane %v1995, 4
        %v2002 = vrot.slane %v1996, 4
        %v2003 = vsel %vm726, %v2001, %v2002
        %v2004 = vrot.slane %v1997, 4
        %v2005 = vsel %vm726, %v2002, %v2004
        %2006 = vrot.lane.b32.xlu0 %v2003, 127
        %v2007 = vpop.permute.xlu0 %2006
        %2008 = vrot.lane.b32.xlu0 %v2005, 127
        %v2009 = vpop.permute.xlu0 %2008
        %2010 = vrot.lane.b32.xlu0 %v2004, 127
        %v2011 = vpop.permute.xlu0 %2010
        %v2015 = vadd.f32 %v1924, %v2007
        %v2016 = vadd.f32 %v1925, %v2009
        %v2017 = vadd.f32 %v1926, %v2011
        %s2018 = sld [smem:[#allocation10 + $0x33]]
        %v2019 = vstv %s2018
        %v2020 = vmul.f32 %v2019, %v1743
        %v2021 = vmul.f32 %v2019, %v1744
        %v2024 = vrot.slane %v2020, 5
        %v2025 = vrot.slane %v2021, 5
        %v2026 = vsel %vm780, %v2024, %v2025
        %2027 = vrot.lane.b32.xlu0 %v2024, 126
        %v2028 = vpop.permute.xlu0 %2027
        %2029 = vrot.lane.b32.xlu0 %v2026, 126
        %v2030 = vpop.permute.xlu0 %2029
        %2031 = vrot.lane.b32.xlu0 %v2025, 126
        %v2032 = vpop.permute.xlu0 %2031
        %v2036 = vadd.f32 %v1944, %v2028
        %v2037 = vadd.f32 %v1945, %v2030
        %v2038 = vadd.f32 %v1946, %v2032
        %s2039 = sld [smem:[#allocation10 + $0x3a]]
        %v2040 = vstv %s2039
        %v2041 = vmul.f32 %v2040, %v1743
        %v2042 = vmul.f32 %v2040, %v1744
        %v2043 = vmul.f32 %v2040, %v1745
        %v2047 = vrot.slane %v2041, 1
        %v2048 = vrot.slane %v2042, 1
        %v2049 = vsel %vm804, %v2047, %v2048
        %v2050 = vrot.slane %v2043, 1
        %v2051 = vsel %vm804, %v2048, %v2050
        %2052 = vrot.lane.b32.xlu0 %v2049, 126
        %v2053 = vpop.permute.xlu0 %2052
        %2054 = vrot.lane.b32.xlu0 %v2051, 126
        %v2055 = vpop.permute.xlu0 %2054
        %v2058 = vadd.f32 %v1966, %v2053
        %v2059 = vadd.f32 %v1967, %v2055
        %s2060 = sld [smem:[#allocation10 + $0x41]]
        %v2061 = vstv %s2060
        %v2062 = vmul.f32 %v2061, %v1743
        %v2063 = vmul.f32 %v2061, %v1744
        %v2064 = vmul.f32 %v2061, %v1745
        %v2068 = vrot.slane %v2062, 1
        %v2069 = vrot.slane %v2063, 1
        %v2070 = vsel %vm804, %v2068, %v2069
        %v2071 = vrot.slane %v2064, 1
        %v2072 = vsel %vm804, %v2069, %v2071
        %2073 = vrot.lane.b32.xlu0 %v2070, 126
        %v2074 = vpop.permute.xlu0 %2073
        %2075 = vrot.lane.b32.xlu0 %v2072, 126
        %v2076 = vpop.permute.xlu0 %2075
        %2077 = vrot.lane.b32.xlu0 %v2071, 126
        %v2078 = vpop.permute.xlu0 %2077
        %v2082 = vadd.f32 %v1990, %v2074
        %v2083 = vadd.f32 %v1991, %v2076
        %v2084 = vadd.f32 %v1992, %v2078
        %s2085 = sld [smem:[#allocation10 + $0x48]]
        %v2086 = vstv %s2085
        %v2087 = vmul.f32 %v2086, %v1743
        %v2088 = vmul.f32 %v2086, %v1744
        %v2089 = vmul.f32 %v2086, %v1745
        %v2093 = vrot.slane %v2087, 1
        %v2094 = vrot.slane %v2088, 1
        %v2095 = vsel %vm804, %v2093, %v2094
        %v2096 = vrot.slane %v2089, 1
        %v2097 = vsel %vm804, %v2094, %v2096
        %2098 = vrot.lane.b32.xlu0 %v2095, 126
        %v2099 = vpop.permute.xlu0 %2098
        %2100 = vrot.lane.b32.xlu0 %v2097, 126
        %v2101 = vpop.permute.xlu0 %2100
        %2102 = vrot.lane.b32.xlu0 %v2096, 126
        %v2103 = vpop.permute.xlu0 %2102
        %v2107 = vadd.f32 %v2015, %v2099
        %v2108 = vadd.f32 %v2016, %v2101
        %v2109 = vadd.f32 %v2017, %v2103
        %s2110 = sld [smem:[#allocation10 + $0x4f]]
        %v2111 = vstv %s2110
        %v2112 = vmul.f32 %v2111, %v1743
        %v2113 = vmul.f32 %v2111, %v1744
        %v2114 = vmul.f32 %v2111, %v1745
        %v2118 = vrot.slane %v2112, 1
        %v2119 = vrot.slane %v2113, 1
        %v2120 = vsel %vm804, %v2118, %v2119
        %v2121 = vrot.slane %v2114, 1
        %v2122 = vsel %vm804, %v2119, %v2121
        %2123 = vrot.lane.b32.xlu0 %v2120, 126
        %v2124 = vpop.permute.xlu0 %2123
        %2125 = vrot.lane.b32.xlu0 %v2122, 126
        %v2126 = vpop.permute.xlu0 %2125
        %2127 = vrot.lane.b32.xlu0 %v2121, 126
        %v2128 = vpop.permute.xlu0 %2127
        %v2132 = vadd.f32 %v2036, %v2124
        %v2133 = vadd.f32 %v2037, %v2126
        %v2134 = vadd.f32 %v2038, %v2128
        %s2135 = sld [smem:[#allocation10 + $0x56]]
        %v2136 = vstv %s2135
        %v2137 = vmul.f32 %v2136, %v1743
        %v2138 = vmul.f32 %v2136, %v1744
        %v2139 = vmul.f32 %v2136, %v1745
        %v2143 = vrot.slane %v2137, 5
        %v2144 = vrot.slane %v2138, 5
        %v2145 = vsel %vm780, %v2143, %v2144
        %v2146 = vrot.slane %v2139, 5
        %v2147 = vsel %vm780, %v2144, %v2146
        %2148 = vrot.lane.b32.xlu0 %v2145, 126
        %v2149 = vpop.permute.xlu0 %2148
        %2150 = vrot.lane.b32.xlu0 %v2147, 126
        %v2151 = vpop.permute.xlu0 %2150
        %v2154 = vadd.f32 %v2058, %v2149
        %v2155 = vadd.f32 %v2059, %v2151
        %s2156 = sld [smem:[#allocation10 + $0x5d]]
        %v2157 = vstv %s2156
        %v2158 = vmul.f32 %v2157, %v1743
        %v2159 = vmul.f32 %v2157, %v1744
        %v2160 = vmul.f32 %v2157, %v1745
        %v2164 = vrot.slane %v2158, 5
        %v2165 = vrot.slane %v2159, 5
        %v2166 = vsel %vm780, %v2164, %v2165
        %v2167 = vrot.slane %v2160, 5
        %v2168 = vsel %vm780, %v2165, %v2167
        %2169 = vrot.lane.b32.xlu0 %v2166, 126
        %v2170 = vpop.permute.xlu0 %2169
        %2171 = vrot.lane.b32.xlu0 %v2168, 126
        %v2172 = vpop.permute.xlu0 %2171
        %2173 = vrot.lane.b32.xlu0 %v2167, 126
        %v2174 = vpop.permute.xlu0 %2173
        %v2178 = vadd.f32 %v2082, %v2170
        %v2179 = vadd.f32 %v2083, %v2172
        %v2180 = vadd.f32 %v2084, %v2174
        %s2181 = sld [smem:[#allocation10 + $0x34]]
        %v2182 = vstv %s2181
        %v2183 = vmul.f32 %v2182, %v1743
        %v2184 = vmul.f32 %v2182, %v1744
        %v2187 = vrot.slane %v2183, 6
        %v2188 = vrot.slane %v2184, 6
        %v2189 = vsel %vm329, %v2187, %v2188
        %2190 = vrot.lane.b32.xlu0 %v2187, 125
        %v2191 = vpop.permute.xlu0 %2190
        %2192 = vrot.lane.b32.xlu0 %v2189, 125
        %v2193 = vpop.permute.xlu0 %2192
        %2194 = vrot.lane.b32.xlu0 %v2188, 125
        %v2195 = vpop.permute.xlu0 %2194
        %v2199 = vadd.f32 %v2107, %v2191
        %v2200 = vadd.f32 %v2108, %v2193
        %v2201 = vadd.f32 %v2109, %v2195
        %s2202 = sld [smem:[#allocation10 + $0x3b]]
        %v2203 = vstv %s2202
        %v2204 = vmul.f32 %v2203, %v1743
        %v2205 = vmul.f32 %v2203, %v1744
        %v2206 = vmul.f32 %v2203, %v1745
        %v2210 = vrot.slane %v2204, 6
        %v2211 = vrot.slane %v2205, 6
        %v2212 = vsel %vm329, %v2210, %v2211
        %v2213 = vrot.slane %v2206, 6
        %v2214 = vsel %vm329, %v2211, %v2213
        %2215 = vrot.lane.b32.xlu0 %v2210, 125
        %v2216 = vpop.permute.xlu0 %2215
        %2217 = vrot.lane.b32.xlu0 %v2212, 125
        %v2218 = vpop.permute.xlu0 %2217
        %2219 = vrot.lane.b32.xlu0 %v2214, 125
        %v2220 = vpop.permute.xlu0 %2219
        %v2224 = vadd.f32 %v2132, %v2216
        %v2225 = vadd.f32 %v2133, %v2218
        %v2226 = vadd.f32 %v2134, %v2220
        %s2227 = sld [smem:[#allocation10 + $0x42]]
        %v2228 = vstv %s2227
        %v2229 = vmul.f32 %v2228, %v1743
        %v2230 = vmul.f32 %v2228, %v1744
        %v2231 = vmul.f32 %v2228, %v1745
        %v2235 = vrot.slane %v2229, 2
        %v2236 = vrot.slane %v2230, 2
        %v2237 = vsel %vm993, %v2235, %v2236
        %v2238 = vrot.slane %v2231, 2
        %v2239 = vsel %vm993, %v2236, %v2238
        %2240 = vrot.lane.b32.xlu0 %v2237, 125
        %v2241 = vpop.permute.xlu0 %2240
        %2242 = vrot.lane.b32.xlu0 %v2239, 125
        %v2243 = vpop.permute.xlu0 %2242
        %v2246 = vadd.f32 %v2154, %v2241
        %v2247 = vadd.f32 %v2155, %v2243
        %s2248 = sld [smem:[#allocation10 + $0x49]]
        %v2249 = vstv %s2248
        %v2250 = vmul.f32 %v2249, %v1743
        %v2251 = vmul.f32 %v2249, %v1744
        %v2252 = vmul.f32 %v2249, %v1745
        %v2256 = vrot.slane %v2250, 2
        %v2257 = vrot.slane %v2251, 2
        %v2258 = vsel %vm993, %v2256, %v2257
        %v2259 = vrot.slane %v2252, 2
        %v2260 = vsel %vm993, %v2257, %v2259
        %2261 = vrot.lane.b32.xlu0 %v2258, 125
        %v2262 = vpop.permute.xlu0 %2261
        %2263 = vrot.lane.b32.xlu0 %v2260, 125
        %v2264 = vpop.permute.xlu0 %2263
        %2265 = vrot.lane.b32.xlu0 %v2259, 125
        %v2266 = vpop.permute.xlu0 %2265
        %v2270 = vadd.f32 %v2178, %v2262
        %v2271 = vadd.f32 %v2179, %v2264
        %v2272 = vadd.f32 %v2180, %v2266
        %s2273 = sld [smem:[#allocation10 + $0x50]]
        %v2274 = vstv %s2273
        %v2275 = vmul.f32 %v2274, %v1743
        %v2276 = vmul.f32 %v2274, %v1744
        %v2277 = vmul.f32 %v2274, %v1745
        %v2281 = vrot.slane %v2275, 2
        %v2282 = vrot.slane %v2276, 2
        %v2283 = vsel %vm993, %v2281, %v2282
        %v2284 = vrot.slane %v2277, 2
        %v2285 = vsel %vm993, %v2282, %v2284
        %2286 = vrot.lane.b32.xlu0 %v2283, 125
        %v2287 = vpop.permute.xlu0 %2286
        %2288 = vrot.lane.b32.xlu0 %v2285, 125
        %v2289 = vpop.permute.xlu0 %2288
        %2290 = vrot.lane.b32.xlu0 %v2284, 125
        %v2291 = vpop.permute.xlu0 %2290
        %v2295 = vadd.f32 %v2199, %v2287
        %v2296 = vadd.f32 %v2200, %v2289
        %v2297 = vadd.f32 %v2201, %v2291
        %s2298 = sld [smem:[#allocation10 + $0x57]]
        %v2299 = vstv %s2298
        %v2300 = vmul.f32 %v2299, %v1743
        %v2301 = vmul.f32 %v2299, %v1744
        %v2302 = vmul.f32 %v2299, %v1745
        %v2306 = vrot.slane %v2300, 2
        %v2307 = vrot.slane %v2301, 2
        %v2308 = vsel %vm993, %v2306, %v2307
        %v2309 = vrot.slane %v2302, 2
        %v2310 = vsel %vm993, %v2307, %v2309
        %2311 = vrot.lane.b32.xlu0 %v2308, 125
        %v2312 = vpop.permute.xlu0 %2311
        %2313 = vrot.lane.b32.xlu0 %v2310, 125
        %v2314 = vpop.permute.xlu0 %2313
        %2315 = vrot.lane.b32.xlu0 %v2309, 125
        %v2316 = vpop.permute.xlu0 %2315
        %v2320 = vadd.f32 %v2224, %v2312
        %v2321 = vadd.f32 %v2225, %v2314
        %v2322 = vadd.f32 %v2226, %v2316
        %s2323 = sld [smem:[#allocation10 + $0x5e]]
        %v2324 = vstv %s2323
        %v2325 = vmul.f32 %v2324, %v1743
        %v2326 = vmul.f32 %v2324, %v1744
        %v2327 = vmul.f32 %v2324, %v1745
        %v2331 = vrot.slane %v2325, 6
        %v2332 = vrot.slane %v2326, 6
        %v2333 = vsel %vm329, %v2331, %v2332
        %v2334 = vrot.slane %v2327, 6
        %v2335 = vsel %vm329, %v2332, %v2334
        %2336 = vrot.lane.b32.xlu0 %v2333, 125
        %v2337 = vpop.permute.xlu0 %2336
        %2338 = vrot.lane.b32.xlu0 %v2335, 125
        %v2339 = vpop.permute.xlu0 %2338
        %v2342 = vadd.f32 %v2246, %v2337
        %v2343 = vadd.f32 %v2247, %v2339
        %s2344 = sld [smem:[#allocation10 + $0x35]]
        %v2345 = vstv %s2344
        %v2346 = vmul.f32 %v2345, %v1743
        %v2347 = vmul.f32 %v2345, %v1744
        %v2350 = vrot.slane %v2346, 7
        %v2351 = vrot.slane %v2347, 7
        %v2352 = vsel %vm1109, %v2350, %v2351
        %2353 = vrot.lane.b32.xlu0 %v2350, 124
        %v2354 = vpop.permute.xlu0 %2353
        %2355 = vrot.lane.b32.xlu0 %v2352, 124
        %v2356 = vpop.permute.xlu0 %2355
        %2357 = vrot.lane.b32.xlu0 %v2351, 124
        %v2358 = vpop.permute.xlu0 %2357
        %v2362 = vadd.f32 %v2270, %v2354
        %v2363 = vadd.f32 %v2271, %v2356
        %v2364 = vadd.f32 %v2272, %v2358
        %s2365 = sld [smem:[#allocation10 + $0x3c]]
        %v2366 = vstv %s2365
        %v2367 = vmul.f32 %v2366, %v1743
        %v2368 = vmul.f32 %v2366, %v1744
        %v2369 = vmul.f32 %v2366, %v1745
        %v2373 = vrot.slane %v2367, 7
        %v2374 = vrot.slane %v2368, 7
        %v2375 = vsel %vm1109, %v2373, %v2374
        %v2376 = vrot.slane %v2369, 7
        %v2377 = vsel %vm1109, %v2374, %v2376
        %2378 = vrot.lane.b32.xlu0 %v2373, 124
        %v2379 = vpop.permute.xlu0 %2378
        %2380 = vrot.lane.b32.xlu0 %v2375, 124
        %v2381 = vpop.permute.xlu0 %2380
        %2382 = vrot.lane.b32.xlu0 %v2377, 124
        %v2383 = vpop.permute.xlu0 %2382
        %v2387 = vadd.f32 %v2295, %v2379
        %v2388 = vadd.f32 %v2296, %v2381
        %v2389 = vadd.f32 %v2297, %v2383
        %s2390 = sld [smem:[#allocation10 + $0x43]]
        %v2391 = vstv %s2390
        %v2392 = vmul.f32 %v2391, %v1743
        %v2393 = vmul.f32 %v2391, %v1744
        %v2394 = vmul.f32 %v2391, %v1745
        %v2398 = vrot.slane %v2392, 7
        %v2399 = vrot.slane %v2393, 7
        %v2400 = vsel %vm1109, %v2398, %v2399
        %v2401 = vrot.slane %v2394, 7
        %v2402 = vsel %vm1109, %v2399, %v2401
        %2403 = vrot.lane.b32.xlu0 %v2398, 124
        %v2404 = vpop.permute.xlu0 %2403
        %2405 = vrot.lane.b32.xlu0 %v2400, 124
        %v2406 = vpop.permute.xlu0 %2405
        %2407 = vrot.lane.b32.xlu0 %v2402, 124
        %v2408 = vpop.permute.xlu0 %2407
        %v2412 = vadd.f32 %v2320, %v2404
        %v2413 = vadd.f32 %v2321, %v2406
        %v2414 = vadd.f32 %v2322, %v2408
        %s2415 = sld [smem:[#allocation10 + $0x4a]]
        %v2416 = vstv %s2415
        %v2417 = vmul.f32 %v2416, %v1743
        %v2418 = vmul.f32 %v2416, %v1744
        %v2419 = vmul.f32 %v2416, %v1745
        %v2423 = vrot.slane %v2417, 3
        %v2424 = vrot.slane %v2418, 3
        %v2425 = vsel %vm1183, %v2423, %v2424
        %v2426 = vrot.slane %v2419, 3
        %v2427 = vsel %vm1183, %v2424, %v2426
        %2428 = vrot.lane.b32.xlu0 %v2425, 124
        %v2429 = vpop.permute.xlu0 %2428
        %2430 = vrot.lane.b32.xlu0 %v2427, 124
        %v2431 = vpop.permute.xlu0 %2430
        %v2434 = vadd.f32 %v2342, %v2429
        %v2435 = vadd.f32 %v2343, %v2431
        %s2436 = sld [smem:[#allocation10 + $0x51]]
        %v2437 = vstv %s2436
        %v2438 = vmul.f32 %v2437, %v1743
        %v2439 = vmul.f32 %v2437, %v1744
        %v2440 = vmul.f32 %v2437, %v1745
        %v2444 = vrot.slane %v2438, 3
        %v2445 = vrot.slane %v2439, 3
        %v2446 = vsel %vm1183, %v2444, %v2445
        %v2447 = vrot.slane %v2440, 3
        %v2448 = vsel %vm1183, %v2445, %v2447
        %2449 = vrot.lane.b32.xlu0 %v2446, 124
        %v2450 = vpop.permute.xlu0 %2449
        %2451 = vrot.lane.b32.xlu0 %v2448, 124
        %v2452 = vpop.permute.xlu0 %2451
        %2453 = vrot.lane.b32.xlu0 %v2447, 124
        %v2454 = vpop.permute.xlu0 %2453
        %v2458 = vadd.f32 %v2362, %v2450
        %v2459 = vadd.f32 %v2363, %v2452
        %v2460 = vadd.f32 %v2364, %v2454
        %s2461 = sld [smem:[#allocation10 + $0x58]]
        %v2462 = vstv %s2461
        %v2463 = vmul.f32 %v2462, %v1743
        %v2464 = vmul.f32 %v2462, %v1744
        %v2465 = vmul.f32 %v2462, %v1745
        %v2469 = vrot.slane %v2463, 3
        %v2470 = vrot.slane %v2464, 3
        %v2471 = vsel %vm1183, %v2469, %v2470
        %v2472 = vrot.slane %v2465, 3
        %v2473 = vsel %vm1183, %v2470, %v2472
        %2474 = vrot.lane.b32.xlu0 %v2471, 124
        %v2475 = vpop.permute.xlu0 %2474
        %2476 = vrot.lane.b32.xlu0 %v2473, 124
        %v2477 = vpop.permute.xlu0 %2476
        %2478 = vrot.lane.b32.xlu0 %v2472, 124
        %v2479 = vpop.permute.xlu0 %2478
        %v2483 = vadd.f32 %v2387, %v2475
        %v2484 = vadd.f32 %v2388, %v2477
        %v2485 = vadd.f32 %v2389, %v2479
        %s2486 = sld [smem:[#allocation10 + $0x5f]]
        %v2487 = vstv %s2486
        %v2488 = vmul.f32 %v2487, %v1743
        %v2489 = vmul.f32 %v2487, %v1744
        %v2490 = vmul.f32 %v2487, %v1745
        %v2494 = vrot.slane %v2488, 3
        %v2495 = vrot.slane %v2489, 3
        %v2496 = vsel %vm1183, %v2494, %v2495
        %v2497 = vrot.slane %v2490, 3
        %v2498 = vsel %vm1183, %v2495, %v2497
        %2499 = vrot.lane.b32.xlu0 %v2496, 124
        %v2500 = vpop.permute.xlu0 %2499
        %2501 = vrot.lane.b32.xlu0 %v2498, 124
        %v2502 = vpop.permute.xlu0 %2501
        %2503 = vrot.lane.b32.xlu0 %v2497, 124
        %v2504 = vpop.permute.xlu0 %2503
        %v2508 = vadd.f32 %v2412, %v2500
        %v2509 = vadd.f32 %v2413, %v2502
        %v2510 = vadd.f32 %v2414, %v2504
        %s2511 = sld [smem:[#allocation10 + $0x36]]
        %v2512 = vstv %s2511
        %v2513 = vmul.f32 %v2512, %v1743
        %v2514 = vmul.f32 %v2512, %v1744
        %2517 = vrot.lane.b32.xlu0 %v2513, 123
        %v2518 = vpop.permute.xlu0 %2517
        %2519 = vrot.lane.b32.xlu0 %v2514, 123
        %v2520 = vpop.permute.xlu0 %2519
        %v2523 = vadd.f32 %v2434, %v2518
        %v2524 = vadd.f32 %v2435, %v2520
        %s2525 = sld [smem:[#allocation10 + $0x3d]]
        %v2526 = vstv %s2525
        %v2527 = vmul.f32 %v2526, %v1743
        %v2528 = vmul.f32 %v2526, %v1744
        %v2529 = vmul.f32 %v2526, %v1745
        %2533 = vrot.lane.b32.xlu0 %v2527, 123
        %v2534 = vpop.permute.xlu0 %2533
        %2535 = vrot.lane.b32.xlu0 %v2528, 123
        %v2536 = vpop.permute.xlu0 %2535
        %2537 = vrot.lane.b32.xlu0 %v2529, 123
        %v2538 = vpop.permute.xlu0 %2537
        %v2542 = vadd.f32 %v2458, %v2534
        %v2543 = vadd.f32 %v2459, %v2536
        %v2544 = vadd.f32 %v2460, %v2538
        %s2545 = sld [smem:[#allocation10 + $0x44]]
        %v2546 = vstv %s2545
        %v2547 = vmul.f32 %v2546, %v1743
        %v2548 = vmul.f32 %v2546, %v1744
        %v2549 = vmul.f32 %v2546, %v1745
        %2553 = vrot.lane.b32.xlu0 %v2547, 123
        %v2554 = vpop.permute.xlu0 %2553
        %2555 = vrot.lane.b32.xlu0 %v2548, 123
        %v2556 = vpop.permute.xlu0 %2555
        %2557 = vrot.lane.b32.xlu0 %v2549, 123
        %v2558 = vpop.permute.xlu0 %2557
        %v2562 = vadd.f32 %v2483, %v2554
        %v2563 = vadd.f32 %v2484, %v2556
        %v2564 = vadd.f32 %v2485, %v2558
        %s2565 = sld [smem:[#allocation10 + $0x4b]]
        %v2566 = vstv %s2565
        %v2567 = vmul.f32 %v2566, %v1743
        %v2568 = vmul.f32 %v2566, %v1744
        %v2569 = vmul.f32 %v2566, %v1745
        %2573 = vrot.lane.b32.xlu0 %v2567, 123
        %v2574 = vpop.permute.xlu0 %2573
        %2575 = vrot.lane.b32.xlu0 %v2568, 123
        %v2576 = vpop.permute.xlu0 %2575
        %2577 = vrot.lane.b32.xlu0 %v2569, 123
        %v2578 = vpop.permute.xlu0 %2577
        %v2582 = vadd.f32 %v2508, %v2574
        %v2583 = vadd.f32 %v2509, %v2576
        %v2584 = vadd.f32 %v2510, %v2578
        %s2585 = sld [smem:[#allocation10 + $0x52]]
        %v2586 = vstv %s2585
        %v2587 = vmul.f32 %v2586, %v1743
        %v2588 = vmul.f32 %v2586, %v1744
        %v2589 = vmul.f32 %v2586, %v1745
        %v2593 = vrot.slane %v2587, 4
        %v2594 = vrot.slane %v2588, 4
        %v2595 = vsel %vm726, %v2593, %v2594
        %v2596 = vrot.slane %v2589, 4
        %v2597 = vsel %vm726, %v2594, %v2596
        %2598 = vrot.lane.b32.xlu0 %v2595, 123
        %v2599 = vpop.permute.xlu0 %2598
        %2600 = vrot.lane.b32.xlu0 %v2597, 123
        %v2601 = vpop.permute.xlu0 %2600
        %v2604 = vadd.f32 %v2523, %v2599
        %v2605 = vadd.f32 %v2524, %v2601
        %s2606 = sld [smem:[#allocation10 + $0x59]]
        %v2607 = vstv %s2606
        %v2608 = vmul.f32 %v2607, %v1743
        %v2609 = vmul.f32 %v2607, %v1744
        %v2610 = vmul.f32 %v2607, %v1745
        %v2614 = vrot.slane %v2608, 4
        %v2615 = vrot.slane %v2609, 4
        %v2616 = vsel %vm726, %v2614, %v2615
        %v2617 = vrot.slane %v2610, 4
        %v2618 = vsel %vm726, %v2615, %v2617
        %2619 = vrot.lane.b32.xlu0 %v2616, 123
        %v2620 = vpop.permute.xlu0 %2619
        %2621 = vrot.lane.b32.xlu0 %v2618, 123
        %v2622 = vpop.permute.xlu0 %2621
        %2623 = vrot.lane.b32.xlu0 %v2617, 123
        %v2624 = vpop.permute.xlu0 %2623
        %v2628 = vadd.f32 %v2542, %v2620
        %v2629 = vadd.f32 %v2543, %v2622
        %v2630 = vadd.f32 %v2544, %v2624
        %s2631 = sld [smem:[#allocation10 + $0x60]]
        %v2632 = vstv %s2631
        %v2633 = vmul.f32 %v2632, %v1743
        %v2634 = vmul.f32 %v2632, %v1744
        %v2635 = vmul.f32 %v2632, %v1745
        %v2639 = vrot.slane %v2633, 4
        %v2640 = vrot.slane %v2634, 4
        %v2641 = vsel %vm726, %v2639, %v2640
        %v2642 = vrot.slane %v2635, 4
        %v2643 = vsel %vm726, %v2640, %v2642
        %2644 = vrot.lane.b32.xlu0 %v2641, 123
        %v2645 = vpop.permute.xlu0 %2644
        %2646 = vrot.lane.b32.xlu0 %v2643, 123
        %v2647 = vpop.permute.xlu0 %2646
        %2648 = vrot.lane.b32.xlu0 %v2642, 123
        %v2649 = vpop.permute.xlu0 %2648
        %v2653 = vadd.f32 %v2562, %v2645
        %v2654 = vadd.f32 %v2563, %v2647
        %v2655 = vadd.f32 %v2564, %v2649
        %s2656 = sld [smem:[#allocation10 + $0x37]]
        %v2657 = vstv %s2656
        %v2658 = vmul.f32 %v2657, %v1743
        %v2659 = vmul.f32 %v2657, %v1744
        %v2662 = vrot.slane %v2658, 5
        %v2663 = vrot.slane %v2659, 5
        %v2664 = vsel %vm780, %v2662, %v2663
        %2665 = vrot.lane.b32.xlu0 %v2662, 122
        %v2666 = vpop.permute.xlu0 %2665
        %2667 = vrot.lane.b32.xlu0 %v2664, 122
        %v2668 = vpop.permute.xlu0 %2667
        %2669 = vrot.lane.b32.xlu0 %v2663, 122
        %v2670 = vpop.permute.xlu0 %2669
        %v2674 = vadd.f32 %v2582, %v2666
        %v2675 = vadd.f32 %v2583, %v2668
        %v2676 = vadd.f32 %v2584, %v2670
        %s2677 = sld [smem:[#allocation10 + $0x3e]]
        %v2678 = vstv %s2677
        %v2679 = vmul.f32 %v2678, %v1743
        %v2680 = vmul.f32 %v2678, %v1744
        %v2681 = vmul.f32 %v2678, %v1745
        %v2685 = vrot.slane %v2679, 1
        %v2686 = vrot.slane %v2680, 1
        %v2687 = vsel %vm804, %v2685, %v2686
        %v2688 = vrot.slane %v2681, 1
        %v2689 = vsel %vm804, %v2686, %v2688
        %2690 = vrot.lane.b32.xlu0 %v2687, 122
        %v2691 = vpop.permute.xlu0 %2690
        %2692 = vrot.lane.b32.xlu0 %v2689, 122
        %v2693 = vpop.permute.xlu0 %2692
        %v2696 = vadd.f32 %v2604, %v2691
        %v2697 = vadd.f32 %v2605, %v2693
        %s2698 = sld [smem:[#allocation10 + $0x45]]
        %v2699 = vstv %s2698
        %v2700 = vmul.f32 %v2699, %v1743
        %v2701 = vmul.f32 %v2699, %v1744
        %v2702 = vmul.f32 %v2699, %v1745
        %v2706 = vrot.slane %v2700, 1
        %v2707 = vrot.slane %v2701, 1
        %v2708 = vsel %vm804, %v2706, %v2707
        %v2709 = vrot.slane %v2702, 1
        %v2710 = vsel %vm804, %v2707, %v2709
        %2711 = vrot.lane.b32.xlu0 %v2708, 122
        %v2712 = vpop.permute.xlu0 %2711
        %2713 = vrot.lane.b32.xlu0 %v2710, 122
        %v2714 = vpop.permute.xlu0 %2713
        %2715 = vrot.lane.b32.xlu0 %v2709, 122
        %v2716 = vpop.permute.xlu0 %2715
        %v2720 = vadd.f32 %v2628, %v2712
        %v2721 = vadd.f32 %v2629, %v2714
        %v2722 = vadd.f32 %v2630, %v2716
        %s2723 = sld [smem:[#allocation10 + $0x4c]]
        %v2724 = vstv %s2723
        %v2725 = vmul.f32 %v2724, %v1743
        %v2726 = vmul.f32 %v2724, %v1744
        %v2727 = vmul.f32 %v2724, %v1745
        %v2731 = vrot.slane %v2725, 1
        %v2732 = vrot.slane %v2726, 1
        %v2733 = vsel %vm804, %v2731, %v2732
        %v2734 = vrot.slane %v2727, 1
        %v2735 = vsel %vm804, %v2732, %v2734
        %2736 = vrot.lane.b32.xlu0 %v2733, 122
        %v2737 = vpop.permute.xlu0 %2736
        %2738 = vrot.lane.b32.xlu0 %v2735, 122
        %v2739 = vpop.permute.xlu0 %2738
        %2740 = vrot.lane.b32.xlu0 %v2734, 122
        %v2741 = vpop.permute.xlu0 %2740
        %v2745 = vadd.f32 %v2653, %v2737
        %v2746 = vadd.f32 %v2654, %v2739
        %v2747 = vadd.f32 %v2655, %v2741
        %s2748 = sld [smem:[#allocation10 + $0x53]]
        %v2749 = vstv %s2748
        %v2750 = vmul.f32 %v2749, %v1743
        %v2751 = vmul.f32 %v2749, %v1744
        %v2752 = vmul.f32 %v2749, %v1745
        %v2756 = vrot.slane %v2750, 1
        %v2757 = vrot.slane %v2751, 1
        %v2758 = vsel %vm804, %v2756, %v2757
        %v2759 = vrot.slane %v2752, 1
        %v2760 = vsel %vm804, %v2757, %v2759
        %2761 = vrot.lane.b32.xlu0 %v2758, 122
        %v2762 = vpop.permute.xlu0 %2761
        %2763 = vrot.lane.b32.xlu0 %v2760, 122
        %v2764 = vpop.permute.xlu0 %2763
        %2765 = vrot.lane.b32.xlu0 %v2759, 122
        %v2766 = vpop.permute.xlu0 %2765
        %v2770 = vadd.f32 %v2674, %v2762
        %v2771 = vadd.f32 %v2675, %v2764
        %v2772 = vadd.f32 %v2676, %v2766
        %s2773 = sld [smem:[#allocation10 + $0x5a]]
        %v2774 = vstv %s2773
        %v2775 = vmul.f32 %v2774, %v1743
        %v2776 = vmul.f32 %v2774, %v1744
        %v2777 = vmul.f32 %v2774, %v1745
        %v2781 = vrot.slane %v2775, 5
        %v2782 = vrot.slane %v2776, 5
        %v2783 = vsel %vm780, %v2781, %v2782
        %v2784 = vrot.slane %v2777, 5
        %v2785 = vsel %vm780, %v2782, %v2784
        %2786 = vrot.lane.b32.xlu0 %v2783, 122
        %v2787 = vpop.permute.xlu0 %2786
        %2788 = vrot.lane.b32.xlu0 %v2785, 122
        %v2789 = vpop.permute.xlu0 %2788
        %v2792 = vadd.f32 %v2696, %v2787
        %v2793 = vadd.f32 %v2697, %v2789
        %s2794 = sld [smem:[#allocation10 + $0x61]]
        %v2795 = vstv %s2794
        %v2796 = vmul.f32 %v2795, %v1743
        %v2797 = vmul.f32 %v2795, %v1744
        %v2798 = vmul.f32 %v2795, %v1745
        %v2802 = vrot.slane %v2796, 5
        %v2803 = vrot.slane %v2797, 5
        %v2804 = vsel %vm780, %v2802, %v2803
        %v2805 = vrot.slane %v2798, 5
        %v2806 = vsel %vm780, %v2803, %v2805
        %2807 = vrot.lane.b32.xlu0 %v2804, 122
        %v2808 = vpop.permute.xlu0 %2807
        %2809 = vrot.lane.b32.xlu0 %v2806, 122
        %v2810 = vpop.permute.xlu0 %2809
        %2811 = vrot.lane.b32.xlu0 %v2805, 122
        %v2812 = vpop.permute.xlu0 %2811
        %v2816 = vadd.f32 %v2720, %v2808
        %v2817 = vadd.f32 %v2721, %v2810
        %v2818 = vadd.f32 %v2722, %v2812
        %v2822 = vrot.slane %v2816, 1
        %v2823 = vrot.slane %v2817, 1
        %v2824 = vsel %vm804, %v2822, %v2823
        %v2825 = vrot.slane %v2818, 1
        %v2826 = vsel %vm804, %v2823, %v2825
        %v2829 = vadd.f32 %v2792, %v2824
        %v2830 = vadd.f32 %v2793, %v2826
        %v2834 = vrot.slane %v2770, 1
        %v2835 = vrot.slane %v2771, 1
        %v2836 = vsel %vm804, %v2834, %v2835
        %v2837 = vrot.slane %v2772, 1
        %v2838 = vsel %vm804, %v2835, %v2837
        %v2842 = vadd.f32 %v2745, %v2836
        %v2843 = vadd.f32 %v2746, %v2838
        %v2844 = vadd.f32 %v2747, %v2837
        %v2848 = vrot.slane %v2842, 2
        %v2849 = vrot.slane %v2843, 2
        %v2850 = vsel %vm993, %v2848, %v2849
        %v2851 = vrot.slane %v2844, 2
        %v2852 = vsel %vm993, %v2849, %v2851
        %v2855 = vadd.f32 %v2829, %v2850
        %v2856 = vadd.f32 %v2830, %v2852
        %v2857 = vxor.u32 %v2855, 2147483648
        %v2858 = vxor.u32 %v2856, 2147483648
        %v2859 = vmul.f32 %v2857, 1.442695
        %v2860 = vpow.pop %v2859
        %v2861 = vmul.f32 %v2858, 1.442695
        %v2862 = vpow.pop %v2861
        %v2863 = vadd.f32 %v2860, 1.0
        %v2864 = vadd.f32 %v2862, 1.0
        %v2865 = vrcp.pop %v2863
        %v2866 = vmul.f32 %v2863, %v2865
        %v2867 = vsub.f32 1.0, %v2866
        %v2868 = vmul.f32 %v2865, %v2867
        %v2869 = vadd.f32 %v2865, %v2868
        %vm2870 = vweird.f32 %v2863
        %vm2871 = vweird.f32 %v2865
        %vm2872 = vmor %vm2870, %vm2871
        %v2873 = vsel %vm2872, %v2865, %v2869
        %v2874 = vand.u32 2147483647, %v2863
        %vm2875 = vcmp.eq.f32.partialorder %v2874, 8.507059e+37
        %v2876 = vand.u32 %v2863, 2147483648
        %v2877 = vor.u32 1.1754944e-38, %v2876
        %v2878 = vsel %vm2875, %v2877, %v2873
        %v2879 = vmul.f32 1.0, %v2878
        %v2880 = vrcp.pop %v2864
        %v2881 = vmul.f32 %v2864, %v2880
        %v2882 = vsub.f32 1.0, %v2881
        %v2883 = vmul.f32 %v2880, %v2882
        %v2884 = vadd.f32 %v2880, %v2883
        %vm2885 = vweird.f32 %v2864
        %vm2886 = vweird.f32 %v2880
        %vm2887 = vmor %vm2885, %vm2886
        %v2888 = vsel %vm2887, %v2880, %v2884
        %v2889 = vand.u32 2147483647, %v2864
        %vm2890 = vcmp.eq.f32.partialorder %v2889, 8.507059e+37
        %v2891 = vand.u32 %v2864, 2147483648
        %v2892 = vor.u32 1.1754944e-38, %v2891
        %v2893 = vsel %vm2890, %v2892, %v2888
        %v2894 = vmul.f32 1.0, %v2893
        %v2895 = vlaneseq
        %vm2896 = vcmp.ge.s32.totalorder %v2895, 0
        %vm2897 = vcmp.lt.s32.totalorder %v2895, 16
        %vm2898 = vmand %vm2896, %vm2897
        %2899 = vst.msk [vmem:[#allocation3] sm:$0x1] %vm2898, %v2879
        %2901 = vst [vmem:[#allocation1] sm:$0xff] %v2879
        %s2902 = scalar_lea.vmem [#allocation1], 1
        %v2903 = vld [vmem:[%s2902] ss:$9 sm:$0xff]
        %2904 = vrot.lane.b32.xlu0 %v2903, 16
        %v2905 = vpop.permute.xlu0 %2904
        %vm2907 = vcmp.ge.s32.totalorder %v2895, 16
        %vm2908 = vcmp.lt.s32.totalorder %v2895, 32
        %vm2909 = vmand %vm2907, %vm2908
        %2910 = vst.msk [vmem:[#allocation3] sm:$0x1] %vm2909, %v2905
        %2911 = vst [vmem:[#allocation1] sm:$0xff] %v2879
        %s2912 = scalar_lea.vmem [#allocation1], 2
        %v2913 = vld [vmem:[%s2912] ss:$9 sm:$0xff]
        %2914 = vrot.lane.b32.xlu0 %v2913, 32
        %v2915 = vpop.permute.xlu0 %2914
        %vm2917 = vcmp.ge.s32.totalorder %v2895, 32
        %vm2918 = vcmp.lt.s32.totalorder %v2895, 48
        %vm2919 = vmand %vm2917, %vm2918
        %2920 = vst.msk [vmem:[#allocation3] sm:$0x1] %vm2919, %v2915
        %2921 = vst [vmem:[#allocation1] sm:$0xff] %v2879
        %s2922 = scalar_lea.vmem [#allocation1], 3
        %v2923 = vld [vmem:[%s2922] ss:$9 sm:$0xff]
        %2924 = vrot.lane.b32.xlu0 %v2923, 48
        %v2925 = vpop.permute.xlu0 %2924
        %vm2927 = vcmp.ge.s32.totalorder %v2895, 48
        %vm2928 = vcmp.lt.s32.totalorder %v2895, 64
        %vm2929 = vmand %vm2927, %vm2928
        %2930 = vst.msk [vmem:[#allocation3] sm:$0x1] %vm2929, %v2925
        %2931 = vst [vmem:[#allocation1] sm:$0xff] %v2879
        %s2932 = scalar_lea.vmem [#allocation1], 4
        %v2933 = vld [vmem:[%s2932] ss:$9 sm:$0xff]
        %2934 = vrot.lane.b32.xlu0 %v2933, 64
        %v2935 = vpop.permute.xlu0 %2934
        %vm2937 = vcmp.ge.s32.totalorder %v2895, 64
        %vm2938 = vcmp.lt.s32.totalorder %v2895, 80
        %vm2939 = vmand %vm2937, %vm2938
        %2940 = vst.msk [vmem:[#allocation3] sm:$0x1] %vm2939, %v2935
        %2941 = vst [vmem:[#allocation1] sm:$0xff] %v2879
        %s2942 = scalar_lea.vmem [#allocation1], 5
        %v2943 = vld [vmem:[%s2942] ss:$9 sm:$0xff]
        %2944 = vrot.lane.b32.xlu0 %v2943, 80
        %v2945 = vpop.permute.xlu0 %2944
        %vm2947 = vcmp.ge.s32.totalorder %v2895, 80
        %vm2948 = vcmp.lt.s32.totalorder %v2895, 96
        %vm2949 = vmand %vm2947, %vm2948
        %2950 = vst.msk [vmem:[#allocation3] sm:$0x1] %vm2949, %v2945
        %2951 = vst [vmem:[#allocation1] sm:$0xff] %v2879
        %s2952 = scalar_lea.vmem [#allocation1], 6
        %v2953 = vld [vmem:[%s2952] ss:$9 sm:$0xff]
        %2954 = vrot.lane.b32.xlu0 %v2953, 96
        %v2955 = vpop.permute.xlu0 %2954
        %vm2957 = vcmp.ge.s32.totalorder %v2895, 96
        %vm2958 = vcmp.lt.s32.totalorder %v2895, 112
        %vm2959 = vmand %vm2957, %vm2958
        %2960 = vst.msk [vmem:[#allocation3] sm:$0x1] %vm2959, %v2955
        %2961 = vst [vmem:[#allocation1] sm:$0xff] %v2879
        %s2962 = scalar_lea.vmem [#allocation1], 7
        %v2963 = vld [vmem:[%s2962] ss:$9 sm:$0xff]
        %2964 = vrot.lane.b32.xlu0 %v2963, 112
        %v2965 = vpop.permute.xlu0 %2964
        %vm2967 = vcmp.ge.s32.totalorder %v2895, 112
        %vm2968 = vcmp.lt.s32.totalorder %v2895, 128
        %vm2969 = vmand %vm2967, %vm2968
        %2970 = vst.msk [vmem:[#allocation3] sm:$0x1] %vm2969, %v2965
        %2971 = vst.msk [vmem:[#allocation3 + $0x1] sm:$0x1] %vm2898, %v2894
        %2973 = vst [vmem:[#allocation1] sm:$0xff] %v2894
        %s2974 = scalar_lea.vmem [#allocation1], 1
        %v2975 = vld [vmem:[%s2974] ss:$9 sm:$0xff]
        %2976 = vrot.lane.b32.xlu0 %v2975, 16
        %v2977 = vpop.permute.xlu0 %2976
        %2979 = vst.msk [vmem:[#allocation3 + $0x1] sm:$0x1] %vm2909, %v2977
        %2980 = vst [vmem:[#allocation1] sm:$0xff] %v2894
        %s2981 = scalar_lea.vmem [#allocation1], 2
        %v2982 = vld [vmem:[%s2981] ss:$9 sm:$0xff]
        %2983 = vrot.lane.b32.xlu0 %v2982, 32
        %v2984 = vpop.permute.xlu0 %2983
        %2986 = vst.msk [vmem:[#allocation3 + $0x1] sm:$0x1] %vm2919, %v2984
        %2987 = vst [vmem:[#allocation1] sm:$0xff] %v2894
        %s2988 = scalar_lea.vmem [#allocation1], 3
        %v2989 = vld [vmem:[%s2988] ss:$9 sm:$0xff]
        %2990 = vrot.lane.b32.xlu0 %v2989, 48
        %v2991 = vpop.permute.xlu0 %2990
        %2993 = vst.msk [vmem:[#allocation3 + $0x1] sm:$0x1] %vm2929, %v2991
        %2994 = vst [vmem:[#allocation1] sm:$0xff] %v2894
        %s2995 = scalar_lea.vmem [#allocation1], 4
        %v2996 = vld [vmem:[%s2995] ss:$9 sm:$0xff]
        %2997 = vrot.lane.b32.xlu0 %v2996, 64
        %v2998 = vpop.permute.xlu0 %2997
        %3000 = vst.msk [vmem:[#allocation3 + $0x1] sm:$0x1] %vm2939, %v2998
        %3001 = vst [vmem:[#allocation1] sm:$0xff] %v2894
        %s3002 = scalar_lea.vmem [#allocation1], 5
        %v3003 = vld [vmem:[%s3002] ss:$9 sm:$0xff]
        %3004 = vrot.lane.b32.xlu0 %v3003, 80
        %v3005 = vpop.permute.xlu0 %3004
        %3007 = vst.msk [vmem:[#allocation3 + $0x1] sm:$0x1] %vm2949, %v3005
        %3008 = vst [vmem:[#allocation1] sm:$0xff] %v2894
        %s3009 = scalar_lea.vmem [#allocation1], 6
        %v3010 = vld [vmem:[%s3009] ss:$9 sm:$0xff]
        %3011 = vrot.lane.b32.xlu0 %v3010, 96
        %v3012 = vpop.permute.xlu0 %3011
        %3014 = vst.msk [vmem:[#allocation3 + $0x1] sm:$0x1] %vm2959, %v3012
        %3015 = vst [vmem:[#allocation1] sm:$0xff] %v2894
        %s3016 = scalar_lea.vmem [#allocation1], 7
        %v3017 = vld [vmem:[%s3016] ss:$9 sm:$0xff]
        %3018 = vrot.lane.b32.xlu0 %v3017, 112
        %v3019 = vpop.permute.xlu0 %3018
        %3021 = vst.msk [vmem:[#allocation3 + $0x1] sm:$0x1] %vm2969, %v3019
        %v3022 = vld [vmem:[#allocation3] sm:$0x3]
        %v3023 = vld [vmem:[%s234] sm:$0xff]
        %v3024 = vld [vmem:[%s234 + $0x8] sm:$0xff]
        %v3025 = vld [vmem:[%s234 + $0x10] sm:$0xff]
        %v3026 = vld [vmem:[%s234 + $0x18] sm:$0xff]
        %v3027 = vld [vmem:[%s234 + $0x20] sm:$0xff]
        %v3028 = vld [vmem:[%s234 + $0x28] sm:$0xff]
        %v3029 = vld [vmem:[%s234 + $0x30] sm:$0xff]
        %v3030 = vld [vmem:[%s234 + $0x38] sm:$0xff]
        %v3031 = vld [vmem:[#allocation5] sm:$0xff]
        %v3032 = vld [vmem:[#allocation5 + $0x8] sm:$0xff]
        %v3033 = vld [vmem:[#allocation5 + $0x10] sm:$0xff]
        %v3034 = vld [vmem:[#allocation5 + $0x18] sm:$0xff]
        %3036 = vset.pattern.permute.xlu0 0
        %3037 = vperm.xlu0 %3036, %v3031
        %v3038 = vpop.permute.xlu0 %3037
        %3041 = vset.pattern.permute.xlu0 0
        %3042 = vperm.xlu0 %3041, %v3032
        %v3043 = vpop.permute.xlu0 %3042
        %3046 = vset.pattern.permute.xlu0 0
        %3047 = vperm.xlu0 %3046, %v3033
        %v3048 = vpop.permute.xlu0 %3047
        %3051 = vset.pattern.permute.xlu0 0
        %3052 = vperm.xlu0 %3051, %v3034
        %v3053 = vpop.permute.xlu0 %3052
        %v3055 = vmul.f32 %v3023, %v3038
        %v3056 = vmul.f32 %v3024, %v3038
        %v3057 = vmul.f32 %v3025, %v3043
        %v3058 = vmul.f32 %v3026, %v3043
        %v3059 = vmul.f32 %v3027, %v3048
        %v3060 = vmul.f32 %v3028, %v3048
        %v3061 = vmul.f32 %v3029, %v3053
        %v3062 = vmul.f32 %v3030, %v3053
        %v3064 = vperm.slane %v3022, 0
        %v3065 = vperm.slane %v3022, 1
        %v3068 = vmul.f32 %v3055, %v3064
        %v3069 = vmul.f32 %v3056, %v3065
        %v3070 = vmul.f32 %v3057, %v3064
        %v3071 = vmul.f32 %v3058, %v3065
        %v3072 = vmul.f32 %v3059, %v3064
        %v3073 = vmul.f32 %v3060, %v3065
        %v3074 = vmul.f32 %v3061, %v3064
        %v3075 = vmul.f32 %v3062, %v3065
        %s3076 = smul.addr %s232, 8
        %s3077 = scalar_lea.vmem %s231, %s3076 [#allocation11]
        %3078 = vst [vmem:[%s3077] sm:$0xff] %v3068
        %3079 = vst [vmem:[%s3077 + $0x8] sm:$0xff] %v3069
        %3080 = vst [vmem:[%s3077 + $0x10] sm:$0xff] %v3070
        %3081 = vst [vmem:[%s3077 + $0x18] sm:$0xff] %v3071
        %3082 = vst [vmem:[%s3077 + $0x20] sm:$0xff] %v3072
        %3083 = vst [vmem:[%s3077 + $0x28] sm:$0xff] %v3073
        %3084 = vst [vmem:[%s3077 + $0x30] sm:$0xff] %v3074
        %3085 = vst [vmem:[%s3077 + $0x38] sm:$0xff] %v3075
        %s3086 = sand.u32 %s119, 1
        %s3087 = scalar_lea.sflag [#allocation8], %s3086
        %s3088 = sand.u32 %s119, 1
        %s3089 = smul.addr %s3088, 64
        %s3090 = scalar_lea.vmem [#allocation11], %s3089
        // Predicated region
        $region45: #{tpu_custom_call.1} parent=35 // pred_check
          %p3091 = pneg %p129
        $region46: #{tpu_custom_call.1} parent=35 // pred_check_branch
          %3093 = sbr.rel (%p3091) target = $region48
        $region47: #{tpu_custom_call.1} parent=35 // pred_region
          %3095 = vsyncadd %s3087, 0
          %s3096 = smul.addr %s22, 8
          %s3097 = smul.addr %s3096, 8
          %s3098 = scalar_lea.hbm %s4, %s3097
          %s3099 = sshll.u32 %s3090, 4
          %s3100 = int_to_ptr.vmem [resolvable:$true] %s3099
          %s3101 = sshll.u32 %s3098, 4
          %s3102 = int_to_ptr.hbm [resolvable:$true] %s3101
          %3107 = dma.vmem_to_hbm [thread:$0]  %s3100, 1024, %s3102, %s3087, 256, 256, 16
        $region48: #{tpu_custom_call.1} parent=35 // pred_fallthru
          _
      $region36: #{tpu_custom_call.1} parent=5 // pred_fallthru
        _
      %p3108 = scmp.le.s32.totalorder 2, %s17
      // Predicated region
      $region49: #{tpu_custom_call.1} parent=5 // pred_check
        %p3109 = pneg %p3108
      $region50: #{tpu_custom_call.1} parent=5 // pred_check_branch
        %3111 = sbr.rel (%p3109) target = $region52
      $region51: #{tpu_custom_call.1} parent=5 // pred_region
        %s3112 = ssub.s32 %s17, 2
        // Predicated region
        $region53: #{tpu_custom_call.1} parent=51 // pred_check
          %p3113 = pneg %p135
        $region54: #{tpu_custom_call.1} parent=51 // pred_check_branch
          %3115 = sbr.rel (%p3113) target = $region56
        $region55: #{tpu_custom_call.1} parent=51 // pred_region
          %s3116 = sand.u32 %s120, 1
          %s3117 = scalar_lea.sflag [#allocation8], %s3116
          %s3118 = sand.u32 %s120, 1
          %s3119 = smul.addr %s3118, 64
          %s3120 = scalar_lea.vmem [#allocation11], %s3119
          %3122 = dma.done %s3117, 1024
        $region56: #{tpu_custom_call.1} parent=51 // pred_fallthru
          _
      $region52: #{tpu_custom_call.1} parent=5 // pred_fallthru
        _
    $region6: #{tpu_custom_call.1} parent=1 // loop_footer
      %s21 = sadd.s32 1, %s17
    $region7: #{tpu_custom_call.1} parent=1 // loop_footer_branch
      %16 = sbr.rel target = $region3
    $region8: #{tpu_custom_call.1} parent=1 // loop_exit
      _
    %3123 = vsyncpa [#allocation7], 1
    %s3124 = scalar_lea.sflag [#allocation7], 1
    %3125 = vsyncpa %s3124, 1
    %3126 = vsyncpa [#allocation8], 1
    %s3127 = scalar_lea.sflag [#allocation8], 1
    %3128 = vsyncpa %s3127, 1
    %3129 = vsyncpa [#allocation9], 1
    %s3130 = scalar_lea.sflag [#allocation9], 1
    %3131 = vsyncpa %s3130, 1

</llo_original>
